<compile_context>
chip_gen: v7x
topology: tpu7x:2x2x1
jax: 0.10.0
libtpu: 0.0.40
codegen_flags: <defaults>
</compile_context>

<pallas_src>
import math

import jax
import jax.numpy as jnp
from jax.experimental import pallas as pl
from jax.experimental.pallas import tpu as pltpu


def _mha_kernel(k_ref, q_ref, v_ref, wq_ref, wk_ref, wv_ref, wo_ref, o_ref):
    """Grid = (batch, q_tiles). One step: all heads, one query tile, one row.

    k_ref/v_ref : (1, S,  D)  bf16   full keys/values for this batch row
    q_ref       : (1, tq, D)  bf16   query tile
    wq/wk/wv    : (H, D, hd)  bf16   per-head projections (wq pre-scaled)
    wo_ref      : (H, hd, D)  bf16   output projection split per head
    o_ref       : (1, tq, D)  bf16
    """
    k = k_ref[0]
    q = q_ref[0]
    v = v_ref[0]

    H = wq_ref.shape[0]
    S, D = k.shape
    tq = q.shape[0]

    # Head-batched projections: broadcast activations over the leading head
    # axis and run one batched MXU matmul per role (full K=D contraction).
    qb = jnp.broadcast_to(q[None], (H, tq, D))
    kb = jnp.broadcast_to(k[None], (H, S, D))
    vb = jnp.broadcast_to(v[None], (H, S, D))

    # W_q is pre-scaled by 1/sqrt(head_dim) in f32 in the wrapper, so there is
    # no extra VPU multiply here.  Cast intermediates to bf16 immediately.
    qh = jnp.einsum("hsd,hde->hse", qb, wq_ref[...],
                    preferred_element_type=jnp.float32).astype(jnp.bfloat16)
    kh = jnp.einsum("hsd,hde->hse", kb, wk_ref[...],
                    preferred_element_type=jnp.float32).astype(jnp.bfloat16)
    vh = jnp.einsum("hsd,hde->hse", vb, wv_ref[...],
                    preferred_element_type=jnp.float32).astype(jnp.bfloat16)

    # Scores for all heads at once (no per-head 32-lane slices): (H, tq, S).
    s = jnp.einsum("hqd,hkd->hqk", qh, kh,
                   preferred_element_type=jnp.float32)

    # Causal mask using the global query-row offset of this tile.
    q0 = pl.program_id(1) * tq
    row = jax.lax.broadcasted_iota(jnp.int32, (1, tq, S), 1) + q0
    col = jax.lax.broadcasted_iota(jnp.int32, (1, tq, S), 2)
    s = jnp.where(col <= row, s, -jnp.inf)

    # Numerically stable softmax in f32; the diagonal is always unmasked so
    # denom > 0 and the approximate reciprocal (EUP slot) is safe.
    m = jnp.max(s, axis=-1, keepdims=True)
    e = jnp.exp(s - m)
    denom = jnp.sum(e, axis=-1, keepdims=True)
    attn = (e * pl.reciprocal(denom, approx=True)).astype(jnp.bfloat16)

    # Attention-weighted values, all heads batched: (H, tq, hd).
    av = jnp.einsum("hqk,hkd->hqd", attn, vh,
                    preferred_element_type=jnp.float32).astype(jnp.bfloat16)

    # Output projection per head, then reduce over heads.  Mathematically
    # identical to concat(heads) @ W_o^T, but avoids materializing the concat
    # and holding every head output live in f32.
    oh = jnp.einsum("hqd,hdm->hqm", av, wo_ref[...],
                    preferred_element_type=jnp.float32)        # (H, tq, D) f32
    out = oh[0]
    for h in range(1, H):                                      # static, cheap
        out = out + oh[h]
    o_ref[0] = out.astype(o_ref.dtype)


def multi_head_attention(keys, queries, values, wq, wk, wv, wo_t, *,
                         head_dim, q_tile=256, single_buffer_weights=True):
    """keys/queries/values: (B, S, model_dim) float32
       wq/wk/wv: (H, model_dim, head_dim)   per-head projection weights
       wo_t:     (H*head_dim, model_dim)    W_o transposed
       returns:  (B, S, model_dim) bfloat16"""
    B, S, D = keys.shape
    H = wq.shape[0]
    hd = head_dim

    # Fold the 1/sqrt(head_dim) scale into W_q in f32, then cast all weights
    # to bf16 (MXU operands, halved DMA bytes).
    wq_b = (wq * (1.0 / math.sqrt(hd))).astype(jnp.bfloat16)    # (H, D, hd)
    wk_b = wk.astype(jnp.bfloat16)
    wv_b = wv.astype(jnp.bfloat16)
    wo_b = wo_t.reshape(H, hd, D).astype(jnp.bfloat16)          # (H, hd, D)

    keys_b = keys.astype(jnp.bfloat16)
    queries_b = queries.astype(jnp.bfloat16)
    values_b = values.astype(jnp.bfloat16)

    # Query tiling: caps the (H, tq, S) score block in VMEM and provides more
    # than B grid steps (pipelining + second v7x TensorCore).
    tq = q_tile if (S % q_tile == 0 and q_tile < S) else S
    nqt = S // tq

    def wspec(shape):
        idx = lambda b, qt: (0,) * len(shape)
        if single_buffer_weights:
            # Constant index_map -> double buffering is pure VMEM waste.
            return pl.BlockSpec(shape, idx, pipeline_mode=pl.Buffered(1))
        return pl.BlockSpec(shape, idx)

    grid_spec = pltpu.PrefetchScalarGridSpec(
        num_scalar_prefetch=0,
        grid=(B, nqt),
        in_specs=[
            pl.BlockSpec((1, S, D), lambda b, qt: (b, 0, 0)),    # keys
            pl.BlockSpec((1, tq, D), lambda b, qt: (b, qt, 0)),  # queries
            pl.BlockSpec((1, S, D), lambda b, qt: (b, 0, 0)),    # values
            wspec((H, D, hd)),                                   # W_q (scaled)
            wspec((H, D, hd)),                                   # W_k
            wspec((H, D, hd)),                                   # W_v
            wspec((H, hd, D)),                                   # W_o (per head)
        ],
        out_specs=pl.BlockSpec((1, tq, D), lambda b, qt: (b, qt, 0)),
    )

    return pl.pallas_call(
        _mha_kernel,
        out_shape=jax.ShapeDtypeStruct((B, S, D), jnp.bfloat16),
        grid_spec=grid_spec,
        compiler_params=pltpu.CompilerParams(
            dimension_semantics=("parallel", "parallel"),
            vmem_limit_bytes=48 * 1024 * 1024),
    )(keys_b, queries_b, values_b, wq_b, wk_b, wv_b, wo_b)


def _reference(keys, queries, values, wq, wk, wv, wo_t, head_dim):
    """Pure-JAX f32 reference reproducing the PyTorch forward (eval mode)."""
    H = wq.shape[0]
    S = keys.shape[1]
    mask = jnp.tril(jnp.ones((S, S), jnp.float32)) == 0
    heads = []
    for h in range(H):
        qp = queries @ wq[h]
        kp = keys @ wk[h]
        vp = values @ wv[h]
        scores = (qp @ jnp.swapaxes(kp, -2, -1)) / jnp.sqrt(jnp.float32(head_dim))
        scores = jnp.where(mask, -jnp.inf, scores)
        attn = jax.nn.softmax(scores, axis=-1)
        heads.append(attn @ vp)
    concat = jnp.concatenate(heads, axis=-1)
    return concat @ wo_t


if __name__ == "__main__":
    # Small, deterministic, lane-dense config (model_dim is a multiple of 128
    # so the output store is an unmasked vst).
    batch = 2
    seq_len = 16
    model_dim = 128
    head_dim = 32
    num_heads = 4

    key = jax.random.PRNGKey(0)
    k_q, k_k, k_v, k_wq, k_wk, k_wv, k_wo = jax.random.split(key, 7)

    keys_x = jax.random.normal(k_k, (batch, seq_len, model_dim), jnp.float32)
    queries_x = jax.random.normal(k_q, (batch, seq_len, model_dim), jnp.float32)
    values_x = jax.random.normal(k_v, (batch, seq_len, model_dim), jnp.float32)

    # PyTorch nn.Linear default init: U(-1/sqrt(fan_in), 1/sqrt(fan_in)).
    bound_in = 1.0 / jnp.sqrt(jnp.float32(model_dim))
    wq = jax.random.uniform(k_wq, (num_heads, model_dim, head_dim),
                            jnp.float32, -bound_in, bound_in)
    wk = jax.random.uniform(k_wk, (num_heads, model_dim, head_dim),
                            jnp.float32, -bound_in, bound_in)
    wv = jax.random.uniform(k_wv, (num_heads, model_dim, head_dim),
                            jnp.float32, -bound_in, bound_in)
    bound_o = 1.0 / jnp.sqrt(jnp.float32(num_heads * head_dim))
    wo_t = jax.random.uniform(k_wo, (num_heads * head_dim, model_dim),
                              jnp.float32, -bound_o, bound_o)

    try:
        out = jax.block_until_ready(
            multi_head_attention(keys_x, queries_x, values_x,
                                 wq, wk, wv, wo_t, head_dim=head_dim,
                                 single_buffer_weights=True))
    except Exception:
        # Fallback for JAX builds that reject single-buffered resident blocks.
        out = jax.block_until_ready(
            multi_head_attention(keys_x, queries_x, values_x,
                                 wq, wk, wv, wo_t, head_dim=head_dim,
                                 single_buffer_weights=False))

    ref = _reference(keys_x, queries_x, values_x, wq, wk, wv, wo_t, head_dim)
    assert out.shape == (batch, seq_len, model_dim)
    # bf16 MXU operands + approx reciprocal + bf16 output -> bf16-level tol.
    assert jnp.allclose(out.astype(jnp.float32), ref, atol=2.5e-2, rtol=2.5e-2), \
        "mismatch vs reference"

    print("KERNEL_OK")
</pallas_src>

<mosaic_0001>
module attributes {stable_mosaic.version = 11 : i64} {
  func.func @_mha_kernel(%arg0: i32, %arg1: i32, %arg2: memref<1x16x128xbf16, #tpu.memory_space<vmem>>, %arg3: memref<1x16x128xbf16, #tpu.memory_space<vmem>>, %arg4: memref<1x16x128xbf16, #tpu.memory_space<vmem>>, %arg5: memref<4x128x32xbf16, #tpu.memory_space<vmem>>, %arg6: memref<4x128x32xbf16, #tpu.memory_space<vmem>>, %arg7: memref<4x128x32xbf16, #tpu.memory_space<vmem>>, %arg8: memref<4x32x128xbf16, #tpu.memory_space<vmem>>, %arg9: memref<1x16x128xbf16, #tpu.memory_space<vmem>>) attributes {dimension_semantics = [#tpu.dimension_semantics<parallel>, #tpu.dimension_semantics<parallel>], iteration_bounds = array<i64: 2, 1>, scalar_prefetch = 0 : i64, scratch_operands = 0 : i64, tpu.core_type = #tpu.core_type<tc>, window_params = [{transform_indices = @transform_0, window_bounds = array<i64: 1, 16, 128>}, {transform_indices = @transform_1, window_bounds = array<i64: 1, 16, 128>}, {transform_indices = @transform_2, window_bounds = array<i64: 1, 16, 128>}, {pipeline_mode = #tpu.pipeline_mode<synchronous>, transform_indices = @transform_3, window_bounds = array<i64: 4, 128, 32>}, {pipeline_mode = #tpu.pipeline_mode<synchronous>, transform_indices = @transform_4, window_bounds = array<i64: 4, 128, 32>}, {pipeline_mode = #tpu.pipeline_mode<synchronous>, transform_indices = @transform_5, window_bounds = array<i64: 4, 128, 32>}, {pipeline_mode = #tpu.pipeline_mode<synchronous>, transform_indices = @transform_6, window_bounds = array<i64: 4, 32, 128>}, {transform_indices = @transform_7, window_bounds = array<i64: 1, 16, 128>}]} {
    %c0 = arith.constant 0 : index
    %c0_0 = arith.constant 0 : index
    %c0_1 = arith.constant 0 : index
    %0 = vector.load %arg2[%c0, %c0_0, %c0_1] : memref<1x16x128xbf16, #tpu.memory_space<vmem>>, vector<1x16x128xbf16>
    %1 = vector.shape_cast %0 : vector<1x16x128xbf16> to vector<16x128xbf16>
    %c0_2 = arith.constant 0 : index
    %c0_3 = arith.constant 0 : index
    %c0_4 = arith.constant 0 : index
    %2 = vector.load %arg3[%c0_2, %c0_3, %c0_4] : memref<1x16x128xbf16, #tpu.memory_space<vmem>>, vector<1x16x128xbf16>
    %3 = vector.shape_cast %2 : vector<1x16x128xbf16> to vector<16x128xbf16>
    %c0_5 = arith.constant 0 : index
    %c0_6 = arith.constant 0 : index
    %c0_7 = arith.constant 0 : index
    %4 = vector.load %arg4[%c0_5, %c0_6, %c0_7] : memref<1x16x128xbf16, #tpu.memory_space<vmem>>, vector<1x16x128xbf16>
    %5 = vector.shape_cast %4 : vector<1x16x128xbf16> to vector<16x128xbf16>
    %6 = vector.shape_cast %3 : vector<16x128xbf16> to vector<1x16x128xbf16>
    %7 = vector.shape_cast %6 : vector<1x16x128xbf16> to vector<1x16x128xbf16>
    %8 = vector.broadcast %7 : vector<1x16x128xbf16> to vector<4x16x128xbf16>
    %9 = vector.shape_cast %1 : vector<16x128xbf16> to vector<1x16x128xbf16>
    %10 = vector.shape_cast %9 : vector<1x16x128xbf16> to vector<1x16x128xbf16>
    %11 = vector.broadcast %10 : vector<1x16x128xbf16> to vector<4x16x128xbf16>
    %12 = vector.shape_cast %5 : vector<16x128xbf16> to vector<1x16x128xbf16>
    %13 = vector.shape_cast %12 : vector<1x16x128xbf16> to vector<1x16x128xbf16>
    %14 = vector.broadcast %13 : vector<1x16x128xbf16> to vector<4x16x128xbf16>
    %c0_8 = arith.constant 0 : index
    %c0_9 = arith.constant 0 : index
    %c0_10 = arith.constant 0 : index
    %15 = vector.load %arg5[%c0_8, %c0_9, %c0_10] : memref<4x128x32xbf16, #tpu.memory_space<vmem>>, vector<4x128x32xbf16>
    "tpu.trace_start"() <{level = 10 : i32, message = "hsd,hde->hse"}> : () -> ()
    %cst = arith.constant dense<0.000000e+00> : vector<4x16x32xf32>
    %16 = tpu.matmul %8, %15, %cst {dimension_numbers = #tpu.dot_dimension_numbers<[2], [1], [1], [2], [0, 0, 0, 1, 1, 2], [0], [0]>} : vector<4x16x128xbf16>, vector<4x128x32xbf16>, vector<4x16x32xf32> -> vector<4x16x32xf32>
    "tpu.trace_stop"() : () -> ()
    %17 = arith.truncf %16 : vector<4x16x32xf32> to vector<4x16x32xbf16>
    %c0_11 = arith.constant 0 : index
    %c0_12 = arith.constant 0 : index
    %c0_13 = arith.constant 0 : index
    %18 = vector.load %arg6[%c0_11, %c0_12, %c0_13] : memref<4x128x32xbf16, #tpu.memory_space<vmem>>, vector<4x128x32xbf16>
    "tpu.trace_start"() <{level = 10 : i32, message = "hsd,hde->hse"}> : () -> ()
    %cst_14 = arith.constant dense<0.000000e+00> : vector<4x16x32xf32>
    %19 = tpu.matmul %11, %18, %cst_14 {dimension_numbers = #tpu.dot_dimension_numbers<[2], [1], [1], [2], [0, 0, 0, 1, 1, 2], [0], [0]>} : vector<4x16x128xbf16>, vector<4x128x32xbf16>, vector<4x16x32xf32> -> vector<4x16x32xf32>
    "tpu.trace_stop"() : () -> ()
    %20 = arith.truncf %19 : vector<4x16x32xf32> to vector<4x16x32xbf16>
    %c0_15 = arith.constant 0 : index
    %c0_16 = arith.constant 0 : index
    %c0_17 = arith.constant 0 : index
    %21 = vector.load %arg7[%c0_15, %c0_16, %c0_17] : memref<4x128x32xbf16, #tpu.memory_space<vmem>>, vector<4x128x32xbf16>
    "tpu.trace_start"() <{level = 10 : i32, message = "hsd,hde->hse"}> : () -> ()
    %cst_18 = arith.constant dense<0.000000e+00> : vector<4x16x32xf32>
    %22 = tpu.matmul %14, %21, %cst_18 {dimension_numbers = #tpu.dot_dimension_numbers<[2], [1], [1], [2], [0, 0, 0, 1, 1, 2], [0], [0]>} : vector<4x16x128xbf16>, vector<4x128x32xbf16>, vector<4x16x32xf32> -> vector<4x16x32xf32>
    "tpu.trace_stop"() : () -> ()
    %23 = arith.truncf %22 : vector<4x16x32xf32> to vector<4x16x32xbf16>
    "tpu.trace_start"() <{level = 10 : i32, message = "hqd,hkd->hqk"}> : () -> ()
    %cst_19 = arith.constant dense<0.000000e+00> : vector<4x16x16xf32>
    %24 = tpu.matmul %17, %20, %cst_19 {dimension_numbers = #tpu.dot_dimension_numbers<[2], [2], [1], [1], [0, 0, 0, 1, 1, 1], [0], [0]>} : vector<4x16x32xbf16>, vector<4x16x32xbf16>, vector<4x16x16xf32> -> vector<4x16x16xf32>
    "tpu.trace_stop"() : () -> ()
    %c16_i32 = arith.constant 16 : i32
    %25 = arith.muli %arg1, %c16_i32 : i32
    %26 = tpu.iota {dimensions = array<i32: 1>} : vector<1x16x16xi32>
    %27 = vector.broadcast %25 : i32 to vector<1x16x16xi32>
    %28 = arith.addi %26, %27 : vector<1x16x16xi32>
    %29 = tpu.iota {dimensions = array<i32: 2>} : vector<1x16x16xi32>
    %30 = arith.cmpi sle, %29, %28 : vector<1x16x16xi32>
    %cst_20 = arith.constant 0xFF800000 : f32
    %31 = vector.shape_cast %30 : vector<1x16x16xi1> to vector<1x16x16xi1>
    %32 = vector.broadcast %31 : vector<1x16x16xi1> to vector<4x16x16xi1>
    %33 = vector.broadcast %cst_20 : f32 to vector<4x16x16xf32>
    %34 = arith.select %32, %24, %33 : vector<4x16x16xi1>, vector<4x16x16xf32>
    %cst_21 = arith.constant dense<0xFF800000> : vector<4x16xf32>
    %35 = vector.multi_reduction <maximumf>, %34, %cst_21 [2] : vector<4x16x16xf32> to vector<4x16xf32>
    %36 = vector.shape_cast %35 : vector<4x16xf32> to vector<4x16x1xf32>
    %37 = vector.broadcast %36 : vector<4x16x1xf32> to vector<4x16x16xf32>
    %38 = arith.subf %34, %37 : vector<4x16x16xf32>
    %39 = math.exp %38 : vector<4x16x16xf32>
    %cst_22 = arith.constant dense<0.000000e+00> : vector<4x16xf32>
    %40 = vector.multi_reduction <add>, %39, %cst_22 [2] : vector<4x16x16xf32> to vector<4x16xf32>
    %41 = vector.shape_cast %40 : vector<4x16xf32> to vector<4x16x1xf32>
    %42 = tpu.reciprocal %41 {approx = true} : vector<4x16x1xf32> -> vector<4x16x1xf32>
    %43 = vector.broadcast %42 : vector<4x16x1xf32> to vector<4x16x16xf32>
    %44 = arith.mulf %39, %43 : vector<4x16x16xf32>
    %45 = arith.truncf %44 : vector<4x16x16xf32> to vector<4x16x16xbf16>
    "tpu.trace_start"() <{level = 10 : i32, message = "hqk,hkd->hqd"}> : () -> ()
    %cst_23 = arith.constant dense<0.000000e+00> : vector<4x16x32xf32>
    %46 = tpu.matmul %45, %23, %cst_23 {dimension_numbers = #tpu.dot_dimension_numbers<[2], [1], [1], [2], [0, 0, 0, 1, 1, 2], [0], [0]>} : vector<4x16x16xbf16>, vector<4x16x32xbf16>, vector<4x16x32xf32> -> vector<4x16x32xf32>
    "tpu.trace_stop"() : () -> ()
    %47 = arith.truncf %46 : vector<4x16x32xf32> to vector<4x16x32xbf16>
    %c0_24 = arith.constant 0 : index
    %c0_25 = arith.constant 0 : index
    %c0_26 = arith.constant 0 : index
    %48 = vector.load %arg8[%c0_24, %c0_25, %c0_26] : memref<4x32x128xbf16, #tpu.memory_space<vmem>>, vector<4x32x128xbf16>
    "tpu.trace_start"() <{level = 10 : i32, message = "hqd,hdm->hqm"}> : () -> ()
    %cst_27 = arith.constant dense<0.000000e+00> : vector<4x16x128xf32>
    %49 = tpu.matmul %47, %48, %cst_27 {dimension_numbers = #tpu.dot_dimension_numbers<[2], [1], [1], [2], [0, 0, 0, 1, 1, 2], [0], [0]>} : vector<4x16x32xbf16>, vector<4x32x128xbf16>, vector<4x16x128xf32> -> vector<4x16x128xf32>
    "tpu.trace_stop"() : () -> ()
    %50 = vector.extract_strided_slice %49 {offsets = [0, 0, 0], sizes = [1, 16, 128], strides = [1, 1, 1]} : vector<4x16x128xf32> to vector<1x16x128xf32>
    %51 = vector.shape_cast %50 : vector<1x16x128xf32> to vector<16x128xf32>
    %52 = vector.extract_strided_slice %49 {offsets = [1, 0, 0], sizes = [1, 16, 128], strides = [1, 1, 1]} : vector<4x16x128xf32> to vector<1x16x128xf32>
    %53 = vector.shape_cast %52 : vector<1x16x128xf32> to vector<16x128xf32>
    %54 = arith.addf %51, %53 : vector<16x128xf32>
    %55 = vector.extract_strided_slice %49 {offsets = [2, 0, 0], sizes = [1, 16, 128], strides = [1, 1, 1]} : vector<4x16x128xf32> to vector<1x16x128xf32>
    %56 = vector.shape_cast %55 : vector<1x16x128xf32> to vector<16x128xf32>
    %57 = arith.addf %54, %56 : vector<16x128xf32>
    %58 = vector.extract_strided_slice %49 {offsets = [3, 0, 0], sizes = [1, 16, 128], strides = [1, 1, 1]} : vector<4x16x128xf32> to vector<1x16x128xf32>
    %59 = vector.shape_cast %58 : vector<1x16x128xf32> to vector<16x128xf32>
    %60 = arith.addf %57, %59 : vector<16x128xf32>
    %61 = arith.truncf %60 : vector<16x128xf32> to vector<16x128xbf16>
    %c0_28 = arith.constant 0 : index
    %c0_29 = arith.constant 0 : index
    %c0_30 = arith.constant 0 : index
    %62 = vector.load %arg9[%c0_28, %c0_29, %c0_30] : memref<1x16x128xbf16, #tpu.memory_space<vmem>>, vector<1x16x128xbf16>
    %63 = vector.shape_cast %62 : vector<1x16x128xbf16> to vector<16x128xbf16>
    %64 = vector.shape_cast %61 : vector<16x128xbf16> to vector<1x16x128xbf16>
    tpu.vector_store %arg9[%c0_28, %c0_29, %c0_30], %64 {strides = array<i32>} : memref<1x16x128xbf16, #tpu.memory_space<vmem>>, vector<1x16x128xbf16>,
    return
  }
  func.func @transform_0(%arg0: i32, %arg1: i32) -> (i32, i32, i32) {
    %c0_i32 = arith.constant 0 : i32
    %c0_i32_0 = arith.constant 0 : i32
    %c0_i32_1 = arith.constant 0 : i32
    return %arg0, %c0_i32, %c0_i32_0 : i32, i32, i32
  }
  func.func @transform_1(%arg0: i32, %arg1: i32) -> (i32, i32, i32) {
    %c0_i32 = arith.constant 0 : i32
    %c0_i32_0 = arith.constant 0 : i32
    return %arg0, %arg1, %c0_i32 : i32, i32, i32
  }
  func.func @transform_2(%arg0: i32, %arg1: i32) -> (i32, i32, i32) {
    %c0_i32 = arith.constant 0 : i32
    %c0_i32_0 = arith.constant 0 : i32
    %c0_i32_1 = arith.constant 0 : i32
    return %arg0, %c0_i32, %c0_i32_0 : i32, i32, i32
  }
  func.func @transform_3(%arg0: i32, %arg1: i32) -> (i32, i32, i32) {
    %c0_i32 = arith.constant 0 : i32
    %c0_i32_0 = arith.constant 0 : i32
    %c0_i32_1 = arith.constant 0 : i32
    %c0_i32_2 = arith.constant 0 : i32
    return %c0_i32, %c0_i32_0, %c0_i32_1 : i32, i32, i32
  }
  func.func @transform_4(%arg0: i32, %arg1: i32) -> (i32, i32, i32) {
    %c0_i32 = arith.constant 0 : i32
    %c0_i32_0 = arith.constant 0 : i32
    %c0_i32_1 = arith.constant 0 : i32
    %c0_i32_2 = arith.constant 0 : i32
    return %c0_i32, %c0_i32_0, %c0_i32_1 : i32, i32, i32
  }
  func.func @transform_5(%arg0: i32, %arg1: i32) -> (i32, i32, i32) {
    %c0_i32 = arith.constant 0 : i32
    %c0_i32_0 = arith.constant 0 : i32
    %c0_i32_1 = arith.constant 0 : i32
    %c0_i32_2 = arith.constant 0 : i32
    return %c0_i32, %c0_i32_0, %c0_i32_1 : i32, i32, i32
  }
  func.func @transform_6(%arg0: i32, %arg1: i32) -> (i32, i32, i32) {
    %c0_i32 = arith.constant 0 : i32
    %c0_i32_0 = arith.constant 0 : i32
    %c0_i32_1 = arith.constant 0 : i32
    %c0_i32_2 = arith.constant 0 : i32
    return %c0_i32, %c0_i32_0, %c0_i32_1 : i32, i32, i32
  }
  func.func @transform_7(%arg0: i32, %arg1: i32) -> (i32, i32, i32) {
    %c0_i32 = arith.constant 0 : i32
    %c0_i32_0 = arith.constant 0 : i32
    return %arg0, %arg1, %c0_i32 : i32, i32, i32
  }
}

module attributes {stable_mosaic.version = 11 : i64} {
  func.func @_mha_kernel(%arg0: i32, %arg1: i32, %arg2: memref<1x16x128xbf16, #tpu.memory_space<vmem>>, %arg3: memref<1x16x128xbf16, #tpu.memory_space<vmem>>, %arg4: memref<1x16x128xbf16, #tpu.memory_space<vmem>>, %arg5: memref<4x128x32xbf16, #tpu.memory_space<vmem>>, %arg6: memref<4x128x32xbf16, #tpu.memory_space<vmem>>, %arg7: memref<4x128x32xbf16, #tpu.memory_space<vmem>>, %arg8: memref<4x32x128xbf16, #tpu.memory_space<vmem>>, %arg9: memref<1x16x128xbf16, #tpu.memory_space<vmem>>) attributes {dimension_semantics = [#tpu.dimension_semantics<parallel>, #tpu.dimension_semantics<parallel>], iteration_bounds = array<i64: 2, 1>, scalar_prefetch = 0 : i64, scratch_operands = 0 : i64, tpu.core_type = #tpu.core_type<tc>, window_params = [{transform_indices = @transform_0, window_bounds = array<i64: 1, 16, 128>}, {transform_indices = @transform_1, window_bounds = array<i64: 1, 16, 128>}, {transform_indices = @transform_2, window_bounds = array<i64: 1, 16, 128>}, {pipeline_mode = #tpu.pipeline_mode<synchronous>, transform_indices = @transform_3, window_bounds = array<i64: 4, 128, 32>}, {pipeline_mode = #tpu.pipeline_mode<synchronous>, transform_indices = @transform_4, window_bounds = array<i64: 4, 128, 32>}, {pipeline_mode = #tpu.pipeline_mode<synchronous>, transform_indices = @transform_5, window_bounds = array<i64: 4, 128, 32>}, {pipeline_mode = #tpu.pipeline_mode<synchronous>, transform_indices = @transform_6, window_bounds = array<i64: 4, 32, 128>}, {transform_indices = @transform_7, window_bounds = array<i64: 1, 16, 128>}]} {
    %c0 = arith.constant 0 : index
    %c0_0 = arith.constant 0 : index
    %c0_1 = arith.constant 0 : index
    %0 = vector.load %arg2[%c0, %c0_0, %c0_1] : memref<1x16x128xbf16, #tpu.memory_space<vmem>>, vector<1x16x128xbf16>
    %1 = vector.shape_cast %0 : vector<1x16x128xbf16> to vector<16x128xbf16>
    %c0_2 = arith.constant 0 : index
    %c0_3 = arith.constant 0 : index
    %c0_4 = arith.constant 0 : index
    %2 = vector.load %arg3[%c0_2, %c0_3, %c0_4] : memref<1x16x128xbf16, #tpu.memory_space<vmem>>, vector<1x16x128xbf16>
    %3 = vector.shape_cast %2 : vector<1x16x128xbf16> to vector<16x128xbf16>
    %c0_5 = arith.constant 0 : index
    %c0_6 = arith.constant 0 : index
    %c0_7 = arith.constant 0 : index
    %4 = vector.load %arg4[%c0_5, %c0_6, %c0_7] : memref<1x16x128xbf16, #tpu.memory_space<vmem>>, vector<1x16x128xbf16>
    %5 = vector.shape_cast %4 : vector<1x16x128xbf16> to vector<16x128xbf16>
    %6 = vector.shape_cast %3 : vector<16x128xbf16> to vector<1x16x128xbf16>
    %7 = vector.shape_cast %6 : vector<1x16x128xbf16> to vector<1x16x128xbf16>
    %8 = vector.broadcast %7 : vector<1x16x128xbf16> to vector<4x16x128xbf16>
    %9 = vector.shape_cast %1 : vector<16x128xbf16> to vector<1x16x128xbf16>
    %10 = vector.shape_cast %9 : vector<1x16x128xbf16> to vector<1x16x128xbf16>
    %11 = vector.broadcast %10 : vector<1x16x128xbf16> to vector<4x16x128xbf16>
    %12 = vector.shape_cast %5 : vector<16x128xbf16> to vector<1x16x128xbf16>
    %13 = vector.shape_cast %12 : vector<1x16x128xbf16> to vector<1x16x128xbf16>
    %14 = vector.broadcast %13 : vector<1x16x128xbf16> to vector<4x16x128xbf16>
    %c0_8 = arith.constant 0 : index
    %c0_9 = arith.constant 0 : index
    %c0_10 = arith.constant 0 : index
    %15 = vector.load %arg5[%c0_8, %c0_9, %c0_10] : memref<4x128x32xbf16, #tpu.memory_space<vmem>>, vector<4x128x32xbf16>
    "tpu.trace_start"() <{level = 10 : i32, message = "hsd,hde->hse"}> : () -> ()
    %cst = arith.constant dense<0.000000e+00> : vector<4x16x32xf32>
    %16 = tpu.matmul %8, %15, %cst {dimension_numbers = #tpu.dot_dimension_numbers<[2], [1], [1], [2], [0, 0, 0, 1, 1, 2], [0], [0]>} : vector<4x16x128xbf16>, vector<4x128x32xbf16>, vector<4x16x32xf32> -> vector<4x16x32xf32>
    "tpu.trace_stop"() : () -> ()
    %17 = arith.truncf %16 : vector<4x16x32xf32> to vector<4x16x32xbf16>
    %c0_11 = arith.constant 0 : index
    %c0_12 = arith.constant 0 : index
    %c0_13 = arith.constant 0 : index
    %18 = vector.load %arg6[%c0_11, %c0_12, %c0_13] : memref<4x128x32xbf16, #tpu.memory_space<vmem>>, vector<4x128x32xbf16>
    "tpu.trace_start"() <{level = 10 : i32, message = "hsd,hde->hse"}> : () -> ()
    %cst_14 = arith.constant dense<0.000000e+00> : vector<4x16x32xf32>
    %19 = tpu.matmul %11, %18, %cst_14 {dimension_numbers = #tpu.dot_dimension_numbers<[2], [1], [1], [2], [0, 0, 0, 1, 1, 2], [0], [0]>} : vector<4x16x128xbf16>, vector<4x128x32xbf16>, vector<4x16x32xf32> -> vector<4x16x32xf32>
    "tpu.trace_stop"() : () -> ()
    %20 = arith.truncf %19 : vector<4x16x32xf32> to vector<4x16x32xbf16>
    %c0_15 = arith.constant 0 : index
    %c0_16 = arith.constant 0 : index
    %c0_17 = arith.constant 0 : index
    %21 = vector.load %arg7[%c0_15, %c0_16, %c0_17] : memref<4x128x32xbf16, #tpu.memory_space<vmem>>, vector<4x128x32xbf16>
    "tpu.trace_start"() <{level = 10 : i32, message = "hsd,hde->hse"}> : () -> ()
    %cst_18 = arith.constant dense<0.000000e+00> : vector<4x16x32xf32>
    %22 = tpu.matmul %14, %21, %cst_18 {dimension_numbers = #tpu.dot_dimension_numbers<[2], [1], [1], [2], [0, 0, 0, 1, 1, 2], [0], [0]>} : vector<4x16x128xbf16>, vector<4x128x32xbf16>, vector<4x16x32xf32> -> vector<4x16x32xf32>
    "tpu.trace_stop"() : () -> ()
    %23 = arith.truncf %22 : vector<4x16x32xf32> to vector<4x16x32xbf16>
    "tpu.trace_start"() <{level = 10 : i32, message = "hqd,hkd->hqk"}> : () -> ()
    %cst_19 = arith.constant dense<0.000000e+00> : vector<4x16x16xf32>
    %24 = tpu.matmul %17, %20, %cst_19 {dimension_numbers = #tpu.dot_dimension_numbers<[2], [2], [1], [1], [0, 0, 0, 1, 1, 1], [0], [0]>} : vector<4x16x32xbf16>, vector<4x16x32xbf16>, vector<4x16x16xf32> -> vector<4x16x16xf32>
    "tpu.trace_stop"() : () -> ()
    %c16_i32 = arith.constant 16 : i32
    %25 = arith.muli %arg1, %c16_i32 : i32
    %26 = tpu.iota {dimensions = array<i32: 1>} : vector<1x16x16xi32>
    %27 = vector.broadcast %25 : i32 to vector<1x16x16xi32>
    %28 = arith.addi %26, %27 : vector<1x16x16xi32>
    %29 = tpu.iota {dimensions = array<i32: 2>} : vector<1x16x16xi32>
    %30 = arith.cmpi sle, %29, %28 : vector<1x16x16xi32>
    %cst_20 = arith.constant 0xFF800000 : f32
    %31 = vector.shape_cast %30 : vector<1x16x16xi1> to vector<1x16x16xi1>
    %32 = vector.broadcast %31 : vector<1x16x16xi1> to vector<4x16x16xi1>
    %33 = vector.broadcast %cst_20 : f32 to vector<4x16x16xf32>
    %34 = arith.select %32, %24, %33 : vector<4x16x16xi1>, vector<4x16x16xf32>
    %cst_21 = arith.constant dense<0xFF800000> : vector<4x16xf32>
    %35 = vector.multi_reduction <maximumf>, %34, %cst_21 [2] : vector<4x16x16xf32> to vector<4x16xf32>
    %36 = vector.shape_cast %35 : vector<4x16xf32> to vector<4x16x1xf32>
    %37 = vector.broadcast %36 : vector<4x16x1xf32> to vector<4x16x16xf32>
    %38 = arith.subf %34, %37 : vector<4x16x16xf32>
    %39 = math.exp %38 : vector<4x16x16xf32>
    %cst_22 = arith.constant dense<0.000000e+00> : vector<4x16xf32>
    %40 = vector.multi_reduction <add>, %39, %cst_22 [2] : vector<4x16x16xf32> to vector<4x16xf32>
    %41 = vector.shape_cast %40 : vector<4x16xf32> to vector<4x16x1xf32>
    %42 = tpu.reciprocal %41 {approx = true} : vector<4x16x1xf32> -> vector<4x16x1xf32>
    %43 = vector.broadcast %42 : vector<4x16x1xf32> to vector<4x16x16xf32>
    %44 = arith.mulf %39, %43 : vector<4x16x16xf32>
    %45 = arith.truncf %44 : vector<4x16x16xf32> to vector<4x16x16xbf16>
    "tpu.trace_start"() <{level = 10 : i32, message = "hqk,hkd->hqd"}> : () -> ()
    %cst_23 = arith.constant dense<0.000000e+00> : vector<4x16x32xf32>
    %46 = tpu.matmul %45, %23, %cst_23 {dimension_numbers = #tpu.dot_dimension_numbers<[2], [1], [1], [2], [0, 0, 0, 1, 1, 2], [0], [0]>} : vector<4x16x16xbf16>, vector<4x16x32xbf16>, vector<4x16x32xf32> -> vector<4x16x32xf32>
    "tpu.trace_stop"() : () -> ()
    %47 = arith.truncf %46 : vector<4x16x32xf32> to vector<4x16x32xbf16>
    %c0_24 = arith.constant 0 : index
    %c0_25 = arith.constant 0 : index
    %c0_26 = arith.constant 0 : index
    %48 = vector.load %arg8[%c0_24, %c0_25, %c0_26] : memref<4x32x128xbf16, #tpu.memory_space<vmem>>, vector<4x32x128xbf16>
    "tpu.trace_start"() <{level = 10 : i32, message = "hqd,hdm->hqm"}> : () -> ()
    %cst_27 = arith.constant dense<0.000000e+00> : vector<4x16x128xf32>
    %49 = tpu.matmul %47, %48, %cst_27 {dimension_numbers = #tpu.dot_dimension_numbers<[2], [1], [1], [2], [0, 0, 0, 1, 1, 2], [0], [0]>} : vector<4x16x32xbf16>, vector<4x32x128xbf16>, vector<4x16x128xf32> -> vector<4x16x128xf32>
    "tpu.trace_stop"() : () -> ()
    %50 = vector.extract_strided_slice %49 {offsets = [0, 0, 0], sizes = [1, 16, 128], strides = [1, 1, 1]} : vector<4x16x128xf32> to vector<1x16x128xf32>
    %51 = vector.shape_cast %50 : vector<1x16x128xf32> to vector<16x128xf32>
    %52 = vector.extract_strided_slice %49 {offsets = [1, 0, 0], sizes = [1, 16, 128], strides = [1, 1, 1]} : vector<4x16x128xf32> to vector<1x16x128xf32>
    %53 = vector.shape_cast %52 : vector<1x16x128xf32> to vector<16x128xf32>
    %54 = arith.addf %51, %53 : vector<16x128xf32>
    %55 = vector.extract_strided_slice %49 {offsets = [2, 0, 0], sizes = [1, 16, 128], strides = [1, 1, 1]} : vector<4x16x128xf32> to vector<1x16x128xf32>
    %56 = vector.shape_cast %55 : vector<1x16x128xf32> to vector<16x128xf32>
    %57 = arith.addf %54, %56 : vector<16x128xf32>
    %58 = vector.extract_strided_slice %49 {offsets = [3, 0, 0], sizes = [1, 16, 128], strides = [1, 1, 1]} : vector<4x16x128xf32> to vector<1x16x128xf32>
    %59 = vector.shape_cast %58 : vector<1x16x128xf32> to vector<16x128xf32>
    %60 = arith.addf %57, %59 : vector<16x128xf32>
    %61 = arith.truncf %60 : vector<16x128xf32> to vector<16x128xbf16>
    %c0_28 = arith.constant 0 : index
    %c0_29 = arith.constant 0 : index
    %c0_30 = arith.constant 0 : index
    %62 = vector.load %arg9[%c0_28, %c0_29, %c0_30] : memref<1x16x128xbf16, #tpu.memory_space<vmem>>, vector<1x16x128xbf16>
    %63 = vector.shape_cast %62 : vector<1x16x128xbf16> to vector<16x128xbf16>
    %64 = vector.shape_cast %61 : vector<16x128xbf16> to vector<1x16x128xbf16>
    tpu.vector_store %arg9[%c0_28, %c0_29, %c0_30], %64 {strides = array<i32>} : memref<1x16x128xbf16, #tpu.memory_space<vmem>>, vector<1x16x128xbf16>,
    return
  }
  func.func @transform_0(%arg0: i32, %arg1: i32) -> (i32, i32, i32) {
    %c0_i32 = arith.constant 0 : i32
    %c0_i32_0 = arith.constant 0 : i32
    %c0_i32_1 = arith.constant 0 : i32
    return %arg0, %c0_i32, %c0_i32_0 : i32, i32, i32
  }
  func.func @transform_1(%arg0: i32, %arg1: i32) -> (i32, i32, i32) {
    %c0_i32 = arith.constant 0 : i32
    %c0_i32_0 = arith.constant 0 : i32
    return %arg0, %arg1, %c0_i32 : i32, i32, i32
  }
  func.func @transform_2(%arg0: i32, %arg1: i32) -> (i32, i32, i32) {
    %c0_i32 = arith.constant 0 : i32
    %c0_i32_0 = arith.constant 0 : i32
    %c0_i32_1 = arith.constant 0 : i32
    return %arg0, %c0_i32, %c0_i32_0 : i32, i32, i32
  }
  func.func @transform_3(%arg0: i32, %arg1: i32) -> (i32, i32, i32) {
    %c0_i32 = arith.constant 0 : i32
    %c0_i32_0 = arith.constant 0 : i32
    %c0_i32_1 = arith.constant 0 : i32
    %c0_i32_2 = arith.constant 0 : i32
    return %c0_i32, %c0_i32_0, %c0_i32_1 : i32, i32, i32
  }
  func.func @transform_4(%arg0: i32, %arg1: i32) -> (i32, i32, i32) {
    %c0_i32 = arith.constant 0 : i32
    %c0_i32_0 = arith.constant 0 : i32
    %c0_i32_1 = arith.constant 0 : i32
    %c0_i32_2 = arith.constant 0 : i32
    return %c0_i32, %c0_i32_0, %c0_i32_1 : i32, i32, i32
  }
  func.func @transform_5(%arg0: i32, %arg1: i32) -> (i32, i32, i32) {
    %c0_i32 = arith.constant 0 : i32
    %c0_i32_0 = arith.constant 0 : i32
    %c0_i32_1 = arith.constant 0 : i32
    %c0_i32_2 = arith.constant 0 : i32
    return %c0_i32, %c0_i32_0, %c0_i32_1 : i32, i32, i32
  }
  func.func @transform_6(%arg0: i32, %arg1: i32) -> (i32, i32, i32) {
    %c0_i32 = arith.constant 0 : i32
    %c0_i32_0 = arith.constant 0 : i32
    %c0_i32_1 = arith.constant 0 : i32
    %c0_i32_2 = arith.constant 0 : i32
    return %c0_i32, %c0_i32_0, %c0_i32_1 : i32, i32, i32
  }
  func.func @transform_7(%arg0: i32, %arg1: i32) -> (i32, i32, i32) {
    %c0_i32 = arith.constant 0 : i32
    %c0_i32_0 = arith.constant 0 : i32
    return %arg0, %arg1, %c0_i32 : i32, i32, i32
  }
}

</mosaic_0001>

<llo_original>
// kernel: tpu_custom_call.1
$region0: #{tpu_custom_call.1}
  #allocation0 [shape = 'u32[]', space=smem, size = 0x4, offset = 0x4, fixed_abs, tag = 'smem constant byte address 0x4 - core index']
  #allocation1 [shape = 'u32[144,128]{1,0:T(1,128)}', space=vmem, size = 0x12000, scoped, tag = 'internal scratch']
  %s0 = inlined_call_operand.vmem [shape: bf16[2,16,128], index: 0, kind: input, shape index: {}]
  %s1 = inlined_call_operand.vmem [shape: bf16[2,16,128], index: 1, kind: input, shape index: {}]
  %s2 = inlined_call_operand.vmem [shape: bf16[2,16,128], index: 2, kind: input, shape index: {}]
  %s3 = inlined_call_operand.vmem [shape: bf16[4,128,32], index: 3, kind: input, shape index: {}]
  %s4 = inlined_call_operand.vmem [shape: bf16[4,128,32], index: 4, kind: input, shape index: {}]
  %s5 = inlined_call_operand.vmem [shape: bf16[4,128,32], index: 5, kind: input, shape index: {}]
  %s6 = inlined_call_operand.vmem [shape: bf16[4,32,128], index: 6, kind: input, shape index: {}]
  %s7 = inlined_call_operand.hbm [shape: bf16[2,16,128], index: 7, kind: output, shape index: {}]
  %s8 = sld [smem:[#allocation0]]
  $region61: #{tpu_custom_call.1} parent=0
    _
  %s10 = ssub.s32 1, %s8
  %s11 = scalar_select 0, %s10, %s8
  $region1: #{tpu_custom_call.1} parent=0
    #allocation2 [shape = 'u8[8192]{0}', space=vmem, size = 0x2000, scoped, tag = 'output window, operand 0']
    #allocation3 [shape = 's32[2]{0}', space=sflag, size = 0x8, scoped, tag = 'scoped memory for tpu_custom_call.1']
    %12 = vsyncpa [#allocation3], 0
    %s13 = scalar_lea.sflag [#allocation3], 1
    %14 = vsyncpa %s13, 0
    loop: start=0, step=1, limit=4
    $region2: #{tpu_custom_call.1} parent=1 // loop_pre_header
      _
    $region3: #{tpu_custom_call.1} parent=1 // loop_header
      %s16 = sphi 0, %s20
      %p17 = scmp.ge.s32.totalorder %s16, 4
      %s23 = sphi 0, %s35
      %s24 = sphi 0, %s31
      %s25 = sphi 0, %s23
      %s26 = sphi 0, %s24
      %s27 = sphi 0, %s25
      %s28 = sphi 0, %s26
      %s38 = sphi 0, %s40
      %s41 = sphi 0, %s38
      %s42 = sphi 0, %s41
      %s58 = sphi 0, %s42
      %s66 = sphi 0, %s68
      %s69 = sphi 0, %s66
      %s70 = sphi 0, %s69
      %s86 = sphi 0, %s70
      %s92 = sphi 0, %s94
      %s95 = sphi 0, %s92
      %s96 = sphi 0, %s95
      %s112 = sphi 0, %s96
      %s116 = sphi 0, %s116
      %s118 = sphi 0, %s116
      %s119 = sphi 0, %s118
      %s133 = sphi 0, %s119
      %s137 = sphi 0, %s137
      %s139 = sphi 0, %s137
      %s140 = sphi 0, %s139
      %s154 = sphi 0, %s140
      %s158 = sphi 0, %s158
      %s160 = sphi 0, %s158
      %s161 = sphi 0, %s160
      %s175 = sphi 0, %s161
      %s179 = sphi 0, %s179
      %s181 = sphi 0, %s179
      %s182 = sphi 0, %s181
      %s196 = sphi 0, %s182
      %s204 = sphi 0, %s206
      %s207 = sphi 0, %s204
      %s208 = sphi 0, %s207
      %s224 = sphi 0, %s208
    $region4: #{tpu_custom_call.1} parent=1 // loop_header_branch
      %19 = sbr.rel (%p17) target = $region8
    $region5: #{tpu_custom_call.1} parent=1 // loop_body
      %s21 = ssub.s32 %s16, 1
      %s22 = ssub.s32 %s16, 2
      %s29 = sadd.s32 1, %s24
      %p30 = scmp.ge.s32.totalorder %s29, 1
      %s31 = scalar_select %p30, 0, %s29
      %s32 = sadd.s32 1, %s23
      %s33 = scalar_select %p30, %s32, %s23
      %p34 = scmp.ge.s32.totalorder %s33, 2
      %s35 = scalar_select %p34, 0, %s33
      %s36 = ssub.s32 %s23, %s35
      %p37 = scmp.eq.s32.totalorder %s36, 0
      %s39 = sadd.s32 %s38, 1
      %s40 = scalar_select %p37, %s38, %s39
      %p43 = pneg %p37
      %p44 = scmp.eq.s32.totalorder %s16, 1
      %p45 = por %p43, %p44
      %p46 = scmp.ne.s32.totalorder %s38, %s41
      %p47 = scmp.eq.s32.totalorder %s16, 0
      %p48 = por %p46, %p47
      %p49 = scmp.ne.s32.totalorder %s38, %s41
      %p50 = scmp.eq.s32.totalorder %s21, 1
      %p51 = por %p49, %p50
      %p52 = scmp.ne.s32.totalorder %s41, %s42
      %p53 = scmp.eq.s32.totalorder %s21, 0
      %p54 = por %p52, %p53
      %p55 = scmp.ne.s32.totalorder %s41, %s42
      %p56 = scmp.eq.s32.totalorder %s22, 1
      %p57 = por %p55, %p56
      %p59 = scmp.ne.s32.totalorder %s42, %s58
      %p60 = scmp.eq.s32.totalorder %s22, 0
      %p61 = por %p59, %p60
      %s62 = ssub.s32 %s23, %s35
      %s63 = ssub.s32 %s24, %s31
      %s64 = sor.u32 %s62, %s63
      %p65 = scmp.eq.s32.totalorder %s64, 0
      %s67 = sadd.s32 %s66, 1
      %s68 = scalar_select %p65, %s66, %s67
      %p71 = pneg %p65
      %p72 = scmp.eq.s32.totalorder %s16, 1
      %p73 = por %p71, %p72
      %p74 = scmp.ne.s32.totalorder %s66, %s69
      %p75 = scmp.eq.s32.totalorder %s16, 0
      %p76 = por %p74, %p75
      %p77 = scmp.ne.s32.totalorder %s66, %s69
      %p78 = scmp.eq.s32.totalorder %s21, 1
      %p79 = por %p77, %p78
      %p80 = scmp.ne.s32.totalorder %s69, %s70
      %p81 = scmp.eq.s32.totalorder %s21, 0
      %p82 = por %p80, %p81
      %p83 = scmp.ne.s32.totalorder %s69, %s70
      %p84 = scmp.eq.s32.totalorder %s22, 1
      %p85 = por %p83, %p84
      %p87 = scmp.ne.s32.totalorder %s70, %s86
      %p88 = scmp.eq.s32.totalorder %s22, 0
      %p89 = por %p87, %p88
      %s90 = ssub.s32 %s23, %s35
      %p91 = scmp.eq.s32.totalorder %s90, 0
      %s93 = sadd.s32 %s92, 1
      %s94 = scalar_select %p91, %s92, %s93
      %p97 = pneg %p91
      %p98 = scmp.eq.s32.totalorder %s16, 1
      %p99 = por %p97, %p98
      %p100 = scmp.ne.s32.totalorder %s92, %s95
      %p101 = scmp.eq.s32.totalorder %s16, 0
      %p102 = por %p100, %p101
      %p103 = scmp.ne.s32.totalorder %s92, %s95
      %p104 = scmp.eq.s32.totalorder %s21, 1
      %p105 = por %p103, %p104
      %p106 = scmp.ne.s32.totalorder %s95, %s96
      %p107 = scmp.eq.s32.totalorder %s21, 0
      %p108 = por %p106, %p107
      %p109 = scmp.ne.s32.totalorder %s95, %s96
      %p110 = scmp.eq.s32.totalorder %s22, 1
      %p111 = por %p109, %p110
      %p113 = scmp.ne.s32.totalorder %s96, %s112
      %p114 = scmp.eq.s32.totalorder %s22, 0
      %p115 = por %p113, %p114
      %s117 = sadd.s32 %s116, 1
      %p120 = scmp.eq.s32.totalorder %s16, 1
      %p121 = scmp.ne.s32.totalorder %s116, %s118
      %p122 = scmp.eq.s32.totalorder %s16, 0
      %p123 = por %p121, %p122
      %p124 = scmp.ne.s32.totalorder %s116, %s118
      %p125 = scmp.eq.s32.totalorder %s21, 1
      %p126 = por %p124, %p125
      %p127 = scmp.ne.s32.totalorder %s118, %s119
      %p128 = scmp.eq.s32.totalorder %s21, 0
      %p129 = por %p127, %p128
      %p130 = scmp.ne.s32.totalorder %s118, %s119
      %p131 = scmp.eq.s32.totalorder %s22, 1
      %p132 = por %p130, %p131
      %p134 = scmp.ne.s32.totalorder %s119, %s133
      %p135 = scmp.eq.s32.totalorder %s22, 0
      %p136 = por %p134, %p135
      %s138 = sadd.s32 %s137, 1
      %p141 = scmp.eq.s32.totalorder %s16, 1
      %p142 = scmp.ne.s32.totalorder %s137, %s139
      %p143 = scmp.eq.s32.totalorder %s16, 0
      %p144 = por %p142, %p143
      %p145 = scmp.ne.s32.totalorder %s137, %s139
      %p146 = scmp.eq.s32.totalorder %s21, 1
      %p147 = por %p145, %p146
      %p148 = scmp.ne.s32.totalorder %s139, %s140
      %p149 = scmp.eq.s32.totalorder %s21, 0
      %p150 = por %p148, %p149
      %p151 = scmp.ne.s32.totalorder %s139, %s140
      %p152 = scmp.eq.s32.totalorder %s22, 1
      %p153 = por %p151, %p152
      %p155 = scmp.ne.s32.totalorder %s140, %s154
      %p156 = scmp.eq.s32.totalorder %s22, 0
      %p157 = por %p155, %p156
      %s159 = sadd.s32 %s158, 1
      %p162 = scmp.eq.s32.totalorder %s16, 1
      %p163 = scmp.ne.s32.totalorder %s158, %s160
      %p164 = scmp.eq.s32.totalorder %s16, 0
      %p165 = por %p163, %p164
      %p166 = scmp.ne.s32.totalorder %s158, %s160
      %p167 = scmp.eq.s32.totalorder %s21, 1
      %p168 = por %p166, %p167
      %p169 = scmp.ne.s32.totalorder %s160, %s161
      %p170 = scmp.eq.s32.totalorder %s21, 0
      %p171 = por %p169, %p170
      %p172 = scmp.ne.s32.totalorder %s160, %s161
      %p173 = scmp.eq.s32.totalorder %s22, 1
      %p174 = por %p172, %p173
      %p176 = scmp.ne.s32.totalorder %s161, %s175
      %p177 = scmp.eq.s32.totalorder %s22, 0
      %p178 = por %p176, %p177
      %s180 = sadd.s32 %s179, 1
      %p183 = scmp.eq.s32.totalorder %s16, 1
      %p184 = scmp.ne.s32.totalorder %s179, %s181
      %p185 = scmp.eq.s32.totalorder %s16, 0
      %p186 = por %p184, %p185
      %p187 = scmp.ne.s32.totalorder %s179, %s181
      %p188 = scmp.eq.s32.totalorder %s21, 1
      %p189 = por %p187, %p188
      %p190 = scmp.ne.s32.totalorder %s181, %s182
      %p191 = scmp.eq.s32.totalorder %s21, 0
      %p192 = por %p190, %p191
      %p193 = scmp.ne.s32.totalorder %s181, %s182
      %p194 = scmp.eq.s32.totalorder %s22, 1
      %p195 = por %p193, %p194
      %p197 = scmp.ne.s32.totalorder %s182, %s196
      %p198 = scmp.eq.s32.totalorder %s22, 0
      %p199 = por %p197, %p198
      %s200 = ssub.s32 %s23, %s35
      %s201 = ssub.s32 %s24, %s31
      %s202 = sor.u32 %s200, %s201
      %p203 = scmp.eq.s32.totalorder %s202, 0
      %s205 = sadd.s32 %s204, 1
      %s206 = scalar_select %p203, %s204, %s205
      %p209 = pneg %p203
      %p210 = scmp.eq.s32.totalorder %s16, 1
      %p211 = por %p209, %p210
      %p212 = scmp.ne.s32.totalorder %s204, %s207
      %p213 = scmp.eq.s32.totalorder %s16, 0
      %p214 = por %p212, %p213
      %p215 = scmp.ne.s32.totalorder %s204, %s207
      %p216 = scmp.eq.s32.totalorder %s21, 1
      %p217 = por %p215, %p216
      %p218 = scmp.ne.s32.totalorder %s207, %s208
      %p219 = scmp.eq.s32.totalorder %s21, 0
      %p220 = por %p218, %p219
      %p221 = scmp.ne.s32.totalorder %s207, %s208
      %p222 = scmp.eq.s32.totalorder %s22, 1
      %p223 = por %p221, %p222
      %p225 = scmp.ne.s32.totalorder %s208, %s224
      %p226 = scmp.eq.s32.totalorder %s22, 0
      %p227 = por %p225, %p226
      %p228 = scmp.le.s32.totalorder 1, %s16
      %p229 = scmp.lt.s32.totalorder %s16, 3
      %p230 = pnand %p228, %p229
      %p231 = pneg %p230
      // Predicated region
      $region9: #{tpu_custom_call.1} parent=5 // pred_check
        _
      $region10: #{tpu_custom_call.1} parent=5 // pred_check_branch
        %233 = sbr.rel (%p230) target = $region12
      $region11: #{tpu_custom_call.1} parent=5 // pred_region
        %s234 = ssub.s32 %s16, 1
        // Predicated region
        $region13: #{tpu_custom_call.1} parent=11 // pred_check
          %p235 = pneg %p129
        $region14: #{tpu_custom_call.1} parent=11 // pred_check_branch
          %237 = sbr.rel (%p235) target = $region16
        $region15: #{tpu_custom_call.1} parent=11 // pred_region
          _
        $region16: #{tpu_custom_call.1} parent=11 // pred_fallthru
          _
        // Predicated region
        $region17: #{tpu_custom_call.1} parent=11 // pred_check
          %p238 = pneg %p150
        $region18: #{tpu_custom_call.1} parent=11 // pred_check_branch
          %240 = sbr.rel (%p238) target = $region20
        $region19: #{tpu_custom_call.1} parent=11 // pred_region
          _
        $region20: #{tpu_custom_call.1} parent=11 // pred_fallthru
          _
        // Predicated region
        $region21: #{tpu_custom_call.1} parent=11 // pred_check
          %p241 = pneg %p171
        $region22: #{tpu_custom_call.1} parent=11 // pred_check_branch
          %243 = sbr.rel (%p241) target = $region24
        $region23: #{tpu_custom_call.1} parent=11 // pred_region
          _
        $region24: #{tpu_custom_call.1} parent=11 // pred_fallthru
          _
        // Predicated region
        $region25: #{tpu_custom_call.1} parent=11 // pred_check
          %p244 = pneg %p192
        $region26: #{tpu_custom_call.1} parent=11 // pred_check_branch
          %246 = sbr.rel (%p244) target = $region28
        $region27: #{tpu_custom_call.1} parent=11 // pred_region
          _
        $region28: #{tpu_custom_call.1} parent=11 // pred_fallthru
          _
      $region12: #{tpu_custom_call.1} parent=5 // pred_fallthru
        _
      %p247 = scmp.lt.s32.totalorder %s16, 2
      // Predicated region
      $region29: #{tpu_custom_call.1} parent=5 // pred_check
        %p248 = pneg %p247
      $region30: #{tpu_custom_call.1} parent=5 // pred_check_branch
        %250 = sbr.rel (%p248) target = $region32
      $region31: #{tpu_custom_call.1} parent=5 // pred_region
        // Predicated region
        $region33: #{tpu_custom_call.1} parent=31 // pred_check
          %p251 = pneg %p48
        $region34: #{tpu_custom_call.1} parent=31 // pred_check_branch
          %253 = sbr.rel (%p251) target = $region36
        $region35: #{tpu_custom_call.1} parent=31 // pred_region
          %p254 = scmp.lt.s32.totalorder %s23, 1
          %s255 = scalar_select %p254, %s23, 1
          %s256 = smul.addr %s255, 2
          %s257 = smul.addr %s256, 4
          %s258 = scalar_lea.vmem %s0, %s257
        $region36: #{tpu_custom_call.1} parent=31 // pred_fallthru
          _
        // Predicated region
        $region37: #{tpu_custom_call.1} parent=31 // pred_check
          %p259 = pneg %p76
        $region38: #{tpu_custom_call.1} parent=31 // pred_check_branch
          %261 = sbr.rel (%p259) target = $region40
        $region39: #{tpu_custom_call.1} parent=31 // pred_region
          %s262 = smul.u32 2, %s24
          %p263 = scmp.lt.s32.totalorder %s23, 1
          %s264 = scalar_select %p263, %s23, 1
          %p265 = scmp.lt.s32.totalorder %s262, 1
          %s266 = scalar_select %p265, %s262, 1
          %s267 = smul.addr %s264, 2
          %s268 = sadd.s32 %s266, %s267
          %s269 = smul.addr %s268, 4
          %s270 = scalar_lea.vmem %s1, %s269
          %s271 = smul.u32 2, %s24
        $region40: #{tpu_custom_call.1} parent=31 // pred_fallthru
          _
        // Predicated region
        $region41: #{tpu_custom_call.1} parent=31 // pred_check
          %p272 = pneg %p102
        $region42: #{tpu_custom_call.1} parent=31 // pred_check_branch
          %274 = sbr.rel (%p272) target = $region44
        $region43: #{tpu_custom_call.1} parent=31 // pred_region
          %p275 = scmp.lt.s32.totalorder %s23, 1
          %s276 = scalar_select %p275, %s23, 1
          %s277 = smul.addr %s276, 2
          %s278 = smul.addr %s277, 4
          %s279 = scalar_lea.vmem %s2, %s278
        $region44: #{tpu_custom_call.1} parent=31 // pred_fallthru
          _
      $region32: #{tpu_custom_call.1} parent=5 // pred_fallthru
        _
      %p280 = scmp.le.s32.totalorder 1, %s16
      %p281 = scmp.lt.s32.totalorder %s16, 3
      %p282 = pnand %p280, %p281
      %p283 = pneg %p282
      // Predicated region
      $region45: #{tpu_custom_call.1} parent=5 // pred_check
        _
      $region46: #{tpu_custom_call.1} parent=5 // pred_check_branch
        %285 = sbr.rel (%p282) target = $region48
      $region47: #{tpu_custom_call.1} parent=5 // pred_region
        %s286 = ssub.s32 %s16, 1
        %p287 = scmp.lt.s32.totalorder %s25, 1
        %s288 = scalar_select %p287, %s25, 1
        %s289 = smul.addr %s288, 2
        %s290 = smul.addr %s289, 4
        %s291 = scalar_lea.vmem %s0, %s290
        %p292 = pneg %p54
        %p293 = pneg %p51
        %s294 = smul.u32 2, %s26
        %p295 = scmp.lt.s32.totalorder %s25, 1
        %s296 = scalar_select %p295, %s25, 1
        %p297 = scmp.lt.s32.totalorder %s294, 1
        %s298 = scalar_select %p297, %s294, 1
        %s299 = smul.addr %s296, 2
        %s300 = sadd.s32 %s298, %s299
        %s301 = smul.addr %s300, 4
        %s302 = scalar_lea.vmem %s1, %s301
        %p303 = pneg %p82
        %p304 = pneg %p79
        %p305 = scmp.lt.s32.totalorder %s25, 1
        %s306 = scalar_select %p305, %s25, 1
        %s307 = smul.addr %s306, 2
        %s308 = smul.addr %s307, 4
        %s309 = scalar_lea.vmem %s2, %s308
        %p310 = pneg %p108
        %p311 = pneg %p105
        %p312 = pneg %p129
        %p313 = pneg %p126
        %p314 = pneg %p150
        %p315 = pneg %p147
        %p316 = pneg %p171
        %p317 = pneg %p168
        %p318 = pneg %p192
        %p319 = pneg %p189
        %p320 = pneg %p220
        %p321 = pneg %p217
        %s322 = sand.u32 %s207, 1
        %s323 = scalar_lea.sflag [#allocation3], %s322
        %s324 = sand.u32 %s207, 1
        %s325 = smul.addr %s324, 8
        %s326 = scalar_lea.vmem [#allocation2], %s325
        %p327 = scmp.lt.s32.totalorder %s25, 1
        %s328 = scalar_select %p327, %s25, 1
        %s329 = smul.addr %s328, 2
        %s330 = smul.addr %s329, 4
        %s331 = scalar_lea.vmem %s0, %s330
        %s332 = smul.u32 2, %s26
        %p333 = scmp.lt.s32.totalorder %s25, 1
        %s334 = scalar_select %p333, %s25, 1
        %p335 = scmp.lt.s32.totalorder %s332, 1
        %s336 = scalar_select %p335, %s332, 1
        %s337 = smul.addr %s334, 2
        %s338 = sadd.s32 %s336, %s337
        %s339 = smul.addr %s338, 4
        %s340 = scalar_lea.vmem %s1, %s339
        %s341 = smul.u32 2, %s26
        %p342 = scmp.lt.s32.totalorder %s25, 1
        %s343 = scalar_select %p342, %s25, 1
        %s344 = smul.addr %s343, 2
        %s345 = smul.addr %s344, 4
        %s346 = scalar_lea.vmem %s2, %s345
        %s347 = smul.u32 2, %s26
        %v349 = vld [vmem:[%s331] sm:$0xf]
        %v350 = vld [vmem:[%s331 + $0x4] sm:$0xf]
        %v351 = vld [vmem:[%s340] sm:$0xf]
        %v352 = vld [vmem:[%s340 + $0x4] sm:$0xf]
        %v353 = vld [vmem:[%s346] sm:$0xf]
        %v354 = vld [vmem:[%s346 + $0x4] sm:$0xf]
        %v355 = vld [vmem:[%s3] sm:$0xf]
        %v356 = vld [vmem:[%s3 + $0x4] sm:$0xf]
        %v357 = vld [vmem:[%s3 + $0x8] sm:$0xf]
        %v358 = vld [vmem:[%s3 + $0xc] sm:$0xf]
        %v359 = vld [vmem:[%s3 + $0x10] sm:$0xf]
        %v360 = vld [vmem:[%s3 + $0x14] sm:$0xf]
        %v361 = vld [vmem:[%s3 + $0x18] sm:$0xf]
        %v362 = vld [vmem:[%s3 + $0x1c] sm:$0xf]
        %v363 = vld [vmem:[%s3 + $0x20] sm:$0xf]
        %v364 = vld [vmem:[%s3 + $0x24] sm:$0xf]
        %v365 = vld [vmem:[%s3 + $0x28] sm:$0xf]
        %v366 = vld [vmem:[%s3 + $0x2c] sm:$0xf]
        %v367 = vld [vmem:[%s3 + $0x30] sm:$0xf]
        %v368 = vld [vmem:[%s3 + $0x34] sm:$0xf]
        %v369 = vld [vmem:[%s3 + $0x38] sm:$0xf]
        %v370 = vld [vmem:[%s3 + $0x3c] sm:$0xf]
        %v371 = vld [vmem:[%s3 + $0x40] sm:$0xf]
        %v372 = vld [vmem:[%s3 + $0x44] sm:$0xf]
        %v373 = vld [vmem:[%s3 + $0x48] sm:$0xf]
        %v374 = vld [vmem:[%s3 + $0x4c] sm:$0xf]
        %v375 = vld [vmem:[%s3 + $0x50] sm:$0xf]
        %v376 = vld [vmem:[%s3 + $0x54] sm:$0xf]
        %v377 = vld [vmem:[%s3 + $0x58] sm:$0xf]
        %v378 = vld [vmem:[%s3 + $0x5c] sm:$0xf]
        %v379 = vld [vmem:[%s3 + $0x60] sm:$0xf]
        %v380 = vld [vmem:[%s3 + $0x64] sm:$0xf]
        %v381 = vld [vmem:[%s3 + $0x68] sm:$0xf]
        %v382 = vld [vmem:[%s3 + $0x6c] sm:$0xf]
        %v383 = vld [vmem:[%s3 + $0x70] sm:$0xf]
        %v384 = vld [vmem:[%s3 + $0x74] sm:$0xf]
        %v385 = vld [vmem:[%s3 + $0x78] sm:$0xf]
        %v386 = vld [vmem:[%s3 + $0x7c] sm:$0xf]
        %v387 = vld [vmem:[%s3 + $0x80] sm:$0xf]
        %v388 = vld [vmem:[%s3 + $0x84] sm:$0xf]
        %v389 = vld [vmem:[%s3 + $0x88] sm:$0xf]
        %v390 = vld [vmem:[%s3 + $0x8c] sm:$0xf]
        %v391 = vld [vmem:[%s3 + $0x90] sm:$0xf]
        %v392 = vld [vmem:[%s3 + $0x94] sm:$0xf]
        %v393 = vld [vmem:[%s3 + $0x98] sm:$0xf]
        %v394 = vld [vmem:[%s3 + $0x9c] sm:$0xf]
        %v395 = vld [vmem:[%s3 + $0xa0] sm:$0xf]
        %v396 = vld [vmem:[%s3 + $0xa4] sm:$0xf]
        %v397 = vld [vmem:[%s3 + $0xa8] sm:$0xf]
        %v398 = vld [vmem:[%s3 + $0xac] sm:$0xf]
        %v399 = vld [vmem:[%s3 + $0xb0] sm:$0xf]
        %v400 = vld [vmem:[%s3 + $0xb4] sm:$0xf]
        %v401 = vld [vmem:[%s3 + $0xb8] sm:$0xf]
        %v402 = vld [vmem:[%s3 + $0xbc] sm:$0xf]
        %v403 = vld [vmem:[%s3 + $0xc0] sm:$0xf]
        %v404 = vld [vmem:[%s3 + $0xc4] sm:$0xf]
        %v405 = vld [vmem:[%s3 + $0xc8] sm:$0xf]
        %v406 = vld [vmem:[%s3 + $0xcc] sm:$0xf]
        %v407 = vld [vmem:[%s3 + $0xd0] sm:$0xf]
        %v408 = vld [vmem:[%s3 + $0xd4] sm:$0xf]
        %v409 = vld [vmem:[%s3 + $0xd8] sm:$0xf]
        %v410 = vld [vmem:[%s3 + $0xdc] sm:$0xf]
        %v411 = vld [vmem:[%s3 + $0xe0] sm:$0xf]
        %v412 = vld [vmem:[%s3 + $0xe4] sm:$0xf]
        %v413 = vld [vmem:[%s3 + $0xe8] sm:$0xf]
        %v414 = vld [vmem:[%s3 + $0xec] sm:$0xf]
        %v415 = vld [vmem:[%s3 + $0xf0] sm:$0xf]
        %v416 = vld [vmem:[%s3 + $0xf4] sm:$0xf]
        %v417 = vld [vmem:[%s3 + $0xf8] sm:$0xf]
        %v418 = vld [vmem:[%s3 + $0xfc] sm:$0xf]
        %v421 = vunpack.c.l.b16 %v351
        %v422 = vunpack.c.l.b16 %v352
        %v423 = vpack.c.b16 %v422, %v421
        %v441 = vunpack.c.l.b16 %v355
        %v442 = vunpack.c.l.b16 %v356
        %v443 = vunpack.c.l.b16 %v357
        %v444 = vunpack.c.l.b16 %v358
        %v445 = vunpack.c.l.b16 %v359
        %v446 = vunpack.c.l.b16 %v360
        %v447 = vunpack.c.l.b16 %v361
        %v448 = vunpack.c.l.b16 %v362
        %v449 = vunpack.c.l.b16 %v363
        %v450 = vunpack.c.l.b16 %v364
        %v451 = vunpack.c.l.b16 %v365
        %v452 = vunpack.c.l.b16 %v366
        %v453 = vunpack.c.l.b16 %v367
        %v454 = vunpack.c.l.b16 %v368
        %v455 = vunpack.c.l.b16 %v369
        %v456 = vunpack.c.l.b16 %v370
        %v457 = vpack.c.b16 %v442, %v441
        %v458 = vpack.c.b16 %v444, %v443
        %v459 = vpack.c.b16 %v446, %v445
        %v460 = vpack.c.b16 %v448, %v447
        %v461 = vpack.c.b16 %v450, %v449
        %v462 = vpack.c.b16 %v452, %v451
        %v463 = vpack.c.b16 %v454, %v453
        %v464 = vpack.c.b16 %v456, %v455
        %473 = vmatprep.subr.bf16.mxu0 0
        %474 = vmatpush1.bf16.msra.mxu0 %v457
        %475 = vmatprep.subr.bf16.mxu0 0
        %476 = vmatpush1.bf16.msra.mxu0 %v458
        %477 = vmatprep.subr.bf16.mxu0 0
        %478 = vmatpush1.bf16.msra.mxu0 %v459
        %479 = vmatprep.subr.bf16.mxu0 0
        %480 = vmatpush1.bf16.msra.mxu0 %v460
        %481 = vmatprep.subr.bf16.mxu0 0
        %482 = vmatpush1.bf16.msra.mxu0 %v461
        %483 = vmatprep.subr.bf16.mxu0 0
        %484 = vmatpush1.bf16.msra.mxu0 %v462
        %485 = vmatprep.subr.bf16.mxu0 0
        %486 = vmatpush1.bf16.msra.mxu0 %v463
        %487 = vmatprep.subr.bf16.mxu0 0
        %488 = vmatpush1.bf16.msra.mxu0 %v464
        %489 = vmatprep.subr.bf16.mxu0 0
        %490 = vmatpush1.bf16.msra.mxu0 0
        %491 = vmatprep.subr.bf16.mxu0 0
        %492 = vmatpush1.bf16.msra.mxu0 0
        %493 = vmatprep.subr.bf16.mxu0 0
        %494 = vmatpush1.bf16.msra.mxu0 0
        %495 = vmatprep.subr.bf16.mxu0 0
        %496 = vmatpush1.bf16.msra.mxu0 0
        %497 = vmatprep.subr.bf16.mxu0 0
        %498 = vmatpush1.bf16.msra.mxu0 0
        %499 = vmatprep.subr.bf16.mxu0 0
        %500 = vmatpush1.bf16.msra.mxu0 0
        %501 = vmatprep.subr.bf16.mxu0 0
        %502 = vmatpush1.bf16.msra.mxu0 0
        %503 = vmatprep.subr.bf16.mxu0 0
        %504 = vmatpush1.bf16.msra.mxu0 0
        %505 = vmatprep.mubr.bf16.mxu0 0
        %506 = vmatmul.mubr.bf16.gmra.mrb[0].mxu0 %v423
        %v507 = vpop.f32.mrb[0].mxu0
        %v508 = vadd.f32 0.0, %v507
        %v509 = vpop.f32.mrb[0].mxu0
        %v510 = vpop.f32.mrb[0].mxu0
        %v511 = vadd.f32 0.0, %v510
        %v512 = vpop.f32.mrb[0].mxu0
        %513 = vdwg.mxu0
        %v530 = vunpack.c.l.b16 %v371
        %v531 = vunpack.c.l.b16 %v372
        %v532 = vunpack.c.l.b16 %v373
        %v533 = vunpack.c.l.b16 %v374
        %v534 = vunpack.c.l.b16 %v375
        %v535 = vunpack.c.l.b16 %v376
        %v536 = vunpack.c.l.b16 %v377
        %v537 = vunpack.c.l.b16 %v378
        %v538 = vunpack.c.l.b16 %v379
        %v539 = vunpack.c.l.b16 %v380
        %v540 = vunpack.c.l.b16 %v381
        %v541 = vunpack.c.l.b16 %v382
        %v542 = vunpack.c.l.b16 %v383
        %v543 = vunpack.c.l.b16 %v384
        %v544 = vunpack.c.l.b16 %v385
        %v545 = vunpack.c.l.b16 %v386
        %v546 = vpack.c.b16 %v531, %v530
        %v547 = vpack.c.b16 %v533, %v532
        %v548 = vpack.c.b16 %v535, %v534
        %v549 = vpack.c.b16 %v537, %v536
        %v550 = vpack.c.b16 %v539, %v538
        %v551 = vpack.c.b16 %v541, %v540
        %v552 = vpack.c.b16 %v543, %v542
        %v553 = vpack.c.b16 %v545, %v544
        %562 = vmatprep.subr.bf16.mxu0 0
        %563 = vmatpush1.bf16.msra.mxu0 %v546
        %564 = vmatprep.subr.bf16.mxu0 0
        %565 = vmatpush1.bf16.msra.mxu0 %v547
        %566 = vmatprep.subr.bf16.mxu0 0
        %567 = vmatpush1.bf16.msra.mxu0 %v548
        %568 = vmatprep.subr.bf16.mxu0 0
        %569 = vmatpush1.bf16.msra.mxu0 %v549
        %570 = vmatprep.subr.bf16.mxu0 0
        %571 = vmatpush1.bf16.msra.mxu0 %v550
        %572 = vmatprep.subr.bf16.mxu0 0
        %573 = vmatpush1.bf16.msra.mxu0 %v551
        %574 = vmatprep.subr.bf16.mxu0 0
        %575 = vmatpush1.bf16.msra.mxu0 %v552
        %576 = vmatprep.subr.bf16.mxu0 0
        %577 = vmatpush1.bf16.msra.mxu0 %v553
        %578 = vmatprep.subr.bf16.mxu0 0
        %579 = vmatpush1.bf16.msra.mxu0 0
        %580 = vmatprep.subr.bf16.mxu0 0
        %581 = vmatpush1.bf16.msra.mxu0 0
        %582 = vmatprep.subr.bf16.mxu0 0
        %583 = vmatpush1.bf16.msra.mxu0 0
        %584 = vmatprep.subr.bf16.mxu0 0
        %585 = vmatpush1.bf16.msra.mxu0 0
        %586 = vmatprep.subr.bf16.mxu0 0
        %587 = vmatpush1.bf16.msra.mxu0 0
        %588 = vmatprep.subr.bf16.mxu0 0
        %589 = vmatpush1.bf16.msra.mxu0 0
        %590 = vmatprep.subr.bf16.mxu0 0
        %591 = vmatpush1.bf16.msra.mxu0 0
        %592 = vmatprep.subr.bf16.mxu0 0
        %593 = vmatpush1.bf16.msra.mxu0 0
        %594 = vmatprep.mubr.bf16.mxu0 0
        %595 = vmatmul.mubr.bf16.gmra.mrb[0].mxu0 %v423
        %v596 = vpop.f32.mrb[0].mxu0
        %v597 = vadd.f32 0.0, %v596
        %v598 = vpop.f32.mrb[0].mxu0
        %v599 = vpop.f32.mrb[0].mxu0
        %v600 = vadd.f32 0.0, %v599
        %v601 = vpop.f32.mrb[0].mxu0
        %602 = vdwg.mxu0
        %v619 = vunpack.c.l.b16 %v387
        %v620 = vunpack.c.l.b16 %v388
        %v621 = vunpack.c.l.b16 %v389
        %v622 = vunpack.c.l.b16 %v390
        %v623 = vunpack.c.l.b16 %v391
        %v624 = vunpack.c.l.b16 %v392
        %v625 = vunpack.c.l.b16 %v393
        %v626 = vunpack.c.l.b16 %v394
        %v627 = vunpack.c.l.b16 %v395
        %v628 = vunpack.c.l.b16 %v396
        %v629 = vunpack.c.l.b16 %v397
        %v630 = vunpack.c.l.b16 %v398
        %v631 = vunpack.c.l.b16 %v399
        %v632 = vunpack.c.l.b16 %v400
        %v633 = vunpack.c.l.b16 %v401
        %v634 = vunpack.c.l.b16 %v402
        %v635 = vpack.c.b16 %v620, %v619
        %v636 = vpack.c.b16 %v622, %v621
        %v637 = vpack.c.b16 %v624, %v623
        %v638 = vpack.c.b16 %v626, %v625
        %v639 = vpack.c.b16 %v628, %v627
        %v640 = vpack.c.b16 %v630, %v629
        %v641 = vpack.c.b16 %v632, %v631
        %v642 = vpack.c.b16 %v634, %v633
        %651 = vmatprep.subr.bf16.mxu0 0
        %652 = vmatpush1.bf16.msra.mxu0 %v635
        %653 = vmatprep.subr.bf16.mxu0 0
        %654 = vmatpush1.bf16.msra.mxu0 %v636
        %655 = vmatprep.subr.bf16.mxu0 0
        %656 = vmatpush1.bf16.msra.mxu0 %v637
        %657 = vmatprep.subr.bf16.mxu0 0
        %658 = vmatpush1.bf16.msra.mxu0 %v638
        %659 = vmatprep.subr.bf16.mxu0 0
        %660 = vmatpush1.bf16.msra.mxu0 %v639
        %661 = vmatprep.subr.bf16.mxu0 0
        %662 = vmatpush1.bf16.msra.mxu0 %v640
        %663 = vmatprep.subr.bf16.mxu0 0
        %664 = vmatpush1.bf16.msra.mxu0 %v641
        %665 = vmatprep.subr.bf16.mxu0 0
        %666 = vmatpush1.bf16.msra.mxu0 %v642
        %667 = vmatprep.subr.bf16.mxu0 0
        %668 = vmatpush1.bf16.msra.mxu0 0
        %669 = vmatprep.subr.bf16.mxu0 0
        %670 = vmatpush1.bf16.msra.mxu0 0
        %671 = vmatprep.subr.bf16.mxu0 0
        %672 = vmatpush1.bf16.msra.mxu0 0
        %673 = vmatprep.subr.bf16.mxu0 0
        %674 = vmatpush1.bf16.msra.mxu0 0
        %675 = vmatprep.subr.bf16.mxu0 0
        %676 = vmatpush1.bf16.msra.mxu0 0
        %677 = vmatprep.subr.bf16.mxu0 0
        %678 = vmatpush1.bf16.msra.mxu0 0
        %679 = vmatprep.subr.bf16.mxu0 0
        %680 = vmatpush1.bf16.msra.mxu0 0
        %681 = vmatprep.subr.bf16.mxu0 0
        %682 = vmatpush1.bf16.msra.mxu0 0
        %683 = vmatprep.mubr.bf16.mxu0 0
        %684 = vmatmul.mubr.bf16.gmra.mrb[0].mxu0 %v423
        %v685 = vpop.f32.mrb[0].mxu0
        %v686 = vadd.f32 0.0, %v685
        %v687 = vpop.f32.mrb[0].mxu0
        %v688 = vpop.f32.mrb[0].mxu0
        %v689 = vadd.f32 0.0, %v688
        %v690 = vpop.f32.mrb[0].mxu0
        %691 = vdwg.mxu0
        %v708 = vunpack.c.l.b16 %v403
        %v709 = vunpack.c.l.b16 %v404
        %v710 = vunpack.c.l.b16 %v405
        %v711 = vunpack.c.l.b16 %v406
        %v712 = vunpack.c.l.b16 %v407
        %v713 = vunpack.c.l.b16 %v408
        %v714 = vunpack.c.l.b16 %v409
        %v715 = vunpack.c.l.b16 %v410
        %v716 = vunpack.c.l.b16 %v411
        %v717 = vunpack.c.l.b16 %v412
        %v718 = vunpack.c.l.b16 %v413
        %v719 = vunpack.c.l.b16 %v414
        %v720 = vunpack.c.l.b16 %v415
        %v721 = vunpack.c.l.b16 %v416
        %v722 = vunpack.c.l.b16 %v417
        %v723 = vunpack.c.l.b16 %v418
        %v724 = vpack.c.b16 %v709, %v708
        %v725 = vpack.c.b16 %v711, %v710
        %v726 = vpack.c.b16 %v713, %v712
        %v727 = vpack.c.b16 %v715, %v714
        %v728 = vpack.c.b16 %v717, %v716
        %v729 = vpack.c.b16 %v719, %v718
        %v730 = vpack.c.b16 %v721, %v720
        %v731 = vpack.c.b16 %v723, %v722
        %740 = vmatprep.subr.bf16.mxu0 0
        %741 = vmatpush1.bf16.msra.mxu0 %v724
        %742 = vmatprep.subr.bf16.mxu0 0
        %743 = vmatpush1.bf16.msra.mxu0 %v725
        %744 = vmatprep.subr.bf16.mxu0 0
        %745 = vmatpush1.bf16.msra.mxu0 %v726
        %746 = vmatprep.subr.bf16.mxu0 0
        %747 = vmatpush1.bf16.msra.mxu0 %v727
        %748 = vmatprep.subr.bf16.mxu0 0
        %749 = vmatpush1.bf16.msra.mxu0 %v728
        %750 = vmatprep.subr.bf16.mxu0 0
        %751 = vmatpush1.bf16.msra.mxu0 %v729
        %752 = vmatprep.subr.bf16.mxu0 0
        %753 = vmatpush1.bf16.msra.mxu0 %v730
        %754 = vmatprep.subr.bf16.mxu0 0
        %755 = vmatpush1.bf16.msra.mxu0 %v731
        %756 = vmatprep.subr.bf16.mxu0 0
        %757 = vmatpush1.bf16.msra.mxu0 0
        %758 = vmatprep.subr.bf16.mxu0 0
        %759 = vmatpush1.bf16.msra.mxu0 0
        %760 = vmatprep.subr.bf16.mxu0 0
        %761 = vmatpush1.bf16.msra.mxu0 0
        %762 = vmatprep.subr.bf16.mxu0 0
        %763 = vmatpush1.bf16.msra.mxu0 0
        %764 = vmatprep.subr.bf16.mxu0 0
        %765 = vmatpush1.bf16.msra.mxu0 0
        %766 = vmatprep.subr.bf16.mxu0 0
        %767 = vmatpush1.bf16.msra.mxu0 0
        %768 = vmatprep.subr.bf16.mxu0 0
        %769 = vmatpush1.bf16.msra.mxu0 0
        %770 = vmatprep.subr.bf16.mxu0 0
        %771 = vmatpush1.bf16.msra.mxu0 0
        %772 = vmatprep.mubr.bf16.mxu0 0
        %773 = vmatmul.mubr.bf16.gmra.mrb[0].mxu0 %v423
        %v774 = vpop.f32.mrb[0].mxu0
        %v775 = vadd.f32 0.0, %v774
        %v776 = vpop.f32.mrb[0].mxu0
        %v777 = vpop.f32.mrb[0].mxu0
        %v778 = vadd.f32 0.0, %v777
        %v779 = vpop.f32.mrb[0].mxu0
        %780 = vdwg.mxu0
        %v781 = vpack.c.bf16 %v511, %v508
        %v782 = vpack.c.bf16 %v600, %v597
        %v783 = vpack.c.bf16 %v689, %v686
        %v784 = vpack.c.bf16 %v778, %v775
        %v785 = vld [vmem:[%s4] sm:$0xf]
        %v786 = vld [vmem:[%s4 + $0x4] sm:$0xf]
        %v787 = vld [vmem:[%s4 + $0x8] sm:$0xf]
        %v788 = vld [vmem:[%s4 + $0xc] sm:$0xf]
        %v789 = vld [vmem:[%s4 + $0x10] sm:$0xf]
        %v790 = vld [vmem:[%s4 + $0x14] sm:$0xf]
        %v791 = vld [vmem:[%s4 + $0x18] sm:$0xf]
        %v792 = vld [vmem:[%s4 + $0x1c] sm:$0xf]
        %v793 = vld [vmem:[%s4 + $0x20] sm:$0xf]
        %v794 = vld [vmem:[%s4 + $0x24] sm:$0xf]
        %v795 = vld [vmem:[%s4 + $0x28] sm:$0xf]
        %v796 = vld [vmem:[%s4 + $0x2c] sm:$0xf]
        %v797 = vld [vmem:[%s4 + $0x30] sm:$0xf]
        %v798 = vld [vmem:[%s4 + $0x34] sm:$0xf]
        %v799 = vld [vmem:[%s4 + $0x38] sm:$0xf]
        %v800 = vld [vmem:[%s4 + $0x3c] sm:$0xf]
        %v801 = vld [vmem:[%s4 + $0x40] sm:$0xf]
        %v802 = vld [vmem:[%s4 + $0x44] sm:$0xf]
        %v803 = vld [vmem:[%s4 + $0x48] sm:$0xf]
        %v804 = vld [vmem:[%s4 + $0x4c] sm:$0xf]
        %v805 = vld [vmem:[%s4 + $0x50] sm:$0xf]
        %v806 = vld [vmem:[%s4 + $0x54] sm:$0xf]
        %v807 = vld [vmem:[%s4 + $0x58] sm:$0xf]
        %v808 = vld [vmem:[%s4 + $0x5c] sm:$0xf]
        %v809 = vld [vmem:[%s4 + $0x60] sm:$0xf]
        %v810 = vld [vmem:[%s4 + $0x64] sm:$0xf]
        %v811 = vld [vmem:[%s4 + $0x68] sm:$0xf]
        %v812 = vld [vmem:[%s4 + $0x6c] sm:$0xf]
        %v813 = vld [vmem:[%s4 + $0x70] sm:$0xf]
        %v814 = vld [vmem:[%s4 + $0x74] sm:$0xf]
        %v815 = vld [vmem:[%s4 + $0x78] sm:$0xf]
        %v816 = vld [vmem:[%s4 + $0x7c] sm:$0xf]
        %v817 = vld [vmem:[%s4 + $0x80] sm:$0xf]
        %v818 = vld [vmem:[%s4 + $0x84] sm:$0xf]
        %v819 = vld [vmem:[%s4 + $0x88] sm:$0xf]
        %v820 = vld [vmem:[%s4 + $0x8c] sm:$0xf]
        %v821 = vld [vmem:[%s4 + $0x90] sm:$0xf]
        %v822 = vld [vmem:[%s4 + $0x94] sm:$0xf]
        %v823 = vld [vmem:[%s4 + $0x98] sm:$0xf]
        %v824 = vld [vmem:[%s4 + $0x9c] sm:$0xf]
        %v825 = vld [vmem:[%s4 + $0xa0] sm:$0xf]
        %v826 = vld [vmem:[%s4 + $0xa4] sm:$0xf]
        %v827 = vld [vmem:[%s4 + $0xa8] sm:$0xf]
        %v828 = vld [vmem:[%s4 + $0xac] sm:$0xf]
        %v829 = vld [vmem:[%s4 + $0xb0] sm:$0xf]
        %v830 = vld [vmem:[%s4 + $0xb4] sm:$0xf]
        %v831 = vld [vmem:[%s4 + $0xb8] sm:$0xf]
        %v832 = vld [vmem:[%s4 + $0xbc] sm:$0xf]
        %v833 = vld [vmem:[%s4 + $0xc0] sm:$0xf]
        %v834 = vld [vmem:[%s4 + $0xc4] sm:$0xf]
        %v835 = vld [vmem:[%s4 + $0xc8] sm:$0xf]
        %v836 = vld [vmem:[%s4 + $0xcc] sm:$0xf]
        %v837 = vld [vmem:[%s4 + $0xd0] sm:$0xf]
        %v838 = vld [vmem:[%s4 + $0xd4] sm:$0xf]
        %v839 = vld [vmem:[%s4 + $0xd8] sm:$0xf]
        %v840 = vld [vmem:[%s4 + $0xdc] sm:$0xf]
        %v841 = vld [vmem:[%s4 + $0xe0] sm:$0xf]
        %v842 = vld [vmem:[%s4 + $0xe4] sm:$0xf]
        %v843 = vld [vmem:[%s4 + $0xe8] sm:$0xf]
        %v844 = vld [vmem:[%s4 + $0xec] sm:$0xf]
        %v845 = vld [vmem:[%s4 + $0xf0] sm:$0xf]
        %v846 = vld [vmem:[%s4 + $0xf4] sm:$0xf]
        %v847 = vld [vmem:[%s4 + $0xf8] sm:$0xf]
        %v848 = vld [vmem:[%s4 + $0xfc] sm:$0xf]
        %v851 = vunpack.c.l.b16 %v349
        %v852 = vunpack.c.l.b16 %v350
        %v853 = vpack.c.b16 %v852, %v851
        %v871 = vunpack.c.l.b16 %v785
        %v872 = vunpack.c.l.b16 %v786
        %v873 = vunpack.c.l.b16 %v787
        %v874 = vunpack.c.l.b16 %v788
        %v875 = vunpack.c.l.b16 %v789
        %v876 = vunpack.c.l.b16 %v790
        %v877 = vunpack.c.l.b16 %v791
        %v878 = vunpack.c.l.b16 %v792
        %v879 = vunpack.c.l.b16 %v793
        %v880 = vunpack.c.l.b16 %v794
        %v881 = vunpack.c.l.b16 %v795
        %v882 = vunpack.c.l.b16 %v796
        %v883 = vunpack.c.l.b16 %v797
        %v884 = vunpack.c.l.b16 %v798
        %v885 = vunpack.c.l.b16 %v799
        %v886 = vunpack.c.l.b16 %v800
        %v887 = vpack.c.b16 %v872, %v871
        %v888 = vpack.c.b16 %v874, %v873
        %v889 = vpack.c.b16 %v876, %v875
        %v890 = vpack.c.b16 %v878, %v877
        %v891 = vpack.c.b16 %v880, %v879
        %v892 = vpack.c.b16 %v882, %v881
        %v893 = vpack.c.b16 %v884, %v883
        %v894 = vpack.c.b16 %v886, %v885
        %903 = vmatprep.subr.bf16.mxu0 0
        %904 = vmatpush1.bf16.msra.mxu0 %v887
        %905 = vmatprep.subr.bf16.mxu0 0
        %906 = vmatpush1.bf16.msra.mxu0 %v888
        %907 = vmatprep.subr.bf16.mxu0 0
        %908 = vmatpush1.bf16.msra.mxu0 %v889
        %909 = vmatprep.subr.bf16.mxu0 0
        %910 = vmatpush1.bf16.msra.mxu0 %v890
        %911 = vmatprep.subr.bf16.mxu0 0
        %912 = vmatpush1.bf16.msra.mxu0 %v891
        %913 = vmatprep.subr.bf16.mxu0 0
        %914 = vmatpush1.bf16.msra.mxu0 %v892
        %915 = vmatprep.subr.bf16.mxu0 0
        %916 = vmatpush1.bf16.msra.mxu0 %v893
        %917 = vmatprep.subr.bf16.mxu0 0
        %918 = vmatpush1.bf16.msra.mxu0 %v894
        %919 = vmatprep.subr.bf16.mxu0 0
        %920 = vmatpush1.bf16.msra.mxu0 0
        %921 = vmatprep.subr.bf16.mxu0 0
        %922 = vmatpush1.bf16.msra.mxu0 0
        %923 = vmatprep.subr.bf16.mxu0 0
        %924 = vmatpush1.bf16.msra.mxu0 0
        %925 = vmatprep.subr.bf16.mxu0 0
        %926 = vmatpush1.bf16.msra.mxu0 0
        %927 = vmatprep.subr.bf16.mxu0 0
        %928 = vmatpush1.bf16.msra.mxu0 0
        %929 = vmatprep.subr.bf16.mxu0 0
        %930 = vmatpush1.bf16.msra.mxu0 0
        %931 = vmatprep.subr.bf16.mxu0 0
        %932 = vmatpush1.bf16.msra.mxu0 0
        %933 = vmatprep.subr.bf16.mxu0 0
        %934 = vmatpush1.bf16.msra.mxu0 0
        %935 = vmatprep.mubr.bf16.mxu0 0
        %936 = vmatmul.mubr.bf16.gmra.mrb[0].mxu0 %v853
        %v937 = vpop.f32.mrb[0].mxu0
        %v938 = vadd.f32 0.0, %v937
        %v939 = vpop.f32.mrb[0].mxu0
        %v940 = vpop.f32.mrb[0].mxu0
        %v941 = vadd.f32 0.0, %v940
        %v942 = vpop.f32.mrb[0].mxu0
        %943 = vdwg.mxu0
        %v960 = vunpack.c.l.b16 %v801
        %v961 = vunpack.c.l.b16 %v802
        %v962 = vunpack.c.l.b16 %v803
        %v963 = vunpack.c.l.b16 %v804
        %v964 = vunpack.c.l.b16 %v805
        %v965 = vunpack.c.l.b16 %v806
        %v966 = vunpack.c.l.b16 %v807
        %v967 = vunpack.c.l.b16 %v808
        %v968 = vunpack.c.l.b16 %v809
        %v969 = vunpack.c.l.b16 %v810
        %v970 = vunpack.c.l.b16 %v811
        %v971 = vunpack.c.l.b16 %v812
        %v972 = vunpack.c.l.b16 %v813
        %v973 = vunpack.c.l.b16 %v814
        %v974 = vunpack.c.l.b16 %v815
        %v975 = vunpack.c.l.b16 %v816
        %v976 = vpack.c.b16 %v961, %v960
        %v977 = vpack.c.b16 %v963, %v962
        %v978 = vpack.c.b16 %v965, %v964
        %v979 = vpack.c.b16 %v967, %v966
        %v980 = vpack.c.b16 %v969, %v968
        %v981 = vpack.c.b16 %v971, %v970
        %v982 = vpack.c.b16 %v973, %v972
        %v983 = vpack.c.b16 %v975, %v974
        %992 = vmatprep.subr.bf16.mxu0 0
        %993 = vmatpush1.bf16.msra.mxu0 %v976
        %994 = vmatprep.subr.bf16.mxu0 0
        %995 = vmatpush1.bf16.msra.mxu0 %v977
        %996 = vmatprep.subr.bf16.mxu0 0
        %997 = vmatpush1.bf16.msra.mxu0 %v978
        %998 = vmatprep.subr.bf16.mxu0 0
        %999 = vmatpush1.bf16.msra.mxu0 %v979
        %1000 = vmatprep.subr.bf16.mxu0 0
        %1001 = vmatpush1.bf16.msra.mxu0 %v980
        %1002 = vmatprep.subr.bf16.mxu0 0
        %1003 = vmatpush1.bf16.msra.mxu0 %v981
        %1004 = vmatprep.subr.bf16.mxu0 0
        %1005 = vmatpush1.bf16.msra.mxu0 %v982
        %1006 = vmatprep.subr.bf16.mxu0 0
        %1007 = vmatpush1.bf16.msra.mxu0 %v983
        %1008 = vmatprep.subr.bf16.mxu0 0
        %1009 = vmatpush1.bf16.msra.mxu0 0
        %1010 = vmatprep.subr.bf16.mxu0 0
        %1011 = vmatpush1.bf16.msra.mxu0 0
        %1012 = vmatprep.subr.bf16.mxu0 0
        %1013 = vmatpush1.bf16.msra.mxu0 0
        %1014 = vmatprep.subr.bf16.mxu0 0
        %1015 = vmatpush1.bf16.msra.mxu0 0
        %1016 = vmatprep.subr.bf16.mxu0 0
        %1017 = vmatpush1.bf16.msra.mxu0 0
        %1018 = vmatprep.subr.bf16.mxu0 0
        %1019 = vmatpush1.bf16.msra.mxu0 0
        %1020 = vmatprep.subr.bf16.mxu0 0
        %1021 = vmatpush1.bf16.msra.mxu0 0
        %1022 = vmatprep.subr.bf16.mxu0 0
        %1023 = vmatpush1.bf16.msra.mxu0 0
        %1024 = vmatprep.mubr.bf16.mxu0 0
        %1025 = vmatmul.mubr.bf16.gmra.mrb[0].mxu0 %v853
        %v1026 = vpop.f32.mrb[0].mxu0
        %v1027 = vadd.f32 0.0, %v1026
        %v1028 = vpop.f32.mrb[0].mxu0
        %v1029 = vpop.f32.mrb[0].mxu0
        %v1030 = vadd.f32 0.0, %v1029
        %v1031 = vpop.f32.mrb[0].mxu0
        %1032 = vdwg.mxu0
        %v1049 = vunpack.c.l.b16 %v817
        %v1050 = vunpack.c.l.b16 %v818
        %v1051 = vunpack.c.l.b16 %v819
        %v1052 = vunpack.c.l.b16 %v820
        %v1053 = vunpack.c.l.b16 %v821
        %v1054 = vunpack.c.l.b16 %v822
        %v1055 = vunpack.c.l.b16 %v823
        %v1056 = vunpack.c.l.b16 %v824
        %v1057 = vunpack.c.l.b16 %v825
        %v1058 = vunpack.c.l.b16 %v826
        %v1059 = vunpack.c.l.b16 %v827
        %v1060 = vunpack.c.l.b16 %v828
        %v1061 = vunpack.c.l.b16 %v829
        %v1062 = vunpack.c.l.b16 %v830
        %v1063 = vunpack.c.l.b16 %v831
        %v1064 = vunpack.c.l.b16 %v832
        %v1065 = vpack.c.b16 %v1050, %v1049
        %v1066 = vpack.c.b16 %v1052, %v1051
        %v1067 = vpack.c.b16 %v1054, %v1053
        %v1068 = vpack.c.b16 %v1056, %v1055
        %v1069 = vpack.c.b16 %v1058, %v1057
        %v1070 = vpack.c.b16 %v1060, %v1059
        %v1071 = vpack.c.b16 %v1062, %v1061
        %v1072 = vpack.c.b16 %v1064, %v1063
        %1081 = vmatprep.subr.bf16.mxu0 0
        %1082 = vmatpush1.bf16.msra.mxu0 %v1065
        %1083 = vmatprep.subr.bf16.mxu0 0
        %1084 = vmatpush1.bf16.msra.mxu0 %v1066
        %1085 = vmatprep.subr.bf16.mxu0 0
        %1086 = vmatpush1.bf16.msra.mxu0 %v1067
        %1087 = vmatprep.subr.bf16.mxu0 0
        %1088 = vmatpush1.bf16.msra.mxu0 %v1068
        %1089 = vmatprep.subr.bf16.mxu0 0
        %1090 = vmatpush1.bf16.msra.mxu0 %v1069
        %1091 = vmatprep.subr.bf16.mxu0 0
        %1092 = vmatpush1.bf16.msra.mxu0 %v1070
        %1093 = vmatprep.subr.bf16.mxu0 0
        %1094 = vmatpush1.bf16.msra.mxu0 %v1071
        %1095 = vmatprep.subr.bf16.mxu0 0
        %1096 = vmatpush1.bf16.msra.mxu0 %v1072
        %1097 = vmatprep.subr.bf16.mxu0 0
        %1098 = vmatpush1.bf16.msra.mxu0 0
        %1099 = vmatprep.subr.bf16.mxu0 0
        %1100 = vmatpush1.bf16.msra.mxu0 0
        %1101 = vmatprep.subr.bf16.mxu0 0
        %1102 = vmatpush1.bf16.msra.mxu0 0
        %1103 = vmatprep.subr.bf16.mxu0 0
        %1104 = vmatpush1.bf16.msra.mxu0 0
        %1105 = vmatprep.subr.bf16.mxu0 0
        %1106 = vmatpush1.bf16.msra.mxu0 0
        %1107 = vmatprep.subr.bf16.mxu0 0
        %1108 = vmatpush1.bf16.msra.mxu0 0
        %1109 = vmatprep.subr.bf16.mxu0 0
        %1110 = vmatpush1.bf16.msra.mxu0 0
        %1111 = vmatprep.subr.bf16.mxu0 0
        %1112 = vmatpush1.bf16.msra.mxu0 0
        %1113 = vmatprep.mubr.bf16.mxu0 0
        %1114 = vmatmul.mubr.bf16.gmra.mrb[0].mxu0 %v853
        %v1115 = vpop.f32.mrb[0].mxu0
        %v1116 = vadd.f32 0.0, %v1115
        %v1117 = vpop.f32.mrb[0].mxu0
        %v1118 = vpop.f32.mrb[0].mxu0
        %v1119 = vadd.f32 0.0, %v1118
        %v1120 = vpop.f32.mrb[0].mxu0
        %1121 = vdwg.mxu0
        %v1138 = vunpack.c.l.b16 %v833
        %v1139 = vunpack.c.l.b16 %v834
        %v1140 = vunpack.c.l.b16 %v835
        %v1141 = vunpack.c.l.b16 %v836
        %v1142 = vunpack.c.l.b16 %v837
        %v1143 = vunpack.c.l.b16 %v838
        %v1144 = vunpack.c.l.b16 %v839
        %v1145 = vunpack.c.l.b16 %v840
        %v1146 = vunpack.c.l.b16 %v841
        %v1147 = vunpack.c.l.b16 %v842
        %v1148 = vunpack.c.l.b16 %v843
        %v1149 = vunpack.c.l.b16 %v844
        %v1150 = vunpack.c.l.b16 %v845
        %v1151 = vunpack.c.l.b16 %v846
        %v1152 = vunpack.c.l.b16 %v847
        %v1153 = vunpack.c.l.b16 %v848
        %v1154 = vpack.c.b16 %v1139, %v1138
        %v1155 = vpack.c.b16 %v1141, %v1140
        %v1156 = vpack.c.b16 %v1143, %v1142
        %v1157 = vpack.c.b16 %v1145, %v1144
        %v1158 = vpack.c.b16 %v1147, %v1146
        %v1159 = vpack.c.b16 %v1149, %v1148
        %v1160 = vpack.c.b16 %v1151, %v1150
        %v1161 = vpack.c.b16 %v1153, %v1152
        %1170 = vmatprep.subr.bf16.mxu0 0
        %1171 = vmatpush1.bf16.msra.mxu0 %v1154
        %1172 = vmatprep.subr.bf16.mxu0 0
        %1173 = vmatpush1.bf16.msra.mxu0 %v1155
        %1174 = vmatprep.subr.bf16.mxu0 0
        %1175 = vmatpush1.bf16.msra.mxu0 %v1156
        %1176 = vmatprep.subr.bf16.mxu0 0
        %1177 = vmatpush1.bf16.msra.mxu0 %v1157
        %1178 = vmatprep.subr.bf16.mxu0 0
        %1179 = vmatpush1.bf16.msra.mxu0 %v1158
        %1180 = vmatprep.subr.bf16.mxu0 0
        %1181 = vmatpush1.bf16.msra.mxu0 %v1159
        %1182 = vmatprep.subr.bf16.mxu0 0
        %1183 = vmatpush1.bf16.msra.mxu0 %v1160
        %1184 = vmatprep.subr.bf16.mxu0 0
        %1185 = vmatpush1.bf16.msra.mxu0 %v1161
        %1186 = vmatprep.subr.bf16.mxu0 0
        %1187 = vmatpush1.bf16.msra.mxu0 0
        %1188 = vmatprep.subr.bf16.mxu0 0
        %1189 = vmatpush1.bf16.msra.mxu0 0
        %1190 = vmatprep.subr.bf16.mxu0 0
        %1191 = vmatpush1.bf16.msra.mxu0 0
        %1192 = vmatprep.subr.bf16.mxu0 0
        %1193 = vmatpush1.bf16.msra.mxu0 0
        %1194 = vmatprep.subr.bf16.mxu0 0
        %1195 = vmatpush1.bf16.msra.mxu0 0
        %1196 = vmatprep.subr.bf16.mxu0 0
        %1197 = vmatpush1.bf16.msra.mxu0 0
        %1198 = vmatprep.subr.bf16.mxu0 0
        %1199 = vmatpush1.bf16.msra.mxu0 0
        %1200 = vmatprep.subr.bf16.mxu0 0
        %1201 = vmatpush1.bf16.msra.mxu0 0
        %1202 = vmatprep.mubr.bf16.mxu0 0
        %1203 = vmatmul.mubr.bf16.gmra.mrb[0].mxu0 %v853
        %v1204 = vpop.f32.mrb[0].mxu0
        %v1205 = vadd.f32 0.0, %v1204
        %v1206 = vpop.f32.mrb[0].mxu0
        %v1207 = vpop.f32.mrb[0].mxu0
        %v1208 = vadd.f32 0.0, %v1207
        %v1209 = vpop.f32.mrb[0].mxu0
        %1210 = vdwg.mxu0
        %v1211 = vpack.c.bf16 %v941, %v938
        %v1212 = vpack.c.bf16 %v1030, %v1027
        %v1213 = vpack.c.bf16 %v1119, %v1116
        %v1214 = vpack.c.bf16 %v1208, %v1205
        %v1215 = vld [vmem:[%s5] sm:$0xf]
        %v1216 = vld [vmem:[%s5 + $0x4] sm:$0xf]
        %v1217 = vld [vmem:[%s5 + $0x8] sm:$0xf]
        %v1218 = vld [vmem:[%s5 + $0xc] sm:$0xf]
        %v1219 = vld [vmem:[%s5 + $0x10] sm:$0xf]
        %v1220 = vld [vmem:[%s5 + $0x14] sm:$0xf]
        %v1221 = vld [vmem:[%s5 + $0x18] sm:$0xf]
        %v1222 = vld [vmem:[%s5 + $0x1c] sm:$0xf]
        %v1223 = vld [vmem:[%s5 + $0x20] sm:$0xf]
        %v1224 = vld [vmem:[%s5 + $0x24] sm:$0xf]
        %v1225 = vld [vmem:[%s5 + $0x28] sm:$0xf]
        %v1226 = vld [vmem:[%s5 + $0x2c] sm:$0xf]
        %v1227 = vld [vmem:[%s5 + $0x30] sm:$0xf]
        %v1228 = vld [vmem:[%s5 + $0x34] sm:$0xf]
        %v1229 = vld [vmem:[%s5 + $0x38] sm:$0xf]
        %v1230 = vld [vmem:[%s5 + $0x3c] sm:$0xf]
        %v1231 = vld [vmem:[%s5 + $0x40] sm:$0xf]
        %v1232 = vld [vmem:[%s5 + $0x44] sm:$0xf]
        %v1233 = vld [vmem:[%s5 + $0x48] sm:$0xf]
        %v1234 = vld [vmem:[%s5 + $0x4c] sm:$0xf]
        %v1235 = vld [vmem:[%s5 + $0x50] sm:$0xf]
        %v1236 = vld [vmem:[%s5 + $0x54] sm:$0xf]
        %v1237 = vld [vmem:[%s5 + $0x58] sm:$0xf]
        %v1238 = vld [vmem:[%s5 + $0x5c] sm:$0xf]
        %v1239 = vld [vmem:[%s5 + $0x60] sm:$0xf]
        %v1240 = vld [vmem:[%s5 + $0x64] sm:$0xf]
        %v1241 = vld [vmem:[%s5 + $0x68] sm:$0xf]
        %v1242 = vld [vmem:[%s5 + $0x6c] sm:$0xf]
        %v1243 = vld [vmem:[%s5 + $0x70] sm:$0xf]
        %v1244 = vld [vmem:[%s5 + $0x74] sm:$0xf]
        %v1245 = vld [vmem:[%s5 + $0x78] sm:$0xf]
        %v1246 = vld [vmem:[%s5 + $0x7c] sm:$0xf]
        %v1247 = vld [vmem:[%s5 + $0x80] sm:$0xf]
        %v1248 = vld [vmem:[%s5 + $0x84] sm:$0xf]
        %v1249 = vld [vmem:[%s5 + $0x88] sm:$0xf]
        %v1250 = vld [vmem:[%s5 + $0x8c] sm:$0xf]
        %v1251 = vld [vmem:[%s5 + $0x90] sm:$0xf]
        %v1252 = vld [vmem:[%s5 + $0x94] sm:$0xf]
        %v1253 = vld [vmem:[%s5 + $0x98] sm:$0xf]
        %v1254 = vld [vmem:[%s5 + $0x9c] sm:$0xf]
        %v1255 = vld [vmem:[%s5 + $0xa0] sm:$0xf]
        %v1256 = vld [vmem:[%s5 + $0xa4] sm:$0xf]
        %v1257 = vld [vmem:[%s5 + $0xa8] sm:$0xf]
        %v1258 = vld [vmem:[%s5 + $0xac] sm:$0xf]
        %v1259 = vld [vmem:[%s5 + $0xb0] sm:$0xf]
        %v1260 = vld [vmem:[%s5 + $0xb4] sm:$0xf]
        %v1261 = vld [vmem:[%s5 + $0xb8] sm:$0xf]
        %v1262 = vld [vmem:[%s5 + $0xbc] sm:$0xf]
        %v1263 = vld [vmem:[%s5 + $0xc0] sm:$0xf]
        %v1264 = vld [vmem:[%s5 + $0xc4] sm:$0xf]
        %v1265 = vld [vmem:[%s5 + $0xc8] sm:$0xf]
        %v1266 = vld [vmem:[%s5 + $0xcc] sm:$0xf]
        %v1267 = vld [vmem:[%s5 + $0xd0] sm:$0xf]
        %v1268 = vld [vmem:[%s5 + $0xd4] sm:$0xf]
        %v1269 = vld [vmem:[%s5 + $0xd8] sm:$0xf]
        %v1270 = vld [vmem:[%s5 + $0xdc] sm:$0xf]
        %v1271 = vld [vmem:[%s5 + $0xe0] sm:$0xf]
        %v1272 = vld [vmem:[%s5 + $0xe4] sm:$0xf]
        %v1273 = vld [vmem:[%s5 + $0xe8] sm:$0xf]
        %v1274 = vld [vmem:[%s5 + $0xec] sm:$0xf]
        %v1275 = vld [vmem:[%s5 + $0xf0] sm:$0xf]
        %v1276 = vld [vmem:[%s5 + $0xf4] sm:$0xf]
        %v1277 = vld [vmem:[%s5 + $0xf8] sm:$0xf]
        %v1278 = vld [vmem:[%s5 + $0xfc] sm:$0xf]
        %v1281 = vunpack.c.l.b16 %v353
        %v1282 = vunpack.c.l.b16 %v354
        %v1283 = vpack.c.b16 %v1282, %v1281
        %v1301 = vunpack.c.l.b16 %v1215
        %v1302 = vunpack.c.l.b16 %v1216
        %v1303 = vunpack.c.l.b16 %v1217
        %v1304 = vunpack.c.l.b16 %v1218
        %v1305 = vunpack.c.l.b16 %v1219
        %v1306 = vunpack.c.l.b16 %v1220
        %v1307 = vunpack.c.l.b16 %v1221
        %v1308 = vunpack.c.l.b16 %v1222
        %v1309 = vunpack.c.l.b16 %v1223
        %v1310 = vunpack.c.l.b16 %v1224
        %v1311 = vunpack.c.l.b16 %v1225
        %v1312 = vunpack.c.l.b16 %v1226
        %v1313 = vunpack.c.l.b16 %v1227
        %v1314 = vunpack.c.l.b16 %v1228
        %v1315 = vunpack.c.l.b16 %v1229
        %v1316 = vunpack.c.l.b16 %v1230
        %v1317 = vpack.c.b16 %v1302, %v1301
        %v1318 = vpack.c.b16 %v1304, %v1303
        %v1319 = vpack.c.b16 %v1306, %v1305
        %v1320 = vpack.c.b16 %v1308, %v1307
        %v1321 = vpack.c.b16 %v1310, %v1309
        %v1322 = vpack.c.b16 %v1312, %v1311
        %v1323 = vpack.c.b16 %v1314, %v1313
        %v1324 = vpack.c.b16 %v1316, %v1315
        %1333 = vmatprep.subr.bf16.mxu0 0
        %1334 = vmatpush1.bf16.msra.mxu0 %v1317
        %1335 = vmatprep.subr.bf16.mxu0 0
        %1336 = vmatpush1.bf16.msra.mxu0 %v1318
        %1337 = vmatprep.subr.bf16.mxu0 0
        %1338 = vmatpush1.bf16.msra.mxu0 %v1319
        %1339 = vmatprep.subr.bf16.mxu0 0
        %1340 = vmatpush1.bf16.msra.mxu0 %v1320
        %1341 = vmatprep.subr.bf16.mxu0 0
        %1342 = vmatpush1.bf16.msra.mxu0 %v1321
        %1343 = vmatprep.subr.bf16.mxu0 0
        %1344 = vmatpush1.bf16.msra.mxu0 %v1322
        %1345 = vmatprep.subr.bf16.mxu0 0
        %1346 = vmatpush1.bf16.msra.mxu0 %v1323
        %1347 = vmatprep.subr.bf16.mxu0 0
        %1348 = vmatpush1.bf16.msra.mxu0 %v1324
        %1349 = vmatprep.subr.bf16.mxu0 0
        %1350 = vmatpush1.bf16.msra.mxu0 0
        %1351 = vmatprep.subr.bf16.mxu0 0
        %1352 = vmatpush1.bf16.msra.mxu0 0
        %1353 = vmatprep.subr.bf16.mxu0 0
        %1354 = vmatpush1.bf16.msra.mxu0 0
        %1355 = vmatprep.subr.bf16.mxu0 0
        %1356 = vmatpush1.bf16.msra.mxu0 0
        %1357 = vmatprep.subr.bf16.mxu0 0
        %1358 = vmatpush1.bf16.msra.mxu0 0
        %1359 = vmatprep.subr.bf16.mxu0 0
        %1360 = vmatpush1.bf16.msra.mxu0 0
        %1361 = vmatprep.subr.bf16.mxu0 0
        %1362 = vmatpush1.bf16.msra.mxu0 0
        %1363 = vmatprep.subr.bf16.mxu0 0
        %1364 = vmatpush1.bf16.msra.mxu0 0
        %1365 = vmatprep.mubr.bf16.mxu0 0
        %1366 = vmatmul.mubr.bf16.gmra.mrb[0].mxu0 %v1283
        %v1367 = vpop.f32.mrb[0].mxu0
        %v1368 = vadd.f32 0.0, %v1367
        %v1369 = vpop.f32.mrb[0].mxu0
        %v1370 = vpop.f32.mrb[0].mxu0
        %v1371 = vadd.f32 0.0, %v1370
        %v1372 = vpop.f32.mrb[0].mxu0
        %1373 = vdwg.mxu0
        %v1390 = vunpack.c.l.b16 %v1231
        %v1391 = vunpack.c.l.b16 %v1232
        %v1392 = vunpack.c.l.b16 %v1233
        %v1393 = vunpack.c.l.b16 %v1234
        %v1394 = vunpack.c.l.b16 %v1235
        %v1395 = vunpack.c.l.b16 %v1236
        %v1396 = vunpack.c.l.b16 %v1237
        %v1397 = vunpack.c.l.b16 %v1238
        %v1398 = vunpack.c.l.b16 %v1239
        %v1399 = vunpack.c.l.b16 %v1240
        %v1400 = vunpack.c.l.b16 %v1241
        %v1401 = vunpack.c.l.b16 %v1242
        %v1402 = vunpack.c.l.b16 %v1243
        %v1403 = vunpack.c.l.b16 %v1244
        %v1404 = vunpack.c.l.b16 %v1245
        %v1405 = vunpack.c.l.b16 %v1246
        %v1406 = vpack.c.b16 %v1391, %v1390
        %v1407 = vpack.c.b16 %v1393, %v1392
        %v1408 = vpack.c.b16 %v1395, %v1394
        %v1409 = vpack.c.b16 %v1397, %v1396
        %v1410 = vpack.c.b16 %v1399, %v1398
        %v1411 = vpack.c.b16 %v1401, %v1400
        %v1412 = vpack.c.b16 %v1403, %v1402
        %v1413 = vpack.c.b16 %v1405, %v1404
        %1422 = vmatprep.subr.bf16.mxu0 0
        %1423 = vmatpush1.bf16.msra.mxu0 %v1406
        %1424 = vmatprep.subr.bf16.mxu0 0
        %1425 = vmatpush1.bf16.msra.mxu0 %v1407
        %1426 = vmatprep.subr.bf16.mxu0 0
        %1427 = vmatpush1.bf16.msra.mxu0 %v1408
        %1428 = vmatprep.subr.bf16.mxu0 0
        %1429 = vmatpush1.bf16.msra.mxu0 %v1409
        %1430 = vmatprep.subr.bf16.mxu0 0
        %1431 = vmatpush1.bf16.msra.mxu0 %v1410
        %1432 = vmatprep.subr.bf16.mxu0 0
        %1433 = vmatpush1.bf16.msra.mxu0 %v1411
        %1434 = vmatprep.subr.bf16.mxu0 0
        %1435 = vmatpush1.bf16.msra.mxu0 %v1412
        %1436 = vmatprep.subr.bf16.mxu0 0
        %1437 = vmatpush1.bf16.msra.mxu0 %v1413
        %1438 = vmatprep.subr.bf16.mxu0 0
        %1439 = vmatpush1.bf16.msra.mxu0 0
        %1440 = vmatprep.subr.bf16.mxu0 0
        %1441 = vmatpush1.bf16.msra.mxu0 0
        %1442 = vmatprep.subr.bf16.mxu0 0
        %1443 = vmatpush1.bf16.msra.mxu0 0
        %1444 = vmatprep.subr.bf16.mxu0 0
        %1445 = vmatpush1.bf16.msra.mxu0 0
        %1446 = vmatprep.subr.bf16.mxu0 0
        %1447 = vmatpush1.bf16.msra.mxu0 0
        %1448 = vmatprep.subr.bf16.mxu0 0
        %1449 = vmatpush1.bf16.msra.mxu0 0
        %1450 = vmatprep.subr.bf16.mxu0 0
        %1451 = vmatpush1.bf16.msra.mxu0 0
        %1452 = vmatprep.subr.bf16.mxu0 0
        %1453 = vmatpush1.bf16.msra.mxu0 0
        %1454 = vmatprep.mubr.bf16.mxu0 0
        %1455 = vmatmul.mubr.bf16.gmra.mrb[0].mxu0 %v1283
        %v1456 = vpop.f32.mrb[0].mxu0
        %v1457 = vadd.f32 0.0, %v1456
        %v1458 = vpop.f32.mrb[0].mxu0
        %v1459 = vpop.f32.mrb[0].mxu0
        %v1460 = vadd.f32 0.0, %v1459
        %v1461 = vpop.f32.mrb[0].mxu0
        %1462 = vdwg.mxu0
        %v1479 = vunpack.c.l.b16 %v1247
        %v1480 = vunpack.c.l.b16 %v1248
        %v1481 = vunpack.c.l.b16 %v1249
        %v1482 = vunpack.c.l.b16 %v1250
        %v1483 = vunpack.c.l.b16 %v1251
        %v1484 = vunpack.c.l.b16 %v1252
        %v1485 = vunpack.c.l.b16 %v1253
        %v1486 = vunpack.c.l.b16 %v1254
        %v1487 = vunpack.c.l.b16 %v1255
        %v1488 = vunpack.c.l.b16 %v1256
        %v1489 = vunpack.c.l.b16 %v1257
        %v1490 = vunpack.c.l.b16 %v1258
        %v1491 = vunpack.c.l.b16 %v1259
        %v1492 = vunpack.c.l.b16 %v1260
        %v1493 = vunpack.c.l.b16 %v1261
        %v1494 = vunpack.c.l.b16 %v1262
        %v1495 = vpack.c.b16 %v1480, %v1479
        %v1496 = vpack.c.b16 %v1482, %v1481
        %v1497 = vpack.c.b16 %v1484, %v1483
        %v1498 = vpack.c.b16 %v1486, %v1485
        %v1499 = vpack.c.b16 %v1488, %v1487
        %v1500 = vpack.c.b16 %v1490, %v1489
        %v1501 = vpack.c.b16 %v1492, %v1491
        %v1502 = vpack.c.b16 %v1494, %v1493
        %1511 = vmatprep.subr.bf16.mxu0 0
        %1512 = vmatpush1.bf16.msra.mxu0 %v1495
        %1513 = vmatprep.subr.bf16.mxu0 0
        %1514 = vmatpush1.bf16.msra.mxu0 %v1496
        %1515 = vmatprep.subr.bf16.mxu0 0
        %1516 = vmatpush1.bf16.msra.mxu0 %v1497
        %1517 = vmatprep.subr.bf16.mxu0 0
        %1518 = vmatpush1.bf16.msra.mxu0 %v1498
        %1519 = vmatprep.subr.bf16.mxu0 0
        %1520 = vmatpush1.bf16.msra.mxu0 %v1499
        %1521 = vmatprep.subr.bf16.mxu0 0
        %1522 = vmatpush1.bf16.msra.mxu0 %v1500
        %1523 = vmatprep.subr.bf16.mxu0 0
        %1524 = vmatpush1.bf16.msra.mxu0 %v1501
        %1525 = vmatprep.subr.bf16.mxu0 0
        %1526 = vmatpush1.bf16.msra.mxu0 %v1502
        %1527 = vmatprep.subr.bf16.mxu0 0
        %1528 = vmatpush1.bf16.msra.mxu0 0
        %1529 = vmatprep.subr.bf16.mxu0 0
        %1530 = vmatpush1.bf16.msra.mxu0 0
        %1531 = vmatprep.subr.bf16.mxu0 0
        %1532 = vmatpush1.bf16.msra.mxu0 0
        %1533 = vmatprep.subr.bf16.mxu0 0
        %1534 = vmatpush1.bf16.msra.mxu0 0
        %1535 = vmatprep.subr.bf16.mxu0 0
        %1536 = vmatpush1.bf16.msra.mxu0 0
        %1537 = vmatprep.subr.bf16.mxu0 0
        %1538 = vmatpush1.bf16.msra.mxu0 0
        %1539 = vmatprep.subr.bf16.mxu0 0
        %1540 = vmatpush1.bf16.msra.mxu0 0
        %1541 = vmatprep.subr.bf16.mxu0 0
        %1542 = vmatpush1.bf16.msra.mxu0 0
        %1543 = vmatprep.mubr.bf16.mxu0 0
        %1544 = vmatmul.mubr.bf16.gmra.mrb[0].mxu0 %v1283
        %v1545 = vpop.f32.mrb[0].mxu0
        %v1546 = vadd.f32 0.0, %v1545
        %v1547 = vpop.f32.mrb[0].mxu0
        %v1548 = vpop.f32.mrb[0].mxu0
        %v1549 = vadd.f32 0.0, %v1548
        %v1550 = vpop.f32.mrb[0].mxu0
        %1551 = vdwg.mxu0
        %v1568 = vunpack.c.l.b16 %v1263
        %v1569 = vunpack.c.l.b16 %v1264
        %v1570 = vunpack.c.l.b16 %v1265
        %v1571 = vunpack.c.l.b16 %v1266
        %v1572 = vunpack.c.l.b16 %v1267
        %v1573 = vunpack.c.l.b16 %v1268
        %v1574 = vunpack.c.l.b16 %v1269
        %v1575 = vunpack.c.l.b16 %v1270
        %v1576 = vunpack.c.l.b16 %v1271
        %v1577 = vunpack.c.l.b16 %v1272
        %v1578 = vunpack.c.l.b16 %v1273
        %v1579 = vunpack.c.l.b16 %v1274
        %v1580 = vunpack.c.l.b16 %v1275
        %v1581 = vunpack.c.l.b16 %v1276
        %v1582 = vunpack.c.l.b16 %v1277
        %v1583 = vunpack.c.l.b16 %v1278
        %v1584 = vpack.c.b16 %v1569, %v1568
        %v1585 = vpack.c.b16 %v1571, %v1570
        %v1586 = vpack.c.b16 %v1573, %v1572
        %v1587 = vpack.c.b16 %v1575, %v1574
        %v1588 = vpack.c.b16 %v1577, %v1576
        %v1589 = vpack.c.b16 %v1579, %v1578
        %v1590 = vpack.c.b16 %v1581, %v1580
        %v1591 = vpack.c.b16 %v1583, %v1582
        %1600 = vmatprep.subr.bf16.mxu0 0
        %1601 = vmatpush1.bf16.msra.mxu0 %v1584
        %1602 = vmatprep.subr.bf16.mxu0 0
        %1603 = vmatpush1.bf16.msra.mxu0 %v1585
        %1604 = vmatprep.subr.bf16.mxu0 0
        %1605 = vmatpush1.bf16.msra.mxu0 %v1586
        %1606 = vmatprep.subr.bf16.mxu0 0
        %1607 = vmatpush1.bf16.msra.mxu0 %v1587
        %1608 = vmatprep.subr.bf16.mxu0 0
        %1609 = vmatpush1.bf16.msra.mxu0 %v1588
        %1610 = vmatprep.subr.bf16.mxu0 0
        %1611 = vmatpush1.bf16.msra.mxu0 %v1589
        %1612 = vmatprep.subr.bf16.mxu0 0
        %1613 = vmatpush1.bf16.msra.mxu0 %v1590
        %1614 = vmatprep.subr.bf16.mxu0 0
        %1615 = vmatpush1.bf16.msra.mxu0 %v1591
        %1616 = vmatprep.subr.bf16.mxu0 0
        %1617 = vmatpush1.bf16.msra.mxu0 0
        %1618 = vmatprep.subr.bf16.mxu0 0
        %1619 = vmatpush1.bf16.msra.mxu0 0
        %1620 = vmatprep.subr.bf16.mxu0 0
        %1621 = vmatpush1.bf16.msra.mxu0 0
        %1622 = vmatprep.subr.bf16.mxu0 0
        %1623 = vmatpush1.bf16.msra.mxu0 0
        %1624 = vmatprep.subr.bf16.mxu0 0
        %1625 = vmatpush1.bf16.msra.mxu0 0
        %1626 = vmatprep.subr.bf16.mxu0 0
        %1627 = vmatpush1.bf16.msra.mxu0 0
        %1628 = vmatprep.subr.bf16.mxu0 0
        %1629 = vmatpush1.bf16.msra.mxu0 0
        %1630 = vmatprep.subr.bf16.mxu0 0
        %1631 = vmatpush1.bf16.msra.mxu0 0
        %1632 = vmatprep.mubr.bf16.mxu0 0
        %1633 = vmatmul.mubr.bf16.gmra.mrb[0].mxu0 %v1283
        %v1634 = vpop.f32.mrb[0].mxu0
        %v1635 = vadd.f32 0.0, %v1634
        %v1636 = vpop.f32.mrb[0].mxu0
        %v1637 = vpop.f32.mrb[0].mxu0
        %v1638 = vadd.f32 0.0, %v1637
        %v1639 = vpop.f32.mrb[0].mxu0
        %1640 = vdwg.mxu0
        %v1641 = vpack.c.bf16 %v1371, %v1368
        %v1642 = vpack.c.bf16 %v1460, %v1457
        %v1643 = vpack.c.bf16 %v1549, %v1546
        %v1644 = vpack.c.bf16 %v1638, %v1635
        %vm1645 = vcmask 261120
        %v1647 = vsel %vm1645, %v781, 0
        %v1650 = vsel %vm1645, %v1211, 0
        %1652 = vmatprep.subr.bf16.mxu0 0
        %1653 = vmatpush1.bf16.xpose.msra.mxu0 %v1650
        %1654 = vmatprep.subr.bf16.mxu0 0
        %1655 = vmatpush1.bf16.xpose.msra.mxu0 0
        %1656 = vmatprep.subr.bf16.mxu0 0
        %1657 = vmatpush1.bf16.xpose.msra.mxu0 0
        %1658 = vmatprep.subr.bf16.mxu0 0
        %1659 = vmatpush1.bf16.xpose.msra.mxu0 0
        %1660 = vmatprep.subr.bf16.mxu0 0
        %1661 = vmatpush1.bf16.xpose.msra.mxu0 0
        %1662 = vmatprep.subr.bf16.mxu0 0
        %1663 = vmatpush1.bf16.xpose.msra.mxu0 0
        %1664 = vmatprep.subr.bf16.mxu0 0
        %1665 = vmatpush1.bf16.xpose.msra.mxu0 0
        %1666 = vmatprep.subr.bf16.mxu0 0
        %1667 = vmatpush1.bf16.xpose.msra.mxu0 0
        %1668 = vmatprep.subr.bf16.mxu0 0
        %1669 = vmatpush1.bf16.xpose.msra.mxu0 0
        %1670 = vmatprep.subr.bf16.mxu0 0
        %1671 = vmatpush1.bf16.xpose.msra.mxu0 0
        %1672 = vmatprep.subr.bf16.mxu0 0
        %1673 = vmatpush1.bf16.xpose.msra.mxu0 0
        %1674 = vmatprep.subr.bf16.mxu0 0
        %1675 = vmatpush1.bf16.xpose.msra.mxu0 0
        %1676 = vmatprep.subr.bf16.mxu0 0
        %1677 = vmatpush1.bf16.xpose.msra.mxu0 0
        %1678 = vmatprep.subr.bf16.mxu0 0
        %1679 = vmatpush1.bf16.xpose.msra.mxu0 0
        %1680 = vmatprep.subr.bf16.mxu0 0
        %1681 = vmatpush1.bf16.xpose.msra.mxu0 0
        %1682 = vmatprep.subr.bf16.mxu0 0
        %1683 = vmatpush1.bf16.xpose.msra.mxu0 0
        %1684 = vmatprep.mubr.bf16.mxu0 0
        %1685 = vmatmul.mubr.bf16.gmra.mrb[0].mxu0 %v1647
        %v1686 = vpop.f32.mrb[0].mxu0
        %v1687 = vadd.f32 0.0, %v1686
        %v1688 = vpop.f32.mrb[0].mxu0
        %v1689 = vpop.f32.mrb[0].mxu0
        %v1690 = vadd.f32 0.0, %v1689
        %v1691 = vpop.f32.mrb[0].mxu0
        %1692 = vdwg.mxu0
        %v1694 = vsel %vm1645, %v782, 0
        %v1697 = vsel %vm1645, %v1212, 0
        %1699 = vmatprep.subr.bf16.mxu0 0
        %1700 = vmatpush1.bf16.xpose.msra.mxu0 %v1697
        %1701 = vmatprep.subr.bf16.mxu0 0
        %1702 = vmatpush1.bf16.xpose.msra.mxu0 0
        %1703 = vmatprep.subr.bf16.mxu0 0
        %1704 = vmatpush1.bf16.xpose.msra.mxu0 0
        %1705 = vmatprep.subr.bf16.mxu0 0
        %1706 = vmatpush1.bf16.xpose.msra.mxu0 0
        %1707 = vmatprep.subr.bf16.mxu0 0
        %1708 = vmatpush1.bf16.xpose.msra.mxu0 0
        %1709 = vmatprep.subr.bf16.mxu0 0
        %1710 = vmatpush1.bf16.xpose.msra.mxu0 0
        %1711 = vmatprep.subr.bf16.mxu0 0
        %1712 = vmatpush1.bf16.xpose.msra.mxu0 0
        %1713 = vmatprep.subr.bf16.mxu0 0
        %1714 = vmatpush1.bf16.xpose.msra.mxu0 0
        %1715 = vmatprep.subr.bf16.mxu0 0
        %1716 = vmatpush1.bf16.xpose.msra.mxu0 0
        %1717 = vmatprep.subr.bf16.mxu0 0
        %1718 = vmatpush1.bf16.xpose.msra.mxu0 0
        %1719 = vmatprep.subr.bf16.mxu0 0
        %1720 = vmatpush1.bf16.xpose.msra.mxu0 0
        %1721 = vmatprep.subr.bf16.mxu0 0
        %1722 = vmatpush1.bf16.xpose.msra.mxu0 0
        %1723 = vmatprep.subr.bf16.mxu0 0
        %1724 = vmatpush1.bf16.xpose.msra.mxu0 0
        %1725 = vmatprep.subr.bf16.mxu0 0
        %1726 = vmatpush1.bf16.xpose.msra.mxu0 0
        %1727 = vmatprep.subr.bf16.mxu0 0
        %1728 = vmatpush1.bf16.xpose.msra.mxu0 0
        %1729 = vmatprep.subr.bf16.mxu0 0
        %1730 = vmatpush1.bf16.xpose.msra.mxu0 0
        %1731 = vmatprep.mubr.bf16.mxu0 0
        %1732 = vmatmul.mubr.bf16.gmra.mrb[0].mxu0 %v1694
        %v1733 = vpop.f32.mrb[0].mxu0
        %v1734 = vadd.f32 0.0, %v1733
        %v1735 = vpop.f32.mrb[0].mxu0
        %v1736 = vpop.f32.mrb[0].mxu0
        %v1737 = vadd.f32 0.0, %v1736
        %v1738 = vpop.f32.mrb[0].mxu0
        %1739 = vdwg.mxu0
        %v1741 = vsel %vm1645, %v783, 0
        %v1744 = vsel %vm1645, %v1213, 0
        %1746 = vmatprep.subr.bf16.mxu0 0
        %1747 = vmatpush1.bf16.xpose.msra.mxu0 %v1744
        %1748 = vmatprep.subr.bf16.mxu0 0
        %1749 = vmatpush1.bf16.xpose.msra.mxu0 0
        %1750 = vmatprep.subr.bf16.mxu0 0
        %1751 = vmatpush1.bf16.xpose.msra.mxu0 0
        %1752 = vmatprep.subr.bf16.mxu0 0
        %1753 = vmatpush1.bf16.xpose.msra.mxu0 0
        %1754 = vmatprep.subr.bf16.mxu0 0
        %1755 = vmatpush1.bf16.xpose.msra.mxu0 0
        %1756 = vmatprep.subr.bf16.mxu0 0
        %1757 = vmatpush1.bf16.xpose.msra.mxu0 0
        %1758 = vmatprep.subr.bf16.mxu0 0
        %1759 = vmatpush1.bf16.xpose.msra.mxu0 0
        %1760 = vmatprep.subr.bf16.mxu0 0
        %1761 = vmatpush1.bf16.xpose.msra.mxu0 0
        %1762 = vmatprep.subr.bf16.mxu0 0
        %1763 = vmatpush1.bf16.xpose.msra.mxu0 0
        %1764 = vmatprep.subr.bf16.mxu0 0
        %1765 = vmatpush1.bf16.xpose.msra.mxu0 0
        %1766 = vmatprep.subr.bf16.mxu0 0
        %1767 = vmatpush1.bf16.xpose.msra.mxu0 0
        %1768 = vmatprep.subr.bf16.mxu0 0
        %1769 = vmatpush1.bf16.xpose.msra.mxu0 0
        %1770 = vmatprep.subr.bf16.mxu0 0
        %1771 = vmatpush1.bf16.xpose.msra.mxu0 0
        %1772 = vmatprep.subr.bf16.mxu0 0
        %1773 = vmatpush1.bf16.xpose.msra.mxu0 0
        %1774 = vmatprep.subr.bf16.mxu0 0
        %1775 = vmatpush1.bf16.xpose.msra.mxu0 0
        %1776 = vmatprep.subr.bf16.mxu0 0
        %1777 = vmatpush1.bf16.xpose.msra.mxu0 0
        %1778 = vmatprep.mubr.bf16.mxu0 0
        %1779 = vmatmul.mubr.bf16.gmra.mrb[0].mxu0 %v1741
        %v1780 = vpop.f32.mrb[0].mxu0
        %v1781 = vadd.f32 0.0, %v1780
        %v1782 = vpop.f32.mrb[0].mxu0
        %v1783 = vpop.f32.mrb[0].mxu0
        %v1784 = vadd.f32 0.0, %v1783
        %v1785 = vpop.f32.mrb[0].mxu0
        %1786 = vdwg.mxu0
        %v1788 = vsel %vm1645, %v784, 0
        %v1791 = vsel %vm1645, %v1214, 0
        %1793 = vmatprep.subr.bf16.mxu0 0
        %1794 = vmatpush1.bf16.xpose.msra.mxu0 %v1791
        %1795 = vmatprep.subr.bf16.mxu0 0
        %1796 = vmatpush1.bf16.xpose.msra.mxu0 0
        %1797 = vmatprep.subr.bf16.mxu0 0
        %1798 = vmatpush1.bf16.xpose.msra.mxu0 0
        %1799 = vmatprep.subr.bf16.mxu0 0
        %1800 = vmatpush1.bf16.xpose.msra.mxu0 0
        %1801 = vmatprep.subr.bf16.mxu0 0
        %1802 = vmatpush1.bf16.xpose.msra.mxu0 0
        %1803 = vmatprep.subr.bf16.mxu0 0
        %1804 = vmatpush1.bf16.xpose.msra.mxu0 0
        %1805 = vmatprep.subr.bf16.mxu0 0
        %1806 = vmatpush1.bf16.xpose.msra.mxu0 0
        %1807 = vmatprep.subr.bf16.mxu0 0
        %1808 = vmatpush1.bf16.xpose.msra.mxu0 0
        %1809 = vmatprep.subr.bf16.mxu0 0
        %1810 = vmatpush1.bf16.xpose.msra.mxu0 0
        %1811 = vmatprep.subr.bf16.mxu0 0
        %1812 = vmatpush1.bf16.xpose.msra.mxu0 0
        %1813 = vmatprep.subr.bf16.mxu0 0
        %1814 = vmatpush1.bf16.xpose.msra.mxu0 0
        %1815 = vmatprep.subr.bf16.mxu0 0
        %1816 = vmatpush1.bf16.xpose.msra.mxu0 0
        %1817 = vmatprep.subr.bf16.mxu0 0
        %1818 = vmatpush1.bf16.xpose.msra.mxu0 0
        %1819 = vmatprep.subr.bf16.mxu0 0
        %1820 = vmatpush1.bf16.xpose.msra.mxu0 0
        %1821 = vmatprep.subr.bf16.mxu0 0
        %1822 = vmatpush1.bf16.xpose.msra.mxu0 0
        %1823 = vmatprep.subr.bf16.mxu0 0
        %1824 = vmatpush1.bf16.xpose.msra.mxu0 0
        %1825 = vmatprep.mubr.bf16.mxu0 0
        %1826 = vmatmul.mubr.bf16.gmra.mrb[0].mxu0 %v1788
        %v1827 = vpop.f32.mrb[0].mxu0
        %v1828 = vadd.f32 0.0, %v1827
        %v1829 = vpop.f32.mrb[0].mxu0
        %v1830 = vpop.f32.mrb[0].mxu0
        %v1831 = vadd.f32 0.0, %v1830
        %v1832 = vpop.f32.mrb[0].mxu0
        %1833 = vdwg.mxu0
        %s1834 = smul.u32 %s26, 16
        %v1835 = vlaneseq
        %v1836 = vshrl.u32 %v1835, 7
        %v1837 = vadd.s32 %v1836, 8
        %v1838 = vstv %s1834
        %v1839 = vadd.s32 %v1836, %v1838
        %v1840 = vadd.s32 %v1837, %v1838
        %v1841 = vlaneseq
        %v1842 = vand.u32 %v1841, 127
        %vm1843 = vcmp.le.s32.totalorder %v1842, %v1839
        %vm1844 = vcmp.le.s32.totalorder %v1842, %v1840
        %v1845 = vsel %vm1843, 1, 0
        %v1846 = vsel %vm1844, 1, 0
        %vm1847 = vcmp.eq.s32.totalorder %v1845, 1
        %vm1848 = vcmp.eq.s32.totalorder %v1846, 1
        %v1849 = vsel %vm1847, %v1687, -inf
        %v1850 = vsel %vm1848, %v1690, -inf
        %v1851 = vsel %vm1847, %v1734, -inf
        %v1852 = vsel %vm1848, %v1737, -inf
        %v1853 = vsel %vm1847, %v1781, -inf
        %v1854 = vsel %vm1848, %v1784, -inf
        %v1855 = vsel %vm1847, %v1828, -inf
        %v1856 = vsel %vm1848, %v1831, -inf
        %vm1857 = vcmask 130048
        %v1858 = vsel %vm1857, %v1849, -inf
        %1859 = vmax.xlane.f32.xlu0 %v1858
        %v1860 = vpop.xlane.xlu0 %1859
        %v1861 = vsel %vm1857, %v1850, -inf
        %1862 = vmax.xlane.f32.xlu0 %v1861
        %v1863 = vpop.xlane.xlu0 %1862
        %v1864 = vsel %vm1857, %v1851, -inf
        %1865 = vmax.xlane.f32.xlu0 %v1864
        %v1866 = vpop.xlane.xlu0 %1865
        %v1867 = vsel %vm1857, %v1852, -inf
        %1868 = vmax.xlane.f32.xlu0 %v1867
        %v1869 = vpop.xlane.xlu0 %1868
        %v1870 = vsel %vm1857, %v1853, -inf
        %1871 = vmax.xlane.f32.xlu0 %v1870
        %v1872 = vpop.xlane.xlu0 %1871
        %v1873 = vsel %vm1857, %v1854, -inf
        %1874 = vmax.xlane.f32.xlu0 %v1873
        %v1875 = vpop.xlane.xlu0 %1874
        %v1876 = vsel %vm1857, %v1855, -inf
        %1877 = vmax.xlane.f32.xlu0 %v1876
        %v1878 = vpop.xlane.xlu0 %1877
        %v1879 = vsel %vm1857, %v1856, -inf
        %1880 = vmax.xlane.f32.xlu0 %v1879
        %v1881 = vpop.xlane.xlu0 %1880
        %v1882 = vsub.f32 %v1849, %v1860
        %v1883 = vsub.f32 %v1850, %v1863
        %v1884 = vsub.f32 %v1851, %v1866
        %v1885 = vsub.f32 %v1852, %v1869
        %v1886 = vsub.f32 %v1853, %v1872
        %v1887 = vsub.f32 %v1854, %v1875
        %v1888 = vsub.f32 %v1855, %v1878
        %v1889 = vsub.f32 %v1856, %v1881
        %v1890 = vmul.f32 %v1882, 1.442695
        %v1891 = vpow.pop %v1890
        %v1892 = vmul.f32 %v1883, 1.442695
        %v1893 = vpow.pop %v1892
        %v1894 = vmul.f32 %v1884, 1.442695
        %v1895 = vpow.pop %v1894
        %v1896 = vmul.f32 %v1885, 1.442695
        %v1897 = vpow.pop %v1896
        %v1898 = vmul.f32 %v1886, 1.442695
        %v1899 = vpow.pop %v1898
        %v1900 = vmul.f32 %v1887, 1.442695
        %v1901 = vpow.pop %v1900
        %v1902 = vmul.f32 %v1888, 1.442695
        %v1903 = vpow.pop %v1902
        %v1904 = vmul.f32 %v1889, 1.442695
        %v1905 = vpow.pop %v1904
        %v1906 = vsel %vm1857, %v1891, 0.0
        %1907 = vadd.xlane.f32.xlu0 %v1906
        %v1908 = vpop.xlane.xlu0 %1907
        %v1909 = vsel %vm1857, %v1893, 0.0
        %1910 = vadd.xlane.f32.xlu0 %v1909
        %v1911 = vpop.xlane.xlu0 %1910
        %v1912 = vsel %vm1857, %v1895, 0.0
        %1913 = vadd.xlane.f32.xlu0 %v1912
        %v1914 = vpop.xlane.xlu0 %1913
        %v1915 = vsel %vm1857, %v1897, 0.0
        %1916 = vadd.xlane.f32.xlu0 %v1915
        %v1917 = vpop.xlane.xlu0 %1916
        %v1918 = vsel %vm1857, %v1899, 0.0
        %1919 = vadd.xlane.f32.xlu0 %v1918
        %v1920 = vpop.xlane.xlu0 %1919
        %v1921 = vsel %vm1857, %v1901, 0.0
        %1922 = vadd.xlane.f32.xlu0 %v1921
        %v1923 = vpop.xlane.xlu0 %1922
        %v1924 = vsel %vm1857, %v1903, 0.0
        %1925 = vadd.xlane.f32.xlu0 %v1924
        %v1926 = vpop.xlane.xlu0 %1925
        %v1927 = vsel %vm1857, %v1905, 0.0
        %1928 = vadd.xlane.f32.xlu0 %v1927
        %v1929 = vpop.xlane.xlu0 %1928
        %v1930 = vrcp.pop %v1908
        %v1931 = vrcp.pop %v1911
        %v1932 = vrcp.pop %v1914
        %v1933 = vrcp.pop %v1917
        %v1934 = vrcp.pop %v1920
        %v1935 = vrcp.pop %v1923
        %v1936 = vrcp.pop %v1926
        %v1937 = vrcp.pop %v1929
        %v1938 = vmul.f32 %v1891, %v1930
        %v1939 = vmul.f32 %v1893, %v1931
        %v1940 = vmul.f32 %v1895, %v1932
        %v1941 = vmul.f32 %v1897, %v1933
        %v1942 = vmul.f32 %v1899, %v1934
        %v1943 = vmul.f32 %v1901, %v1935
        %v1944 = vmul.f32 %v1903, %v1936
        %v1945 = vmul.f32 %v1905, %v1937
        %v1946 = vpack.c.bf16 %v1939, %v1938
        %v1947 = vpack.c.bf16 %v1941, %v1940
        %v1948 = vpack.c.bf16 %v1943, %v1942
        %v1949 = vpack.c.bf16 %v1945, %v1944
        %v1951 = vsel %vm1857, %v1946, 0
        %1953 = vmatprep.subr.bf16.mxu0 0
        %1954 = vmatpush1.bf16.msra.mxu0 %v1641
        %1955 = vmatprep.subr.bf16.mxu0 0
        %1956 = vmatpush1.bf16.msra.mxu0 0
        %1957 = vmatprep.subr.bf16.mxu0 0
        %1958 = vmatpush1.bf16.msra.mxu0 0
        %1959 = vmatprep.subr.bf16.mxu0 0
        %1960 = vmatpush1.bf16.msra.mxu0 0
        %1961 = vmatprep.subr.bf16.mxu0 0
        %1962 = vmatpush1.bf16.msra.mxu0 0
        %1963 = vmatprep.subr.bf16.mxu0 0
        %1964 = vmatpush1.bf16.msra.mxu0 0
        %1965 = vmatprep.subr.bf16.mxu0 0
        %1966 = vmatpush1.bf16.msra.mxu0 0
        %1967 = vmatprep.subr.bf16.mxu0 0
        %1968 = vmatpush1.bf16.msra.mxu0 0
        %1969 = vmatprep.subr.bf16.mxu0 0
        %1970 = vmatpush1.bf16.msra.mxu0 0
        %1971 = vmatprep.subr.bf16.mxu0 0
        %1972 = vmatpush1.bf16.msra.mxu0 0
        %1973 = vmatprep.subr.bf16.mxu0 0
        %1974 = vmatpush1.bf16.msra.mxu0 0
        %1975 = vmatprep.subr.bf16.mxu0 0
        %1976 = vmatpush1.bf16.msra.mxu0 0
        %1977 = vmatprep.subr.bf16.mxu0 0
        %1978 = vmatpush1.bf16.msra.mxu0 0
        %1979 = vmatprep.subr.bf16.mxu0 0
        %1980 = vmatpush1.bf16.msra.mxu0 0
        %1981 = vmatprep.subr.bf16.mxu0 0
        %1982 = vmatpush1.bf16.msra.mxu0 0
        %1983 = vmatprep.subr.bf16.mxu0 0
        %1984 = vmatpush1.bf16.msra.mxu0 0
        %1985 = vmatprep.mubr.bf16.mxu0 0
        %1986 = vmatmul.mubr.bf16.gmra.mrb[0].mxu0 %v1951
        %v1987 = vpop.f32.mrb[0].mxu0
        %v1988 = vadd.f32 0.0, %v1987
        %v1989 = vpop.f32.mrb[0].mxu0
        %v1990 = vpop.f32.mrb[0].mxu0
        %v1991 = vadd.f32 0.0, %v1990
        %v1992 = vpop.f32.mrb[0].mxu0
        %1993 = vdwg.mxu0
        %v1995 = vsel %vm1857, %v1947, 0
        %1997 = vmatprep.subr.bf16.mxu0 0
        %1998 = vmatpush1.bf16.msra.mxu0 %v1642
        %1999 = vmatprep.subr.bf16.mxu0 0
        %2000 = vmatpush1.bf16.msra.mxu0 0
        %2001 = vmatprep.subr.bf16.mxu0 0
        %2002 = vmatpush1.bf16.msra.mxu0 0
        %2003 = vmatprep.subr.bf16.mxu0 0
        %2004 = vmatpush1.bf16.msra.mxu0 0
        %2005 = vmatprep.subr.bf16.mxu0 0
        %2006 = vmatpush1.bf16.msra.mxu0 0
        %2007 = vmatprep.subr.bf16.mxu0 0
        %2008 = vmatpush1.bf16.msra.mxu0 0
        %2009 = vmatprep.subr.bf16.mxu0 0
        %2010 = vmatpush1.bf16.msra.mxu0 0
        %2011 = vmatprep.subr.bf16.mxu0 0
        %2012 = vmatpush1.bf16.msra.mxu0 0
        %2013 = vmatprep.subr.bf16.mxu0 0
        %2014 = vmatpush1.bf16.msra.mxu0 0
        %2015 = vmatprep.subr.bf16.mxu0 0
        %2016 = vmatpush1.bf16.msra.mxu0 0
        %2017 = vmatprep.subr.bf16.mxu0 0
        %2018 = vmatpush1.bf16.msra.mxu0 0
        %2019 = vmatprep.subr.bf16.mxu0 0
        %2020 = vmatpush1.bf16.msra.mxu0 0
        %2021 = vmatprep.subr.bf16.mxu0 0
        %2022 = vmatpush1.bf16.msra.mxu0 0
        %2023 = vmatprep.subr.bf16.mxu0 0
        %2024 = vmatpush1.bf16.msra.mxu0 0
        %2025 = vmatprep.subr.bf16.mxu0 0
        %2026 = vmatpush1.bf16.msra.mxu0 0
        %2027 = vmatprep.subr.bf16.mxu0 0
        %2028 = vmatpush1.bf16.msra.mxu0 0
        %2029 = vmatprep.mubr.bf16.mxu0 0
        %2030 = vmatmul.mubr.bf16.gmra.mrb[0].mxu0 %v1995
        %v2031 = vpop.f32.mrb[0].mxu0
        %v2032 = vadd.f32 0.0, %v2031
        %v2033 = vpop.f32.mrb[0].mxu0
        %v2034 = vpop.f32.mrb[0].mxu0
        %v2035 = vadd.f32 0.0, %v2034
        %v2036 = vpop.f32.mrb[0].mxu0
        %2037 = vdwg.mxu0
        %v2039 = vsel %vm1857, %v1948, 0
        %2041 = vmatprep.subr.bf16.mxu0 0
        %2042 = vmatpush1.bf16.msra.mxu0 %v1643
        %2043 = vmatprep.subr.bf16.mxu0 0
        %2044 = vmatpush1.bf16.msra.mxu0 0
        %2045 = vmatprep.subr.bf16.mxu0 0
        %2046 = vmatpush1.bf16.msra.mxu0 0
        %2047 = vmatprep.subr.bf16.mxu0 0
        %2048 = vmatpush1.bf16.msra.mxu0 0
        %2049 = vmatprep.subr.bf16.mxu0 0
        %2050 = vmatpush1.bf16.msra.mxu0 0
        %2051 = vmatprep.subr.bf16.mxu0 0
        %2052 = vmatpush1.bf16.msra.mxu0 0
        %2053 = vmatprep.subr.bf16.mxu0 0
        %2054 = vmatpush1.bf16.msra.mxu0 0
        %2055 = vmatprep.subr.bf16.mxu0 0
        %2056 = vmatpush1.bf16.msra.mxu0 0
        %2057 = vmatprep.subr.bf16.mxu0 0
        %2058 = vmatpush1.bf16.msra.mxu0 0
        %2059 = vmatprep.subr.bf16.mxu0 0
        %2060 = vmatpush1.bf16.msra.mxu0 0
        %2061 = vmatprep.subr.bf16.mxu0 0
        %2062 = vmatpush1.bf16.msra.mxu0 0
        %2063 = vmatprep.subr.bf16.mxu0 0
        %2064 = vmatpush1.bf16.msra.mxu0 0
        %2065 = vmatprep.subr.bf16.mxu0 0
        %2066 = vmatpush1.bf16.msra.mxu0 0
        %2067 = vmatprep.subr.bf16.mxu0 0
        %2068 = vmatpush1.bf16.msra.mxu0 0
        %2069 = vmatprep.subr.bf16.mxu0 0
        %2070 = vmatpush1.bf16.msra.mxu0 0
        %2071 = vmatprep.subr.bf16.mxu0 0
        %2072 = vmatpush1.bf16.msra.mxu0 0
        %2073 = vmatprep.mubr.bf16.mxu0 0
        %2074 = vmatmul.mubr.bf16.gmra.mrb[0].mxu0 %v2039
        %v2075 = vpop.f32.mrb[0].mxu0
        %v2076 = vadd.f32 0.0, %v2075
        %v2077 = vpop.f32.mrb[0].mxu0
        %v2078 = vpop.f32.mrb[0].mxu0
        %v2079 = vadd.f32 0.0, %v2078
        %v2080 = vpop.f32.mrb[0].mxu0
        %2081 = vdwg.mxu0
        %v2083 = vsel %vm1857, %v1949, 0
        %2085 = vmatprep.subr.bf16.mxu0 0
        %2086 = vmatpush1.bf16.msra.mxu0 %v1644
        %2087 = vmatprep.subr.bf16.mxu0 0
        %2088 = vmatpush1.bf16.msra.mxu0 0
        %2089 = vmatprep.subr.bf16.mxu0 0
        %2090 = vmatpush1.bf16.msra.mxu0 0
        %2091 = vmatprep.subr.bf16.mxu0 0
        %2092 = vmatpush1.bf16.msra.mxu0 0
        %2093 = vmatprep.subr.bf16.mxu0 0
        %2094 = vmatpush1.bf16.msra.mxu0 0
        %2095 = vmatprep.subr.bf16.mxu0 0
        %2096 = vmatpush1.bf16.msra.mxu0 0
        %2097 = vmatprep.subr.bf16.mxu0 0
        %2098 = vmatpush1.bf16.msra.mxu0 0
        %2099 = vmatprep.subr.bf16.mxu0 0
        %2100 = vmatpush1.bf16.msra.mxu0 0
        %2101 = vmatprep.subr.bf16.mxu0 0
        %2102 = vmatpush1.bf16.msra.mxu0 0
        %2103 = vmatprep.subr.bf16.mxu0 0
        %2104 = vmatpush1.bf16.msra.mxu0 0
        %2105 = vmatprep.subr.bf16.mxu0 0
        %2106 = vmatpush1.bf16.msra.mxu0 0
        %2107 = vmatprep.subr.bf16.mxu0 0
        %2108 = vmatpush1.bf16.msra.mxu0 0
        %2109 = vmatprep.subr.bf16.mxu0 0
        %2110 = vmatpush1.bf16.msra.mxu0 0
        %2111 = vmatprep.subr.bf16.mxu0 0
        %2112 = vmatpush1.bf16.msra.mxu0 0
        %2113 = vmatprep.subr.bf16.mxu0 0
        %2114 = vmatpush1.bf16.msra.mxu0 0
        %2115 = vmatprep.subr.bf16.mxu0 0
        %2116 = vmatpush1.bf16.msra.mxu0 0
        %2117 = vmatprep.mubr.bf16.mxu0 0
        %2118 = vmatmul.mubr.bf16.gmra.mrb[0].mxu0 %v2083
        %v2119 = vpop.f32.mrb[0].mxu0
        %v2120 = vadd.f32 0.0, %v2119
        %v2121 = vpop.f32.mrb[0].mxu0
        %v2122 = vpop.f32.mrb[0].mxu0
        %v2123 = vadd.f32 0.0, %v2122
        %v2124 = vpop.f32.mrb[0].mxu0
        %2125 = vdwg.mxu0
        %v2126 = vpack.c.bf16 %v1991, %v1988
        %v2127 = vpack.c.bf16 %v2035, %v2032
        %v2128 = vpack.c.bf16 %v2079, %v2076
        %v2129 = vpack.c.bf16 %v2123, %v2120
        %v2130 = vld [vmem:[%s6] sm:$0xf]
        %v2131 = vld [vmem:[%s6 + $0x4] sm:$0xf]
        %v2132 = vld [vmem:[%s6 + $0x8] sm:$0xf]
        %v2133 = vld [vmem:[%s6 + $0xc] sm:$0xf]
        %v2134 = vld [vmem:[%s6 + $0x10] sm:$0xf]
        %v2135 = vld [vmem:[%s6 + $0x14] sm:$0xf]
        %v2136 = vld [vmem:[%s6 + $0x18] sm:$0xf]
        %v2137 = vld [vmem:[%s6 + $0x1c] sm:$0xf]
        %v2138 = vld [vmem:[%s6 + $0x20] sm:$0xf]
        %v2139 = vld [vmem:[%s6 + $0x24] sm:$0xf]
        %v2140 = vld [vmem:[%s6 + $0x28] sm:$0xf]
        %v2141 = vld [vmem:[%s6 + $0x2c] sm:$0xf]
        %v2142 = vld [vmem:[%s6 + $0x30] sm:$0xf]
        %v2143 = vld [vmem:[%s6 + $0x34] sm:$0xf]
        %v2144 = vld [vmem:[%s6 + $0x38] sm:$0xf]
        %v2145 = vld [vmem:[%s6 + $0x3c] sm:$0xf]
        %v2150 = vunpack.c.l.b16 %v2130
        %v2151 = vunpack.c.l.b16 %v2131
        %v2152 = vunpack.c.l.b16 %v2132
        %v2153 = vunpack.c.l.b16 %v2133
        %v2154 = vpack.c.b16 %v2151, %v2150
        %v2155 = vpack.c.b16 %v2153, %v2152
        %v2159 = vsel %vm1645, %v2126, 0
        %2161 = vmatprep.subr.bf16.mxu0 0
        %2162 = vmatpush1.bf16.msra.mxu0 %v2154
        %2163 = vmatprep.subr.bf16.mxu0 0
        %2164 = vmatpush1.bf16.msra.mxu0 %v2155
        %2165 = vmatprep.subr.bf16.mxu0 0
        %2166 = vmatpush1.bf16.msra.mxu0 0
        %2167 = vmatprep.subr.bf16.mxu0 0
        %2168 = vmatpush1.bf16.msra.mxu0 0
        %2169 = vmatprep.subr.bf16.mxu0 0
        %2170 = vmatpush1.bf16.msra.mxu0 0
        %2171 = vmatprep.subr.bf16.mxu0 0
        %2172 = vmatpush1.bf16.msra.mxu0 0
        %2173 = vmatprep.subr.bf16.mxu0 0
        %2174 = vmatpush1.bf16.msra.mxu0 0
        %2175 = vmatprep.subr.bf16.mxu0 0
        %2176 = vmatpush1.bf16.msra.mxu0 0
        %2177 = vmatprep.subr.bf16.mxu0 0
        %2178 = vmatpush1.bf16.msra.mxu0 0
        %2179 = vmatprep.subr.bf16.mxu0 0
        %2180 = vmatpush1.bf16.msra.mxu0 0
        %2181 = vmatprep.subr.bf16.mxu0 0
        %2182 = vmatpush1.bf16.msra.mxu0 0
        %2183 = vmatprep.subr.bf16.mxu0 0
        %2184 = vmatpush1.bf16.msra.mxu0 0
        %2185 = vmatprep.subr.bf16.mxu0 0
        %2186 = vmatpush1.bf16.msra.mxu0 0
        %2187 = vmatprep.subr.bf16.mxu0 0
        %2188 = vmatpush1.bf16.msra.mxu0 0
        %2189 = vmatprep.subr.bf16.mxu0 0
        %2190 = vmatpush1.bf16.msra.mxu0 0
        %2191 = vmatprep.subr.bf16.mxu0 0
        %2192 = vmatpush1.bf16.msra.mxu0 0
        %2193 = vmatprep.mubr.bf16.mxu0 0
        %2194 = vmatmul.mubr.bf16.gmra.mrb[0].mxu0 %v2159
        %v2195 = vpop.f32.mrb[0].mxu0
        %v2196 = vadd.f32 0.0, %v2195
        %v2197 = vpop.f32.mrb[0].mxu0
        %v2198 = vpop.f32.mrb[0].mxu0
        %v2199 = vadd.f32 0.0, %v2198
        %v2200 = vpop.f32.mrb[0].mxu0
        %2201 = vdwg.mxu0
        %v2206 = vunpack.c.l.b16 %v2134
        %v2207 = vunpack.c.l.b16 %v2135
        %v2208 = vunpack.c.l.b16 %v2136
        %v2209 = vunpack.c.l.b16 %v2137
        %v2210 = vpack.c.b16 %v2207, %v2206
        %v2211 = vpack.c.b16 %v2209, %v2208
        %v2215 = vsel %vm1645, %v2127, 0
        %2217 = vmatprep.subr.bf16.mxu0 0
        %2218 = vmatpush1.bf16.msra.mxu0 %v2210
        %2219 = vmatprep.subr.bf16.mxu0 0
        %2220 = vmatpush1.bf16.msra.mxu0 %v2211
        %2221 = vmatprep.subr.bf16.mxu0 0
        %2222 = vmatpush1.bf16.msra.mxu0 0
        %2223 = vmatprep.subr.bf16.mxu0 0
        %2224 = vmatpush1.bf16.msra.mxu0 0
        %2225 = vmatprep.subr.bf16.mxu0 0
        %2226 = vmatpush1.bf16.msra.mxu0 0
        %2227 = vmatprep.subr.bf16.mxu0 0
        %2228 = vmatpush1.bf16.msra.mxu0 0
        %2229 = vmatprep.subr.bf16.mxu0 0
        %2230 = vmatpush1.bf16.msra.mxu0 0
        %2231 = vmatprep.subr.bf16.mxu0 0
        %2232 = vmatpush1.bf16.msra.mxu0 0
        %2233 = vmatprep.subr.bf16.mxu0 0
        %2234 = vmatpush1.bf16.msra.mxu0 0
        %2235 = vmatprep.subr.bf16.mxu0 0
        %2236 = vmatpush1.bf16.msra.mxu0 0
        %2237 = vmatprep.subr.bf16.mxu0 0
        %2238 = vmatpush1.bf16.msra.mxu0 0
        %2239 = vmatprep.subr.bf16.mxu0 0
        %2240 = vmatpush1.bf16.msra.mxu0 0
        %2241 = vmatprep.subr.bf16.mxu0 0
        %2242 = vmatpush1.bf16.msra.mxu0 0
        %2243 = vmatprep.subr.bf16.mxu0 0
        %2244 = vmatpush1.bf16.msra.mxu0 0
        %2245 = vmatprep.subr.bf16.mxu0 0
        %2246 = vmatpush1.bf16.msra.mxu0 0
        %2247 = vmatprep.subr.bf16.mxu0 0
        %2248 = vmatpush1.bf16.msra.mxu0 0
        %2249 = vmatprep.mubr.bf16.mxu0 0
        %2250 = vmatmul.mubr.bf16.gmra.mrb[0].mxu0 %v2215
        %v2251 = vpop.f32.mrb[0].mxu0
        %v2252 = vadd.f32 0.0, %v2251
        %v2253 = vpop.f32.mrb[0].mxu0
        %v2254 = vpop.f32.mrb[0].mxu0
        %v2255 = vadd.f32 0.0, %v2254
        %v2256 = vpop.f32.mrb[0].mxu0
        %2257 = vdwg.mxu0
        %v2262 = vunpack.c.l.b16 %v2138
        %v2263 = vunpack.c.l.b16 %v2139
        %v2264 = vunpack.c.l.b16 %v2140
        %v2265 = vunpack.c.l.b16 %v2141
        %v2266 = vpack.c.b16 %v2263, %v2262
        %v2267 = vpack.c.b16 %v2265, %v2264
        %v2271 = vsel %vm1645, %v2128, 0
        %2273 = vmatprep.subr.bf16.mxu0 0
        %2274 = vmatpush1.bf16.msra.mxu0 %v2266
        %2275 = vmatprep.subr.bf16.mxu0 0
        %2276 = vmatpush1.bf16.msra.mxu0 %v2267
        %2277 = vmatprep.subr.bf16.mxu0 0
        %2278 = vmatpush1.bf16.msra.mxu0 0
        %2279 = vmatprep.subr.bf16.mxu0 0
        %2280 = vmatpush1.bf16.msra.mxu0 0
        %2281 = vmatprep.subr.bf16.mxu0 0
        %2282 = vmatpush1.bf16.msra.mxu0 0
        %2283 = vmatprep.subr.bf16.mxu0 0
        %2284 = vmatpush1.bf16.msra.mxu0 0
        %2285 = vmatprep.subr.bf16.mxu0 0
        %2286 = vmatpush1.bf16.msra.mxu0 0
        %2287 = vmatprep.subr.bf16.mxu0 0
        %2288 = vmatpush1.bf16.msra.mxu0 0
        %2289 = vmatprep.subr.bf16.mxu0 0
        %2290 = vmatpush1.bf16.msra.mxu0 0
        %2291 = vmatprep.subr.bf16.mxu0 0
        %2292 = vmatpush1.bf16.msra.mxu0 0
        %2293 = vmatprep.subr.bf16.mxu0 0
        %2294 = vmatpush1.bf16.msra.mxu0 0
        %2295 = vmatprep.subr.bf16.mxu0 0
        %2296 = vmatpush1.bf16.msra.mxu0 0
        %2297 = vmatprep.subr.bf16.mxu0 0
        %2298 = vmatpush1.bf16.msra.mxu0 0
        %2299 = vmatprep.subr.bf16.mxu0 0
        %2300 = vmatpush1.bf16.msra.mxu0 0
        %2301 = vmatprep.subr.bf16.mxu0 0
        %2302 = vmatpush1.bf16.msra.mxu0 0
        %2303 = vmatprep.subr.bf16.mxu0 0
        %2304 = vmatpush1.bf16.msra.mxu0 0
        %2305 = vmatprep.mubr.bf16.mxu0 0
        %2306 = vmatmul.mubr.bf16.gmra.mrb[0].mxu0 %v2271
        %v2307 = vpop.f32.mrb[0].mxu0
        %v2308 = vadd.f32 0.0, %v2307
        %v2309 = vpop.f32.mrb[0].mxu0
        %v2310 = vpop.f32.mrb[0].mxu0
        %v2311 = vadd.f32 0.0, %v2310
        %v2312 = vpop.f32.mrb[0].mxu0
        %2313 = vdwg.mxu0
        %v2318 = vunpack.c.l.b16 %v2142
        %v2319 = vunpack.c.l.b16 %v2143
        %v2320 = vunpack.c.l.b16 %v2144
        %v2321 = vunpack.c.l.b16 %v2145
        %v2322 = vpack.c.b16 %v2319, %v2318
        %v2323 = vpack.c.b16 %v2321, %v2320
        %v2327 = vsel %vm1645, %v2129, 0
        %2329 = vmatprep.subr.bf16.mxu0 0
        %2330 = vmatpush1.bf16.msra.mxu0 %v2322
        %2331 = vmatprep.subr.bf16.mxu0 0
        %2332 = vmatpush1.bf16.msra.mxu0 %v2323
        %2333 = vmatprep.subr.bf16.mxu0 0
        %2334 = vmatpush1.bf16.msra.mxu0 0
        %2335 = vmatprep.subr.bf16.mxu0 0
        %2336 = vmatpush1.bf16.msra.mxu0 0
        %2337 = vmatprep.subr.bf16.mxu0 0
        %2338 = vmatpush1.bf16.msra.mxu0 0
        %2339 = vmatprep.subr.bf16.mxu0 0
        %2340 = vmatpush1.bf16.msra.mxu0 0
        %2341 = vmatprep.subr.bf16.mxu0 0
        %2342 = vmatpush1.bf16.msra.mxu0 0
        %2343 = vmatprep.subr.bf16.mxu0 0
        %2344 = vmatpush1.bf16.msra.mxu0 0
        %2345 = vmatprep.subr.bf16.mxu0 0
        %2346 = vmatpush1.bf16.msra.mxu0 0
        %2347 = vmatprep.subr.bf16.mxu0 0
        %2348 = vmatpush1.bf16.msra.mxu0 0
        %2349 = vmatprep.subr.bf16.mxu0 0
        %2350 = vmatpush1.bf16.msra.mxu0 0
        %2351 = vmatprep.subr.bf16.mxu0 0
        %2352 = vmatpush1.bf16.msra.mxu0 0
        %2353 = vmatprep.subr.bf16.mxu0 0
        %2354 = vmatpush1.bf16.msra.mxu0 0
        %2355 = vmatprep.subr.bf16.mxu0 0
        %2356 = vmatpush1.bf16.msra.mxu0 0
        %2357 = vmatprep.subr.bf16.mxu0 0
        %2358 = vmatpush1.bf16.msra.mxu0 0
        %2359 = vmatprep.subr.bf16.mxu0 0
        %2360 = vmatpush1.bf16.msra.mxu0 0
        %2361 = vmatprep.mubr.bf16.mxu0 0
        %2362 = vmatmul.mubr.bf16.gmra.mrb[0].mxu0 %v2327
        %v2363 = vpop.f32.mrb[0].mxu0
        %v2364 = vadd.f32 0.0, %v2363
        %v2365 = vpop.f32.mrb[0].mxu0
        %v2366 = vpop.f32.mrb[0].mxu0
        %v2367 = vadd.f32 0.0, %v2366
        %v2368 = vpop.f32.mrb[0].mxu0
        %2369 = vdwg.mxu0
        %v2370 = vadd.f32 %v2196, %v2252
        %v2371 = vadd.f32 %v2199, %v2255
        %v2372 = vadd.f32 %v2370, %v2308
        %v2373 = vadd.f32 %v2371, %v2311
        %v2374 = vadd.f32 %v2372, %v2364
        %v2375 = vadd.f32 %v2373, %v2367
        %v2376 = vpack.c.bf16 %v2375, %v2374
        %v2378 = vunpack.c.l.b16 %v2376
        %v2379 = vunpack.c.h.b16 %v2376
        %v2380 = vpack.c.b16 %v2378, %v2378
        %v2381 = vpack.c.b16 %v2379, %v2379
        %2384 = vst [vmem:[%s326] sm:$0xf] %v2380
        %2385 = vst [vmem:[%s326 + $0x4] sm:$0xf] %v2381
        %s2386 = sand.u32 %s207, 1
        %s2387 = scalar_lea.sflag [#allocation3], %s2386
        %s2388 = sand.u32 %s207, 1
        %s2389 = smul.addr %s2388, 8
        %s2390 = scalar_lea.vmem [#allocation2], %s2389
        // Predicated region
        $region49: #{tpu_custom_call.1} parent=47 // pred_check
          %p2391 = pneg %p217
        $region50: #{tpu_custom_call.1} parent=47 // pred_check_branch
          %2393 = sbr.rel (%p2391) target = $region52
        $region51: #{tpu_custom_call.1} parent=47 // pred_region
          %s2394 = smul.u32 2, %s26
          %s2396 = ssub.s32 128, 128
          %2397 = vsyncadd %s2387, %s2396
          %s2398 = smul.addr %s25, 2
          %s2399 = sadd.s32 %s2394, %s2398
          %s2400 = smul.addr %s2399, 64
          %s2401 = scalar_lea.hbm %s7, %s2400
          %s2402 = sshll.u32 %s2390, 4
          %s2403 = int_to_ptr.vmem [resolvable:$true] %s2402
          %2408 = dma.vmem_to_hbm [thread:$0]  %s2403, 128, %s2401, %s2387, 64, 64, 4
        $region52: #{tpu_custom_call.1} parent=47 // pred_fallthru
          _
      $region48: #{tpu_custom_call.1} parent=5 // pred_fallthru
        _
      %p2409 = scmp.le.s32.totalorder 2, %s16
      // Predicated region
      $region53: #{tpu_custom_call.1} parent=5 // pred_check
        %p2410 = pneg %p2409
      $region54: #{tpu_custom_call.1} parent=5 // pred_check_branch
        %2412 = sbr.rel (%p2410) target = $region56
      $region55: #{tpu_custom_call.1} parent=5 // pred_region
        %s2413 = ssub.s32 %s16, 2
        // Predicated region
        $region57: #{tpu_custom_call.1} parent=55 // pred_check
          %p2414 = pneg %p223
        $region58: #{tpu_custom_call.1} parent=55 // pred_check_branch
          %2416 = sbr.rel (%p2414) target = $region60
        $region59: #{tpu_custom_call.1} parent=55 // pred_region
          %s2417 = sand.u32 %s208, 1
          %s2418 = scalar_lea.sflag [#allocation3], %s2417
          %s2419 = sand.u32 %s208, 1
          %s2420 = smul.addr %s2419, 8
          %s2421 = scalar_lea.vmem [#allocation2], %s2420
          %2422 = dma.done %s2418, 128
        $region60: #{tpu_custom_call.1} parent=55 // pred_fallthru
          _
      $region56: #{tpu_custom_call.1} parent=5 // pred_fallthru
        _
    $region6: #{tpu_custom_call.1} parent=1 // loop_footer
      %s20 = sadd.s32 1, %s16
    $region7: #{tpu_custom_call.1} parent=1 // loop_footer_branch
      %15 = sbr.rel target = $region3
    $region8: #{tpu_custom_call.1} parent=1 // loop_exit
      _
    %2423 = vsyncpa [#allocation3], 1
    %s2424 = scalar_lea.sflag [#allocation3], 1
    %2425 = vsyncpa %s2424, 1

// kernel: tpu_custom_call.1
$region0: #{tpu_custom_call.1}
  #allocation0 [shape = 'u32[]', space=smem, size = 0x4, offset = 0x4, fixed_abs, tag = 'smem constant byte address 0x4 - core index']
  #allocation1 [shape = 'u32[144,128]{1,0:T(1,128)}', space=vmem, size = 0x12000, scoped, tag = 'internal scratch']
  %s0 = inlined_call_operand.vmem [shape: bf16[2,16,128], index: 0, kind: input, shape index: {}]
  %s1 = inlined_call_operand.vmem [shape: bf16[2,16,128], index: 1, kind: input, shape index: {}]
  %s2 = inlined_call_operand.vmem [shape: bf16[2,16,128], index: 2, kind: input, shape index: {}]
  %s3 = inlined_call_operand.vmem [shape: bf16[4,128,32], index: 3, kind: input, shape index: {}]
  %s4 = inlined_call_operand.vmem [shape: bf16[4,128,32], index: 4, kind: input, shape index: {}]
  %s5 = inlined_call_operand.vmem [shape: bf16[4,128,32], index: 5, kind: input, shape index: {}]
  %s6 = inlined_call_operand.vmem [shape: bf16[4,32,128], index: 6, kind: input, shape index: {}]
  %s7 = inlined_call_operand.hbm [shape: bf16[2,16,128], index: 7, kind: output, shape index: {}]
  %s8 = sld [smem:[#allocation0]]
  $region61: #{tpu_custom_call.1} parent=0
    _
  %s10 = ssub.s32 1, %s8
  %s11 = scalar_select 0, %s10, %s8
  $region1: #{tpu_custom_call.1} parent=0
    #allocation2 [shape = 'u8[8192]{0}', space=vmem, size = 0x2000, scoped, tag = 'output window, operand 0']
    #allocation3 [shape = 's32[2]{0}', space=sflag, size = 0x8, scoped, tag = 'scoped memory for tpu_custom_call.1']
    %12 = vsyncpa [#allocation3], 0
    %s13 = scalar_lea.sflag [#allocation3], 1
    %14 = vsyncpa %s13, 0
    loop: start=0, step=1, limit=4
    $region2: #{tpu_custom_call.1} parent=1 // loop_pre_header
      _
    $region3: #{tpu_custom_call.1} parent=1 // loop_header
      %s16 = sphi 0, %s20
      %p17 = scmp.ge.s32.totalorder %s16, 4
      %s23 = sphi 0, %s35
      %s24 = sphi 0, %s31
      %s25 = sphi 0, %s23
      %s26 = sphi 0, %s24
      %s27 = sphi 0, %s25
      %s28 = sphi 0, %s26
      %s38 = sphi 0, %s40
      %s41 = sphi 0, %s38
      %s42 = sphi 0, %s41
      %s58 = sphi 0, %s42
      %s66 = sphi 0, %s68
      %s69 = sphi 0, %s66
      %s70 = sphi 0, %s69
      %s86 = sphi 0, %s70
      %s92 = sphi 0, %s94
      %s95 = sphi 0, %s92
      %s96 = sphi 0, %s95
      %s112 = sphi 0, %s96
      %s116 = sphi 0, %s116
      %s118 = sphi 0, %s116
      %s119 = sphi 0, %s118
      %s133 = sphi 0, %s119
      %s137 = sphi 0, %s137
      %s139 = sphi 0, %s137
      %s140 = sphi 0, %s139
      %s154 = sphi 0, %s140
      %s158 = sphi 0, %s158
      %s160 = sphi 0, %s158
      %s161 = sphi 0, %s160
      %s175 = sphi 0, %s161
      %s179 = sphi 0, %s179
      %s181 = sphi 0, %s179
      %s182 = sphi 0, %s181
      %s196 = sphi 0, %s182
      %s204 = sphi 0, %s206
      %s207 = sphi 0, %s204
      %s208 = sphi 0, %s207
      %s224 = sphi 0, %s208
    $region4: #{tpu_custom_call.1} parent=1 // loop_header_branch
      %19 = sbr.rel (%p17) target = $region8
    $region5: #{tpu_custom_call.1} parent=1 // loop_body
      %s21 = ssub.s32 %s16, 1
      %s22 = ssub.s32 %s16, 2
      %s29 = sadd.s32 1, %s24
      %p30 = scmp.ge.s32.totalorder %s29, 1
      %s31 = scalar_select %p30, 0, %s29
      %s32 = sadd.s32 1, %s23
      %s33 = scalar_select %p30, %s32, %s23
      %p34 = scmp.ge.s32.totalorder %s33, 2
      %s35 = scalar_select %p34, 0, %s33
      %s36 = ssub.s32 %s23, %s35
      %p37 = scmp.eq.s32.totalorder %s36, 0
      %s39 = sadd.s32 %s38, 1
      %s40 = scalar_select %p37, %s38, %s39
      %p43 = pneg %p37
      %p44 = scmp.eq.s32.totalorder %s16, 1
      %p45 = por %p43, %p44
      %p46 = scmp.ne.s32.totalorder %s38, %s41
      %p47 = scmp.eq.s32.totalorder %s16, 0
      %p48 = por %p46, %p47
      %p49 = scmp.ne.s32.totalorder %s38, %s41
      %p50 = scmp.eq.s32.totalorder %s21, 1
      %p51 = por %p49, %p50
      %p52 = scmp.ne.s32.totalorder %s41, %s42
      %p53 = scmp.eq.s32.totalorder %s21, 0
      %p54 = por %p52, %p53
      %p55 = scmp.ne.s32.totalorder %s41, %s42
      %p56 = scmp.eq.s32.totalorder %s22, 1
      %p57 = por %p55, %p56
      %p59 = scmp.ne.s32.totalorder %s42, %s58
      %p60 = scmp.eq.s32.totalorder %s22, 0
      %p61 = por %p59, %p60
      %s62 = ssub.s32 %s23, %s35
      %s63 = ssub.s32 %s24, %s31
      %s64 = sor.u32 %s62, %s63
      %p65 = scmp.eq.s32.totalorder %s64, 0
      %s67 = sadd.s32 %s66, 1
      %s68 = scalar_select %p65, %s66, %s67
      %p71 = pneg %p65
      %p72 = scmp.eq.s32.totalorder %s16, 1
      %p73 = por %p71, %p72
      %p74 = scmp.ne.s32.totalorder %s66, %s69
      %p75 = scmp.eq.s32.totalorder %s16, 0
      %p76 = por %p74, %p75
      %p77 = scmp.ne.s32.totalorder %s66, %s69
      %p78 = scmp.eq.s32.totalorder %s21, 1
      %p79 = por %p77, %p78
      %p80 = scmp.ne.s32.totalorder %s69, %s70
      %p81 = scmp.eq.s32.totalorder %s21, 0
      %p82 = por %p80, %p81
      %p83 = scmp.ne.s32.totalorder %s69, %s70
      %p84 = scmp.eq.s32.totalorder %s22, 1
      %p85 = por %p83, %p84
      %p87 = scmp.ne.s32.totalorder %s70, %s86
      %p88 = scmp.eq.s32.totalorder %s22, 0
      %p89 = por %p87, %p88
      %s90 = ssub.s32 %s23, %s35
      %p91 = scmp.eq.s32.totalorder %s90, 0
      %s93 = sadd.s32 %s92, 1
      %s94 = scalar_select %p91, %s92, %s93
      %p97 = pneg %p91
      %p98 = scmp.eq.s32.totalorder %s16, 1
      %p99 = por %p97, %p98
      %p100 = scmp.ne.s32.totalorder %s92, %s95
      %p101 = scmp.eq.s32.totalorder %s16, 0
      %p102 = por %p100, %p101
      %p103 = scmp.ne.s32.totalorder %s92, %s95
      %p104 = scmp.eq.s32.totalorder %s21, 1
      %p105 = por %p103, %p104
      %p106 = scmp.ne.s32.totalorder %s95, %s96
      %p107 = scmp.eq.s32.totalorder %s21, 0
      %p108 = por %p106, %p107
      %p109 = scmp.ne.s32.totalorder %s95, %s96
      %p110 = scmp.eq.s32.totalorder %s22, 1
      %p111 = por %p109, %p110
      %p113 = scmp.ne.s32.totalorder %s96, %s112
      %p114 = scmp.eq.s32.totalorder %s22, 0
      %p115 = por %p113, %p114
      %s117 = sadd.s32 %s116, 1
      %p120 = scmp.eq.s32.totalorder %s16, 1
      %p121 = scmp.ne.s32.totalorder %s116, %s118
      %p122 = scmp.eq.s32.totalorder %s16, 0
      %p123 = por %p121, %p122
      %p124 = scmp.ne.s32.totalorder %s116, %s118
      %p125 = scmp.eq.s32.totalorder %s21, 1
      %p126 = por %p124, %p125
      %p127 = scmp.ne.s32.totalorder %s118, %s119
      %p128 = scmp.eq.s32.totalorder %s21, 0
      %p129 = por %p127, %p128
      %p130 = scmp.ne.s32.totalorder %s118, %s119
      %p131 = scmp.eq.s32.totalorder %s22, 1
      %p132 = por %p130, %p131
      %p134 = scmp.ne.s32.totalorder %s119, %s133
      %p135 = scmp.eq.s32.totalorder %s22, 0
      %p136 = por %p134, %p135
      %s138 = sadd.s32 %s137, 1
      %p141 = scmp.eq.s32.totalorder %s16, 1
      %p142 = scmp.ne.s32.totalorder %s137, %s139
      %p143 = scmp.eq.s32.totalorder %s16, 0
      %p144 = por %p142, %p143
      %p145 = scmp.ne.s32.totalorder %s137, %s139
      %p146 = scmp.eq.s32.totalorder %s21, 1
      %p147 = por %p145, %p146
      %p148 = scmp.ne.s32.totalorder %s139, %s140
      %p149 = scmp.eq.s32.totalorder %s21, 0
      %p150 = por %p148, %p149
      %p151 = scmp.ne.s32.totalorder %s139, %s140
      %p152 = scmp.eq.s32.totalorder %s22, 1
      %p153 = por %p151, %p152
      %p155 = scmp.ne.s32.totalorder %s140, %s154
      %p156 = scmp.eq.s32.totalorder %s22, 0
      %p157 = por %p155, %p156
      %s159 = sadd.s32 %s158, 1
      %p162 = scmp.eq.s32.totalorder %s16, 1
      %p163 = scmp.ne.s32.totalorder %s158, %s160
      %p164 = scmp.eq.s32.totalorder %s16, 0
      %p165 = por %p163, %p164
      %p166 = scmp.ne.s32.totalorder %s158, %s160
      %p167 = scmp.eq.s32.totalorder %s21, 1
      %p168 = por %p166, %p167
      %p169 = scmp.ne.s32.totalorder %s160, %s161
      %p170 = scmp.eq.s32.totalorder %s21, 0
      %p171 = por %p169, %p170
      %p172 = scmp.ne.s32.totalorder %s160, %s161
      %p173 = scmp.eq.s32.totalorder %s22, 1
      %p174 = por %p172, %p173
      %p176 = scmp.ne.s32.totalorder %s161, %s175
      %p177 = scmp.eq.s32.totalorder %s22, 0
      %p178 = por %p176, %p177
      %s180 = sadd.s32 %s179, 1
      %p183 = scmp.eq.s32.totalorder %s16, 1
      %p184 = scmp.ne.s32.totalorder %s179, %s181
      %p185 = scmp.eq.s32.totalorder %s16, 0
      %p186 = por %p184, %p185
      %p187 = scmp.ne.s32.totalorder %s179, %s181
      %p188 = scmp.eq.s32.totalorder %s21, 1
      %p189 = por %p187, %p188
      %p190 = scmp.ne.s32.totalorder %s181, %s182
      %p191 = scmp.eq.s32.totalorder %s21, 0
      %p192 = por %p190, %p191
      %p193 = scmp.ne.s32.totalorder %s181, %s182
      %p194 = scmp.eq.s32.totalorder %s22, 1
      %p195 = por %p193, %p194
      %p197 = scmp.ne.s32.totalorder %s182, %s196
      %p198 = scmp.eq.s32.totalorder %s22, 0
      %p199 = por %p197, %p198
      %s200 = ssub.s32 %s23, %s35
      %s201 = ssub.s32 %s24, %s31
      %s202 = sor.u32 %s200, %s201
      %p203 = scmp.eq.s32.totalorder %s202, 0
      %s205 = sadd.s32 %s204, 1
      %s206 = scalar_select %p203, %s204, %s205
      %p209 = pneg %p203
      %p210 = scmp.eq.s32.totalorder %s16, 1
      %p211 = por %p209, %p210
      %p212 = scmp.ne.s32.totalorder %s204, %s207
      %p213 = scmp.eq.s32.totalorder %s16, 0
      %p214 = por %p212, %p213
      %p215 = scmp.ne.s32.totalorder %s204, %s207
      %p216 = scmp.eq.s32.totalorder %s21, 1
      %p217 = por %p215, %p216
      %p218 = scmp.ne.s32.totalorder %s207, %s208
      %p219 = scmp.eq.s32.totalorder %s21, 0
      %p220 = por %p218, %p219
      %p221 = scmp.ne.s32.totalorder %s207, %s208
      %p222 = scmp.eq.s32.totalorder %s22, 1
      %p223 = por %p221, %p222
      %p225 = scmp.ne.s32.totalorder %s208, %s224
      %p226 = scmp.eq.s32.totalorder %s22, 0
      %p227 = por %p225, %p226
      %p228 = scmp.le.s32.totalorder 1, %s16
      %p229 = scmp.lt.s32.totalorder %s16, 3
      %p230 = pnand %p228, %p229
      %p231 = pneg %p230
      // Predicated region
      $region9: #{tpu_custom_call.1} parent=5 // pred_check
        _
      $region10: #{tpu_custom_call.1} parent=5 // pred_check_branch
        %233 = sbr.rel (%p230) target = $region12
      $region11: #{tpu_custom_call.1} parent=5 // pred_region
        %s234 = ssub.s32 %s16, 1
        // Predicated region
        $region13: #{tpu_custom_call.1} parent=11 // pred_check
          %p235 = pneg %p129
        $region14: #{tpu_custom_call.1} parent=11 // pred_check_branch
          %237 = sbr.rel (%p235) target = $region16
        $region15: #{tpu_custom_call.1} parent=11 // pred_region
          _
        $region16: #{tpu_custom_call.1} parent=11 // pred_fallthru
          _
        // Predicated region
        $region17: #{tpu_custom_call.1} parent=11 // pred_check
          %p238 = pneg %p150
        $region18: #{tpu_custom_call.1} parent=11 // pred_check_branch
          %240 = sbr.rel (%p238) target = $region20
        $region19: #{tpu_custom_call.1} parent=11 // pred_region
          _
        $region20: #{tpu_custom_call.1} parent=11 // pred_fallthru
          _
        // Predicated region
        $region21: #{tpu_custom_call.1} parent=11 // pred_check
          %p241 = pneg %p171
        $region22: #{tpu_custom_call.1} parent=11 // pred_check_branch
          %243 = sbr.rel (%p241) target = $region24
        $region23: #{tpu_custom_call.1} parent=11 // pred_region
          _
        $region24: #{tpu_custom_call.1} parent=11 // pred_fallthru
          _
        // Predicated region
        $region25: #{tpu_custom_call.1} parent=11 // pred_check
          %p244 = pneg %p192
        $region26: #{tpu_custom_call.1} parent=11 // pred_check_branch
          %246 = sbr.rel (%p244) target = $region28
        $region27: #{tpu_custom_call.1} parent=11 // pred_region
          _
        $region28: #{tpu_custom_call.1} parent=11 // pred_fallthru
          _
      $region12: #{tpu_custom_call.1} parent=5 // pred_fallthru
        _
      %p247 = scmp.lt.s32.totalorder %s16, 2
      // Predicated region
      $region29: #{tpu_custom_call.1} parent=5 // pred_check
        %p248 = pneg %p247
      $region30: #{tpu_custom_call.1} parent=5 // pred_check_branch
        %250 = sbr.rel (%p248) target = $region32
      $region31: #{tpu_custom_call.1} parent=5 // pred_region
        // Predicated region
        $region33: #{tpu_custom_call.1} parent=31 // pred_check
          %p251 = pneg %p48
        $region34: #{tpu_custom_call.1} parent=31 // pred_check_branch
          %253 = sbr.rel (%p251) target = $region36
        $region35: #{tpu_custom_call.1} parent=31 // pred_region
          %p254 = scmp.lt.s32.totalorder %s23, 1
          %s255 = scalar_select %p254, %s23, 1
          %s256 = smul.addr %s255, 2
          %s257 = smul.addr %s256, 4
          %s258 = scalar_lea.vmem %s0, %s257
        $region36: #{tpu_custom_call.1} parent=31 // pred_fallthru
          _
        // Predicated region
        $region37: #{tpu_custom_call.1} parent=31 // pred_check
          %p259 = pneg %p76
        $region38: #{tpu_custom_call.1} parent=31 // pred_check_branch
          %261 = sbr.rel (%p259) target = $region40
        $region39: #{tpu_custom_call.1} parent=31 // pred_region
          %s262 = smul.u32 2, %s24
          %p263 = scmp.lt.s32.totalorder %s23, 1
          %s264 = scalar_select %p263, %s23, 1
          %p265 = scmp.lt.s32.totalorder %s262, 1
          %s266 = scalar_select %p265, %s262, 1
          %s267 = smul.addr %s264, 2
          %s268 = sadd.s32 %s266, %s267
          %s269 = smul.addr %s268, 4
          %s270 = scalar_lea.vmem %s1, %s269
          %s271 = smul.u32 2, %s24
        $region40: #{tpu_custom_call.1} parent=31 // pred_fallthru
          _
        // Predicated region
        $region41: #{tpu_custom_call.1} parent=31 // pred_check
          %p272 = pneg %p102
        $region42: #{tpu_custom_call.1} parent=31 // pred_check_branch
          %274 = sbr.rel (%p272) target = $region44
        $region43: #{tpu_custom_call.1} parent=31 // pred_region
          %p275 = scmp.lt.s32.totalorder %s23, 1
          %s276 = scalar_select %p275, %s23, 1
          %s277 = smul.addr %s276, 2
          %s278 = smul.addr %s277, 4
          %s279 = scalar_lea.vmem %s2, %s278
        $region44: #{tpu_custom_call.1} parent=31 // pred_fallthru
          _
      $region32: #{tpu_custom_call.1} parent=5 // pred_fallthru
        _
      %p280 = scmp.le.s32.totalorder 1, %s16
      %p281 = scmp.lt.s32.totalorder %s16, 3
      %p282 = pnand %p280, %p281
      %p283 = pneg %p282
      // Predicated region
      $region45: #{tpu_custom_call.1} parent=5 // pred_check
        _
      $region46: #{tpu_custom_call.1} parent=5 // pred_check_branch
        %285 = sbr.rel (%p282) target = $region48
      $region47: #{tpu_custom_call.1} parent=5 // pred_region
        %s286 = ssub.s32 %s16, 1
        %p287 = scmp.lt.s32.totalorder %s25, 1
        %s288 = scalar_select %p287, %s25, 1
        %s289 = smul.addr %s288, 2
        %s290 = smul.addr %s289, 4
        %s291 = scalar_lea.vmem %s0, %s290
        %p292 = pneg %p54
        %p293 = pneg %p51
        %s294 = smul.u32 2, %s26
        %p295 = scmp.lt.s32.totalorder %s25, 1
        %s296 = scalar_select %p295, %s25, 1
        %p297 = scmp.lt.s32.totalorder %s294, 1
        %s298 = scalar_select %p297, %s294, 1
        %s299 = smul.addr %s296, 2
        %s300 = sadd.s32 %s298, %s299
        %s301 = smul.addr %s300, 4
        %s302 = scalar_lea.vmem %s1, %s301
        %p303 = pneg %p82
        %p304 = pneg %p79
        %p305 = scmp.lt.s32.totalorder %s25, 1
        %s306 = scalar_select %p305, %s25, 1
        %s307 = smul.addr %s306, 2
        %s308 = smul.addr %s307, 4
        %s309 = scalar_lea.vmem %s2, %s308
        %p310 = pneg %p108
        %p311 = pneg %p105
        %p312 = pneg %p129
        %p313 = pneg %p126
        %p314 = pneg %p150
        %p315 = pneg %p147
        %p316 = pneg %p171
        %p317 = pneg %p168
        %p318 = pneg %p192
        %p319 = pneg %p189
        %p320 = pneg %p220
        %p321 = pneg %p217
        %s322 = sand.u32 %s207, 1
        %s323 = scalar_lea.sflag [#allocation3], %s322
        %s324 = sand.u32 %s207, 1
        %s325 = smul.addr %s324, 8
        %s326 = scalar_lea.vmem [#allocation2], %s325
        %p327 = scmp.lt.s32.totalorder %s25, 1
        %s328 = scalar_select %p327, %s25, 1
        %s329 = smul.addr %s328, 2
        %s330 = smul.addr %s329, 4
        %s331 = scalar_lea.vmem %s0, %s330
        %s332 = smul.u32 2, %s26
        %p333 = scmp.lt.s32.totalorder %s25, 1
        %s334 = scalar_select %p333, %s25, 1
        %p335 = scmp.lt.s32.totalorder %s332, 1
        %s336 = scalar_select %p335, %s332, 1
        %s337 = smul.addr %s334, 2
        %s338 = sadd.s32 %s336, %s337
        %s339 = smul.addr %s338, 4
        %s340 = scalar_lea.vmem %s1, %s339
        %s341 = smul.u32 2, %s26
        %p342 = scmp.lt.s32.totalorder %s25, 1
        %s343 = scalar_select %p342, %s25, 1
        %s344 = smul.addr %s343, 2
        %s345 = smul.addr %s344, 4
        %s346 = scalar_lea.vmem %s2, %s345
        %s347 = smul.u32 2, %s26
        %v349 = vld [vmem:[%s331] sm:$0xf]
        %v350 = vld [vmem:[%s331 + $0x4] sm:$0xf]
        %v351 = vld [vmem:[%s340] sm:$0xf]
        %v352 = vld [vmem:[%s340 + $0x4] sm:$0xf]
        %v353 = vld [vmem:[%s346] sm:$0xf]
        %v354 = vld [vmem:[%s346 + $0x4] sm:$0xf]
        %v355 = vld [vmem:[%s3] sm:$0xf]
        %v356 = vld [vmem:[%s3 + $0x4] sm:$0xf]
        %v357 = vld [vmem:[%s3 + $0x8] sm:$0xf]
        %v358 = vld [vmem:[%s3 + $0xc] sm:$0xf]
        %v359 = vld [vmem:[%s3 + $0x10] sm:$0xf]
        %v360 = vld [vmem:[%s3 + $0x14] sm:$0xf]
        %v361 = vld [vmem:[%s3 + $0x18] sm:$0xf]
        %v362 = vld [vmem:[%s3 + $0x1c] sm:$0xf]
        %v363 = vld [vmem:[%s3 + $0x20] sm:$0xf]
        %v364 = vld [vmem:[%s3 + $0x24] sm:$0xf]
        %v365 = vld [vmem:[%s3 + $0x28] sm:$0xf]
        %v366 = vld [vmem:[%s3 + $0x2c] sm:$0xf]
        %v367 = vld [vmem:[%s3 + $0x30] sm:$0xf]
        %v368 = vld [vmem:[%s3 + $0x34] sm:$0xf]
        %v369 = vld [vmem:[%s3 + $0x38] sm:$0xf]
        %v370 = vld [vmem:[%s3 + $0x3c] sm:$0xf]
        %v371 = vld [vmem:[%s3 + $0x40] sm:$0xf]
        %v372 = vld [vmem:[%s3 + $0x44] sm:$0xf]
        %v373 = vld [vmem:[%s3 + $0x48] sm:$0xf]
        %v374 = vld [vmem:[%s3 + $0x4c] sm:$0xf]
        %v375 = vld [vmem:[%s3 + $0x50] sm:$0xf]
        %v376 = vld [vmem:[%s3 + $0x54] sm:$0xf]
        %v377 = vld [vmem:[%s3 + $0x58] sm:$0xf]
        %v378 = vld [vmem:[%s3 + $0x5c] sm:$0xf]
        %v379 = vld [vmem:[%s3 + $0x60] sm:$0xf]
        %v380 = vld [vmem:[%s3 + $0x64] sm:$0xf]
        %v381 = vld [vmem:[%s3 + $0x68] sm:$0xf]
        %v382 = vld [vmem:[%s3 + $0x6c] sm:$0xf]
        %v383 = vld [vmem:[%s3 + $0x70] sm:$0xf]
        %v384 = vld [vmem:[%s3 + $0x74] sm:$0xf]
        %v385 = vld [vmem:[%s3 + $0x78] sm:$0xf]
        %v386 = vld [vmem:[%s3 + $0x7c] sm:$0xf]
        %v387 = vld [vmem:[%s3 + $0x80] sm:$0xf]
        %v388 = vld [vmem:[%s3 + $0x84] sm:$0xf]
        %v389 = vld [vmem:[%s3 + $0x88] sm:$0xf]
        %v390 = vld [vmem:[%s3 + $0x8c] sm:$0xf]
        %v391 = vld [vmem:[%s3 + $0x90] sm:$0xf]
        %v392 = vld [vmem:[%s3 + $0x94] sm:$0xf]
        %v393 = vld [vmem:[%s3 + $0x98] sm:$0xf]
        %v394 = vld [vmem:[%s3 + $0x9c] sm:$0xf]
        %v395 = vld [vmem:[%s3 + $0xa0] sm:$0xf]
        %v396 = vld [vmem:[%s3 + $0xa4] sm:$0xf]
        %v397 = vld [vmem:[%s3 + $0xa8] sm:$0xf]
        %v398 = vld [vmem:[%s3 + $0xac] sm:$0xf]
        %v399 = vld [vmem:[%s3 + $0xb0] sm:$0xf]
        %v400 = vld [vmem:[%s3 + $0xb4] sm:$0xf]
        %v401 = vld [vmem:[%s3 + $0xb8] sm:$0xf]
        %v402 = vld [vmem:[%s3 + $0xbc] sm:$0xf]
        %v403 = vld [vmem:[%s3 + $0xc0] sm:$0xf]
        %v404 = vld [vmem:[%s3 + $0xc4] sm:$0xf]
        %v405 = vld [vmem:[%s3 + $0xc8] sm:$0xf]
        %v406 = vld [vmem:[%s3 + $0xcc] sm:$0xf]
        %v407 = vld [vmem:[%s3 + $0xd0] sm:$0xf]
        %v408 = vld [vmem:[%s3 + $0xd4] sm:$0xf]
        %v409 = vld [vmem:[%s3 + $0xd8] sm:$0xf]
        %v410 = vld [vmem:[%s3 + $0xdc] sm:$0xf]
        %v411 = vld [vmem:[%s3 + $0xe0] sm:$0xf]
        %v412 = vld [vmem:[%s3 + $0xe4] sm:$0xf]
        %v413 = vld [vmem:[%s3 + $0xe8] sm:$0xf]
        %v414 = vld [vmem:[%s3 + $0xec] sm:$0xf]
        %v415 = vld [vmem:[%s3 + $0xf0] sm:$0xf]
        %v416 = vld [vmem:[%s3 + $0xf4] sm:$0xf]
        %v417 = vld [vmem:[%s3 + $0xf8] sm:$0xf]
        %v418 = vld [vmem:[%s3 + $0xfc] sm:$0xf]
        %v421 = vunpack.c.l.b16 %v351
        %v422 = vunpack.c.l.b16 %v352
        %v423 = vpack.c.b16 %v422, %v421
        %v441 = vunpack.c.l.b16 %v355
        %v442 = vunpack.c.l.b16 %v356
        %v443 = vunpack.c.l.b16 %v357
        %v444 = vunpack.c.l.b16 %v358
        %v445 = vunpack.c.l.b16 %v359
        %v446 = vunpack.c.l.b16 %v360
        %v447 = vunpack.c.l.b16 %v361
        %v448 = vunpack.c.l.b16 %v362
        %v449 = vunpack.c.l.b16 %v363
        %v450 = vunpack.c.l.b16 %v364
        %v451 = vunpack.c.l.b16 %v365
        %v452 = vunpack.c.l.b16 %v366
        %v453 = vunpack.c.l.b16 %v367
        %v454 = vunpack.c.l.b16 %v368
        %v455 = vunpack.c.l.b16 %v369
        %v456 = vunpack.c.l.b16 %v370
        %v457 = vpack.c.b16 %v442, %v441
        %v458 = vpack.c.b16 %v444, %v443
        %v459 = vpack.c.b16 %v446, %v445
        %v460 = vpack.c.b16 %v448, %v447
        %v461 = vpack.c.b16 %v450, %v449
        %v462 = vpack.c.b16 %v452, %v451
        %v463 = vpack.c.b16 %v454, %v453
        %v464 = vpack.c.b16 %v456, %v455
        %473 = vmatprep.subr.bf16.mxu0 0
        %474 = vmatpush1.bf16.msra.mxu0 %v457
        %475 = vmatprep.subr.bf16.mxu0 0
        %476 = vmatpush1.bf16.msra.mxu0 %v458
        %477 = vmatprep.subr.bf16.mxu0 0
        %478 = vmatpush1.bf16.msra.mxu0 %v459
        %479 = vmatprep.subr.bf16.mxu0 0
        %480 = vmatpush1.bf16.msra.mxu0 %v460
        %481 = vmatprep.subr.bf16.mxu0 0
        %482 = vmatpush1.bf16.msra.mxu0 %v461
        %483 = vmatprep.subr.bf16.mxu0 0
        %484 = vmatpush1.bf16.msra.mxu0 %v462
        %485 = vmatprep.subr.bf16.mxu0 0
        %486 = vmatpush1.bf16.msra.mxu0 %v463
        %487 = vmatprep.subr.bf16.mxu0 0
        %488 = vmatpush1.bf16.msra.mxu0 %v464
        %489 = vmatprep.subr.bf16.mxu0 0
        %490 = vmatpush1.bf16.msra.mxu0 0
        %491 = vmatprep.subr.bf16.mxu0 0
        %492 = vmatpush1.bf16.msra.mxu0 0
        %493 = vmatprep.subr.bf16.mxu0 0
        %494 = vmatpush1.bf16.msra.mxu0 0
        %495 = vmatprep.subr.bf16.mxu0 0
        %496 = vmatpush1.bf16.msra.mxu0 0
        %497 = vmatprep.subr.bf16.mxu0 0
        %498 = vmatpush1.bf16.msra.mxu0 0
        %499 = vmatprep.subr.bf16.mxu0 0
        %500 = vmatpush1.bf16.msra.mxu0 0
        %501 = vmatprep.subr.bf16.mxu0 0
        %502 = vmatpush1.bf16.msra.mxu0 0
        %503 = vmatprep.subr.bf16.mxu0 0
        %504 = vmatpush1.bf16.msra.mxu0 0
        %505 = vmatprep.mubr.bf16.mxu0 0
        %506 = vmatmul.mubr.bf16.gmra.mrb[0].mxu0 %v423
        %v507 = vpop.f32.mrb[0].mxu0
        %v508 = vadd.f32 0.0, %v507
        %v509 = vpop.f32.mrb[0].mxu0
        %v510 = vpop.f32.mrb[0].mxu0
        %v511 = vadd.f32 0.0, %v510
        %v512 = vpop.f32.mrb[0].mxu0
        %513 = vdwg.mxu0
        %v530 = vunpack.c.l.b16 %v371
        %v531 = vunpack.c.l.b16 %v372
        %v532 = vunpack.c.l.b16 %v373
        %v533 = vunpack.c.l.b16 %v374
        %v534 = vunpack.c.l.b16 %v375
        %v535 = vunpack.c.l.b16 %v376
        %v536 = vunpack.c.l.b16 %v377
        %v537 = vunpack.c.l.b16 %v378
        %v538 = vunpack.c.l.b16 %v379
        %v539 = vunpack.c.l.b16 %v380
        %v540 = vunpack.c.l.b16 %v381
        %v541 = vunpack.c.l.b16 %v382
        %v542 = vunpack.c.l.b16 %v383
        %v543 = vunpack.c.l.b16 %v384
        %v544 = vunpack.c.l.b16 %v385
        %v545 = vunpack.c.l.b16 %v386
        %v546 = vpack.c.b16 %v531, %v530
        %v547 = vpack.c.b16 %v533, %v532
        %v548 = vpack.c.b16 %v535, %v534
        %v549 = vpack.c.b16 %v537, %v536
        %v550 = vpack.c.b16 %v539, %v538
        %v551 = vpack.c.b16 %v541, %v540
        %v552 = vpack.c.b16 %v543, %v542
        %v553 = vpack.c.b16 %v545, %v544
        %562 = vmatprep.subr.bf16.mxu0 0
        %563 = vmatpush1.bf16.msra.mxu0 %v546
        %564 = vmatprep.subr.bf16.mxu0 0
        %565 = vmatpush1.bf16.msra.mxu0 %v547
        %566 = vmatprep.subr.bf16.mxu0 0
        %567 = vmatpush1.bf16.msra.mxu0 %v548
        %568 = vmatprep.subr.bf16.mxu0 0
        %569 = vmatpush1.bf16.msra.mxu0 %v549
        %570 = vmatprep.subr.bf16.mxu0 0
        %571 = vmatpush1.bf16.msra.mxu0 %v550
        %572 = vmatprep.subr.bf16.mxu0 0
        %573 = vmatpush1.bf16.msra.mxu0 %v551
        %574 = vmatprep.subr.bf16.mxu0 0
        %575 = vmatpush1.bf16.msra.mxu0 %v552
        %576 = vmatprep.subr.bf16.mxu0 0
        %577 = vmatpush1.bf16.msra.mxu0 %v553
        %578 = vmatprep.subr.bf16.mxu0 0
        %579 = vmatpush1.bf16.msra.mxu0 0
        %580 = vmatprep.subr.bf16.mxu0 0
        %581 = vmatpush1.bf16.msra.mxu0 0
        %582 = vmatprep.subr.bf16.mxu0 0
        %583 = vmatpush1.bf16.msra.mxu0 0
        %584 = vmatprep.subr.bf16.mxu0 0
        %585 = vmatpush1.bf16.msra.mxu0 0
        %586 = vmatprep.subr.bf16.mxu0 0
        %587 = vmatpush1.bf16.msra.mxu0 0
        %588 = vmatprep.subr.bf16.mxu0 0
        %589 = vmatpush1.bf16.msra.mxu0 0
        %590 = vmatprep.subr.bf16.mxu0 0
        %591 = vmatpush1.bf16.msra.mxu0 0
        %592 = vmatprep.subr.bf16.mxu0 0
        %593 = vmatpush1.bf16.msra.mxu0 0
        %594 = vmatprep.mubr.bf16.mxu0 0
        %595 = vmatmul.mubr.bf16.gmra.mrb[0].mxu0 %v423
        %v596 = vpop.f32.mrb[0].mxu0
        %v597 = vadd.f32 0.0, %v596
        %v598 = vpop.f32.mrb[0].mxu0
        %v599 = vpop.f32.mrb[0].mxu0
        %v600 = vadd.f32 0.0, %v599
        %v601 = vpop.f32.mrb[0].mxu0
        %602 = vdwg.mxu0
        %v619 = vunpack.c.l.b16 %v387
        %v620 = vunpack.c.l.b16 %v388
        %v621 = vunpack.c.l.b16 %v389
        %v622 = vunpack.c.l.b16 %v390
        %v623 = vunpack.c.l.b16 %v391
        %v624 = vunpack.c.l.b16 %v392
        %v625 = vunpack.c.l.b16 %v393
        %v626 = vunpack.c.l.b16 %v394
        %v627 = vunpack.c.l.b16 %v395
        %v628 = vunpack.c.l.b16 %v396
        %v629 = vunpack.c.l.b16 %v397
        %v630 = vunpack.c.l.b16 %v398
        %v631 = vunpack.c.l.b16 %v399
        %v632 = vunpack.c.l.b16 %v400
        %v633 = vunpack.c.l.b16 %v401
        %v634 = vunpack.c.l.b16 %v402
        %v635 = vpack.c.b16 %v620, %v619
        %v636 = vpack.c.b16 %v622, %v621
        %v637 = vpack.c.b16 %v624, %v623
        %v638 = vpack.c.b16 %v626, %v625
        %v639 = vpack.c.b16 %v628, %v627
        %v640 = vpack.c.b16 %v630, %v629
        %v641 = vpack.c.b16 %v632, %v631
        %v642 = vpack.c.b16 %v634, %v633
        %651 = vmatprep.subr.bf16.mxu0 0
        %652 = vmatpush1.bf16.msra.mxu0 %v635
        %653 = vmatprep.subr.bf16.mxu0 0
        %654 = vmatpush1.bf16.msra.mxu0 %v636
        %655 = vmatprep.subr.bf16.mxu0 0
        %656 = vmatpush1.bf16.msra.mxu0 %v637
        %657 = vmatprep.subr.bf16.mxu0 0
        %658 = vmatpush1.bf16.msra.mxu0 %v638
        %659 = vmatprep.subr.bf16.mxu0 0
        %660 = vmatpush1.bf16.msra.mxu0 %v639
        %661 = vmatprep.subr.bf16.mxu0 0
        %662 = vmatpush1.bf16.msra.mxu0 %v640
        %663 = vmatprep.subr.bf16.mxu0 0
        %664 = vmatpush1.bf16.msra.mxu0 %v641
        %665 = vmatprep.subr.bf16.mxu0 0
        %666 = vmatpush1.bf16.msra.mxu0 %v642
        %667 = vmatprep.subr.bf16.mxu0 0
        %668 = vmatpush1.bf16.msra.mxu0 0
        %669 = vmatprep.subr.bf16.mxu0 0
        %670 = vmatpush1.bf16.msra.mxu0 0
        %671 = vmatprep.subr.bf16.mxu0 0
        %672 = vmatpush1.bf16.msra.mxu0 0
        %673 = vmatprep.subr.bf16.mxu0 0
        %674 = vmatpush1.bf16.msra.mxu0 0
        %675 = vmatprep.subr.bf16.mxu0 0
        %676 = vmatpush1.bf16.msra.mxu0 0
        %677 = vmatprep.subr.bf16.mxu0 0
        %678 = vmatpush1.bf16.msra.mxu0 0
        %679 = vmatprep.subr.bf16.mxu0 0
        %680 = vmatpush1.bf16.msra.mxu0 0
        %681 = vmatprep.subr.bf16.mxu0 0
        %682 = vmatpush1.bf16.msra.mxu0 0
        %683 = vmatprep.mubr.bf16.mxu0 0
        %684 = vmatmul.mubr.bf16.gmra.mrb[0].mxu0 %v423
        %v685 = vpop.f32.mrb[0].mxu0
        %v686 = vadd.f32 0.0, %v685
        %v687 = vpop.f32.mrb[0].mxu0
        %v688 = vpop.f32.mrb[0].mxu0
        %v689 = vadd.f32 0.0, %v688
        %v690 = vpop.f32.mrb[0].mxu0
        %691 = vdwg.mxu0
        %v708 = vunpack.c.l.b16 %v403
        %v709 = vunpack.c.l.b16 %v404
        %v710 = vunpack.c.l.b16 %v405
        %v711 = vunpack.c.l.b16 %v406
        %v712 = vunpack.c.l.b16 %v407
        %v713 = vunpack.c.l.b16 %v408
        %v714 = vunpack.c.l.b16 %v409
        %v715 = vunpack.c.l.b16 %v410
        %v716 = vunpack.c.l.b16 %v411
        %v717 = vunpack.c.l.b16 %v412
        %v718 = vunpack.c.l.b16 %v413
        %v719 = vunpack.c.l.b16 %v414
        %v720 = vunpack.c.l.b16 %v415
        %v721 = vunpack.c.l.b16 %v416
        %v722 = vunpack.c.l.b16 %v417
        %v723 = vunpack.c.l.b16 %v418
        %v724 = vpack.c.b16 %v709, %v708
        %v725 = vpack.c.b16 %v711, %v710
        %v726 = vpack.c.b16 %v713, %v712
        %v727 = vpack.c.b16 %v715, %v714
        %v728 = vpack.c.b16 %v717, %v716
        %v729 = vpack.c.b16 %v719, %v718
        %v730 = vpack.c.b16 %v721, %v720
        %v731 = vpack.c.b16 %v723, %v722
        %740 = vmatprep.subr.bf16.mxu0 0
        %741 = vmatpush1.bf16.msra.mxu0 %v724
        %742 = vmatprep.subr.bf16.mxu0 0
        %743 = vmatpush1.bf16.msra.mxu0 %v725
        %744 = vmatprep.subr.bf16.mxu0 0
        %745 = vmatpush1.bf16.msra.mxu0 %v726
        %746 = vmatprep.subr.bf16.mxu0 0
        %747 = vmatpush1.bf16.msra.mxu0 %v727
        %748 = vmatprep.subr.bf16.mxu0 0
        %749 = vmatpush1.bf16.msra.mxu0 %v728
        %750 = vmatprep.subr.bf16.mxu0 0
        %751 = vmatpush1.bf16.msra.mxu0 %v729
        %752 = vmatprep.subr.bf16.mxu0 0
        %753 = vmatpush1.bf16.msra.mxu0 %v730
        %754 = vmatprep.subr.bf16.mxu0 0
        %755 = vmatpush1.bf16.msra.mxu0 %v731
        %756 = vmatprep.subr.bf16.mxu0 0
        %757 = vmatpush1.bf16.msra.mxu0 0
        %758 = vmatprep.subr.bf16.mxu0 0
        %759 = vmatpush1.bf16.msra.mxu0 0
        %760 = vmatprep.subr.bf16.mxu0 0
        %761 = vmatpush1.bf16.msra.mxu0 0
        %762 = vmatprep.subr.bf16.mxu0 0
        %763 = vmatpush1.bf16.msra.mxu0 0
        %764 = vmatprep.subr.bf16.mxu0 0
        %765 = vmatpush1.bf16.msra.mxu0 0
        %766 = vmatprep.subr.bf16.mxu0 0
        %767 = vmatpush1.bf16.msra.mxu0 0
        %768 = vmatprep.subr.bf16.mxu0 0
        %769 = vmatpush1.bf16.msra.mxu0 0
        %770 = vmatprep.subr.bf16.mxu0 0
        %771 = vmatpush1.bf16.msra.mxu0 0
        %772 = vmatprep.mubr.bf16.mxu0 0
        %773 = vmatmul.mubr.bf16.gmra.mrb[0].mxu0 %v423
        %v774 = vpop.f32.mrb[0].mxu0
        %v775 = vadd.f32 0.0, %v774
        %v776 = vpop.f32.mrb[0].mxu0
        %v777 = vpop.f32.mrb[0].mxu0
        %v778 = vadd.f32 0.0, %v777
        %v779 = vpop.f32.mrb[0].mxu0
        %780 = vdwg.mxu0
        %v781 = vpack.c.bf16 %v511, %v508
        %v782 = vpack.c.bf16 %v600, %v597
        %v783 = vpack.c.bf16 %v689, %v686
        %v784 = vpack.c.bf16 %v778, %v775
        %v785 = vld [vmem:[%s4] sm:$0xf]
        %v786 = vld [vmem:[%s4 + $0x4] sm:$0xf]
        %v787 = vld [vmem:[%s4 + $0x8] sm:$0xf]
        %v788 = vld [vmem:[%s4 + $0xc] sm:$0xf]
        %v789 = vld [vmem:[%s4 + $0x10] sm:$0xf]
        %v790 = vld [vmem:[%s4 + $0x14] sm:$0xf]
        %v791 = vld [vmem:[%s4 + $0x18] sm:$0xf]
        %v792 = vld [vmem:[%s4 + $0x1c] sm:$0xf]
        %v793 = vld [vmem:[%s4 + $0x20] sm:$0xf]
        %v794 = vld [vmem:[%s4 + $0x24] sm:$0xf]
        %v795 = vld [vmem:[%s4 + $0x28] sm:$0xf]
        %v796 = vld [vmem:[%s4 + $0x2c] sm:$0xf]
        %v797 = vld [vmem:[%s4 + $0x30] sm:$0xf]
        %v798 = vld [vmem:[%s4 + $0x34] sm:$0xf]
        %v799 = vld [vmem:[%s4 + $0x38] sm:$0xf]
        %v800 = vld [vmem:[%s4 + $0x3c] sm:$0xf]
        %v801 = vld [vmem:[%s4 + $0x40] sm:$0xf]
        %v802 = vld [vmem:[%s4 + $0x44] sm:$0xf]
        %v803 = vld [vmem:[%s4 + $0x48] sm:$0xf]
        %v804 = vld [vmem:[%s4 + $0x4c] sm:$0xf]
        %v805 = vld [vmem:[%s4 + $0x50] sm:$0xf]
        %v806 = vld [vmem:[%s4 + $0x54] sm:$0xf]
        %v807 = vld [vmem:[%s4 + $0x58] sm:$0xf]
        %v808 = vld [vmem:[%s4 + $0x5c] sm:$0xf]
        %v809 = vld [vmem:[%s4 + $0x60] sm:$0xf]
        %v810 = vld [vmem:[%s4 + $0x64] sm:$0xf]
        %v811 = vld [vmem:[%s4 + $0x68] sm:$0xf]
        %v812 = vld [vmem:[%s4 + $0x6c] sm:$0xf]
        %v813 = vld [vmem:[%s4 + $0x70] sm:$0xf]
        %v814 = vld [vmem:[%s4 + $0x74] sm:$0xf]
        %v815 = vld [vmem:[%s4 + $0x78] sm:$0xf]
        %v816 = vld [vmem:[%s4 + $0x7c] sm:$0xf]
        %v817 = vld [vmem:[%s4 + $0x80] sm:$0xf]
        %v818 = vld [vmem:[%s4 + $0x84] sm:$0xf]
        %v819 = vld [vmem:[%s4 + $0x88] sm:$0xf]
        %v820 = vld [vmem:[%s4 + $0x8c] sm:$0xf]
        %v821 = vld [vmem:[%s4 + $0x90] sm:$0xf]
        %v822 = vld [vmem:[%s4 + $0x94] sm:$0xf]
        %v823 = vld [vmem:[%s4 + $0x98] sm:$0xf]
        %v824 = vld [vmem:[%s4 + $0x9c] sm:$0xf]
        %v825 = vld [vmem:[%s4 + $0xa0] sm:$0xf]
        %v826 = vld [vmem:[%s4 + $0xa4] sm:$0xf]
        %v827 = vld [vmem:[%s4 + $0xa8] sm:$0xf]
        %v828 = vld [vmem:[%s4 + $0xac] sm:$0xf]
        %v829 = vld [vmem:[%s4 + $0xb0] sm:$0xf]
        %v830 = vld [vmem:[%s4 + $0xb4] sm:$0xf]
        %v831 = vld [vmem:[%s4 + $0xb8] sm:$0xf]
        %v832 = vld [vmem:[%s4 + $0xbc] sm:$0xf]
        %v833 = vld [vmem:[%s4 + $0xc0] sm:$0xf]
        %v834 = vld [vmem:[%s4 + $0xc4] sm:$0xf]
        %v835 = vld [vmem:[%s4 + $0xc8] sm:$0xf]
        %v836 = vld [vmem:[%s4 + $0xcc] sm:$0xf]
        %v837 = vld [vmem:[%s4 + $0xd0] sm:$0xf]
        %v838 = vld [vmem:[%s4 + $0xd4] sm:$0xf]
        %v839 = vld [vmem:[%s4 + $0xd8] sm:$0xf]
        %v840 = vld [vmem:[%s4 + $0xdc] sm:$0xf]
        %v841 = vld [vmem:[%s4 + $0xe0] sm:$0xf]
        %v842 = vld [vmem:[%s4 + $0xe4] sm:$0xf]
        %v843 = vld [vmem:[%s4 + $0xe8] sm:$0xf]
        %v844 = vld [vmem:[%s4 + $0xec] sm:$0xf]
        %v845 = vld [vmem:[%s4 + $0xf0] sm:$0xf]
        %v846 = vld [vmem:[%s4 + $0xf4] sm:$0xf]
        %v847 = vld [vmem:[%s4 + $0xf8] sm:$0xf]
        %v848 = vld [vmem:[%s4 + $0xfc] sm:$0xf]
        %v851 = vunpack.c.l.b16 %v349
        %v852 = vunpack.c.l.b16 %v350
        %v853 = vpack.c.b16 %v852, %v851
        %v871 = vunpack.c.l.b16 %v785
        %v872 = vunpack.c.l.b16 %v786
        %v873 = vunpack.c.l.b16 %v787
        %v874 = vunpack.c.l.b16 %v788
        %v875 = vunpack.c.l.b16 %v789
        %v876 = vunpack.c.l.b16 %v790
        %v877 = vunpack.c.l.b16 %v791
        %v878 = vunpack.c.l.b16 %v792
        %v879 = vunpack.c.l.b16 %v793
        %v880 = vunpack.c.l.b16 %v794
        %v881 = vunpack.c.l.b16 %v795
        %v882 = vunpack.c.l.b16 %v796
        %v883 = vunpack.c.l.b16 %v797
        %v884 = vunpack.c.l.b16 %v798
        %v885 = vunpack.c.l.b16 %v799
        %v886 = vunpack.c.l.b16 %v800
        %v887 = vpack.c.b16 %v872, %v871
        %v888 = vpack.c.b16 %v874, %v873
        %v889 = vpack.c.b16 %v876, %v875
        %v890 = vpack.c.b16 %v878, %v877
        %v891 = vpack.c.b16 %v880, %v879
        %v892 = vpack.c.b16 %v882, %v881
        %v893 = vpack.c.b16 %v884, %v883
        %v894 = vpack.c.b16 %v886, %v885
        %903 = vmatprep.subr.bf16.mxu0 0
        %904 = vmatpush1.bf16.msra.mxu0 %v887
        %905 = vmatprep.subr.bf16.mxu0 0
        %906 = vmatpush1.bf16.msra.mxu0 %v888
        %907 = vmatprep.subr.bf16.mxu0 0
        %908 = vmatpush1.bf16.msra.mxu0 %v889
        %909 = vmatprep.subr.bf16.mxu0 0
        %910 = vmatpush1.bf16.msra.mxu0 %v890
        %911 = vmatprep.subr.bf16.mxu0 0
        %912 = vmatpush1.bf16.msra.mxu0 %v891
        %913 = vmatprep.subr.bf16.mxu0 0
        %914 = vmatpush1.bf16.msra.mxu0 %v892
        %915 = vmatprep.subr.bf16.mxu0 0
        %916 = vmatpush1.bf16.msra.mxu0 %v893
        %917 = vmatprep.subr.bf16.mxu0 0
        %918 = vmatpush1.bf16.msra.mxu0 %v894
        %919 = vmatprep.subr.bf16.mxu0 0
        %920 = vmatpush1.bf16.msra.mxu0 0
        %921 = vmatprep.subr.bf16.mxu0 0
        %922 = vmatpush1.bf16.msra.mxu0 0
        %923 = vmatprep.subr.bf16.mxu0 0
        %924 = vmatpush1.bf16.msra.mxu0 0
        %925 = vmatprep.subr.bf16.mxu0 0
        %926 = vmatpush1.bf16.msra.mxu0 0
        %927 = vmatprep.subr.bf16.mxu0 0
        %928 = vmatpush1.bf16.msra.mxu0 0
        %929 = vmatprep.subr.bf16.mxu0 0
        %930 = vmatpush1.bf16.msra.mxu0 0
        %931 = vmatprep.subr.bf16.mxu0 0
        %932 = vmatpush1.bf16.msra.mxu0 0
        %933 = vmatprep.subr.bf16.mxu0 0
        %934 = vmatpush1.bf16.msra.mxu0 0
        %935 = vmatprep.mubr.bf16.mxu0 0
        %936 = vmatmul.mubr.bf16.gmra.mrb[0].mxu0 %v853
        %v937 = vpop.f32.mrb[0].mxu0
        %v938 = vadd.f32 0.0, %v937
        %v939 = vpop.f32.mrb[0].mxu0
        %v940 = vpop.f32.mrb[0].mxu0
        %v941 = vadd.f32 0.0, %v940
        %v942 = vpop.f32.mrb[0].mxu0
        %943 = vdwg.mxu0
        %v960 = vunpack.c.l.b16 %v801
        %v961 = vunpack.c.l.b16 %v802
        %v962 = vunpack.c.l.b16 %v803
        %v963 = vunpack.c.l.b16 %v804
        %v964 = vunpack.c.l.b16 %v805
        %v965 = vunpack.c.l.b16 %v806
        %v966 = vunpack.c.l.b16 %v807
        %v967 = vunpack.c.l.b16 %v808
        %v968 = vunpack.c.l.b16 %v809
        %v969 = vunpack.c.l.b16 %v810
        %v970 = vunpack.c.l.b16 %v811
        %v971 = vunpack.c.l.b16 %v812
        %v972 = vunpack.c.l.b16 %v813
        %v973 = vunpack.c.l.b16 %v814
        %v974 = vunpack.c.l.b16 %v815
        %v975 = vunpack.c.l.b16 %v816
        %v976 = vpack.c.b16 %v961, %v960
        %v977 = vpack.c.b16 %v963, %v962
        %v978 = vpack.c.b16 %v965, %v964
        %v979 = vpack.c.b16 %v967, %v966
        %v980 = vpack.c.b16 %v969, %v968
        %v981 = vpack.c.b16 %v971, %v970
        %v982 = vpack.c.b16 %v973, %v972
        %v983 = vpack.c.b16 %v975, %v974
        %992 = vmatprep.subr.bf16.mxu0 0
        %993 = vmatpush1.bf16.msra.mxu0 %v976
        %994 = vmatprep.subr.bf16.mxu0 0
        %995 = vmatpush1.bf16.msra.mxu0 %v977
        %996 = vmatprep.subr.bf16.mxu0 0
        %997 = vmatpush1.bf16.msra.mxu0 %v978
        %998 = vmatprep.subr.bf16.mxu0 0
        %999 = vmatpush1.bf16.msra.mxu0 %v979
        %1000 = vmatprep.subr.bf16.mxu0 0
        %1001 = vmatpush1.bf16.msra.mxu0 %v980
        %1002 = vmatprep.subr.bf16.mxu0 0
        %1003 = vmatpush1.bf16.msra.mxu0 %v981
        %1004 = vmatprep.subr.bf16.mxu0 0
        %1005 = vmatpush1.bf16.msra.mxu0 %v982
        %1006 = vmatprep.subr.bf16.mxu0 0
        %1007 = vmatpush1.bf16.msra.mxu0 %v983
        %1008 = vmatprep.subr.bf16.mxu0 0
        %1009 = vmatpush1.bf16.msra.mxu0 0
        %1010 = vmatprep.subr.bf16.mxu0 0
        %1011 = vmatpush1.bf16.msra.mxu0 0
        %1012 = vmatprep.subr.bf16.mxu0 0
        %1013 = vmatpush1.bf16.msra.mxu0 0
        %1014 = vmatprep.subr.bf16.mxu0 0
        %1015 = vmatpush1.bf16.msra.mxu0 0
        %1016 = vmatprep.subr.bf16.mxu0 0
        %1017 = vmatpush1.bf16.msra.mxu0 0
        %1018 = vmatprep.subr.bf16.mxu0 0
        %1019 = vmatpush1.bf16.msra.mxu0 0
        %1020 = vmatprep.subr.bf16.mxu0 0
        %1021 = vmatpush1.bf16.msra.mxu0 0
        %1022 = vmatprep.subr.bf16.mxu0 0
        %1023 = vmatpush1.bf16.msra.mxu0 0
        %1024 = vmatprep.mubr.bf16.mxu0 0
        %1025 = vmatmul.mubr.bf16.gmra.mrb[0].mxu0 %v853
        %v1026 = vpop.f32.mrb[0].mxu0
        %v1027 = vadd.f32 0.0, %v1026
        %v1028 = vpop.f32.mrb[0].mxu0
        %v1029 = vpop.f32.mrb[0].mxu0
        %v1030 = vadd.f32 0.0, %v1029
        %v1031 = vpop.f32.mrb[0].mxu0
        %1032 = vdwg.mxu0
        %v1049 = vunpack.c.l.b16 %v817
        %v1050 = vunpack.c.l.b16 %v818
        %v1051 = vunpack.c.l.b16 %v819
        %v1052 = vunpack.c.l.b16 %v820
        %v1053 = vunpack.c.l.b16 %v821
        %v1054 = vunpack.c.l.b16 %v822
        %v1055 = vunpack.c.l.b16 %v823
        %v1056 = vunpack.c.l.b16 %v824
        %v1057 = vunpack.c.l.b16 %v825
        %v1058 = vunpack.c.l.b16 %v826
        %v1059 = vunpack.c.l.b16 %v827
        %v1060 = vunpack.c.l.b16 %v828
        %v1061 = vunpack.c.l.b16 %v829
        %v1062 = vunpack.c.l.b16 %v830
        %v1063 = vunpack.c.l.b16 %v831
        %v1064 = vunpack.c.l.b16 %v832
        %v1065 = vpack.c.b16 %v1050, %v1049
        %v1066 = vpack.c.b16 %v1052, %v1051
        %v1067 = vpack.c.b16 %v1054, %v1053
        %v1068 = vpack.c.b16 %v1056, %v1055
        %v1069 = vpack.c.b16 %v1058, %v1057
        %v1070 = vpack.c.b16 %v1060, %v1059
        %v1071 = vpack.c.b16 %v1062, %v1061
        %v1072 = vpack.c.b16 %v1064, %v1063
        %1081 = vmatprep.subr.bf16.mxu0 0
        %1082 = vmatpush1.bf16.msra.mxu0 %v1065
        %1083 = vmatprep.subr.bf16.mxu0 0
        %1084 = vmatpush1.bf16.msra.mxu0 %v1066
        %1085 = vmatprep.subr.bf16.mxu0 0
        %1086 = vmatpush1.bf16.msra.mxu0 %v1067
        %1087 = vmatprep.subr.bf16.mxu0 0
        %1088 = vmatpush1.bf16.msra.mxu0 %v1068
        %1089 = vmatprep.subr.bf16.mxu0 0
        %1090 = vmatpush1.bf16.msra.mxu0 %v1069
        %1091 = vmatprep.subr.bf16.mxu0 0
        %1092 = vmatpush1.bf16.msra.mxu0 %v1070
        %1093 = vmatprep.subr.bf16.mxu0 0
        %1094 = vmatpush1.bf16.msra.mxu0 %v1071
        %1095 = vmatprep.subr.bf16.mxu0 0
        %1096 = vmatpush1.bf16.msra.mxu0 %v1072
        %1097 = vmatprep.subr.bf16.mxu0 0
        %1098 = vmatpush1.bf16.msra.mxu0 0
        %1099 = vmatprep.subr.bf16.mxu0 0
        %1100 = vmatpush1.bf16.msra.mxu0 0
        %1101 = vmatprep.subr.bf16.mxu0 0
        %1102 = vmatpush1.bf16.msra.mxu0 0
        %1103 = vmatprep.subr.bf16.mxu0 0
        %1104 = vmatpush1.bf16.msra.mxu0 0
        %1105 = vmatprep.subr.bf16.mxu0 0
        %1106 = vmatpush1.bf16.msra.mxu0 0
        %1107 = vmatprep.subr.bf16.mxu0 0
        %1108 = vmatpush1.bf16.msra.mxu0 0
        %1109 = vmatprep.subr.bf16.mxu0 0
        %1110 = vmatpush1.bf16.msra.mxu0 0
        %1111 = vmatprep.subr.bf16.mxu0 0
        %1112 = vmatpush1.bf16.msra.mxu0 0
        %1113 = vmatprep.mubr.bf16.mxu0 0
        %1114 = vmatmul.mubr.bf16.gmra.mrb[0].mxu0 %v853
        %v1115 = vpop.f32.mrb[0].mxu0
        %v1116 = vadd.f32 0.0, %v1115
        %v1117 = vpop.f32.mrb[0].mxu0
        %v1118 = vpop.f32.mrb[0].mxu0
        %v1119 = vadd.f32 0.0, %v1118
        %v1120 = vpop.f32.mrb[0].mxu0
        %1121 = vdwg.mxu0
        %v1138 = vunpack.c.l.b16 %v833
        %v1139 = vunpack.c.l.b16 %v834
        %v1140 = vunpack.c.l.b16 %v835
        %v1141 = vunpack.c.l.b16 %v836
        %v1142 = vunpack.c.l.b16 %v837
        %v1143 = vunpack.c.l.b16 %v838
        %v1144 = vunpack.c.l.b16 %v839
        %v1145 = vunpack.c.l.b16 %v840
        %v1146 = vunpack.c.l.b16 %v841
        %v1147 = vunpack.c.l.b16 %v842
        %v1148 = vunpack.c.l.b16 %v843
        %v1149 = vunpack.c.l.b16 %v844
        %v1150 = vunpack.c.l.b16 %v845
        %v1151 = vunpack.c.l.b16 %v846
        %v1152 = vunpack.c.l.b16 %v847
        %v1153 = vunpack.c.l.b16 %v848
        %v1154 = vpack.c.b16 %v1139, %v1138
        %v1155 = vpack.c.b16 %v1141, %v1140
        %v1156 = vpack.c.b16 %v1143, %v1142
        %v1157 = vpack.c.b16 %v1145, %v1144
        %v1158 = vpack.c.b16 %v1147, %v1146
        %v1159 = vpack.c.b16 %v1149, %v1148
        %v1160 = vpack.c.b16 %v1151, %v1150
        %v1161 = vpack.c.b16 %v1153, %v1152
        %1170 = vmatprep.subr.bf16.mxu0 0
        %1171 = vmatpush1.bf16.msra.mxu0 %v1154
        %1172 = vmatprep.subr.bf16.mxu0 0
        %1173 = vmatpush1.bf16.msra.mxu0 %v1155
        %1174 = vmatprep.subr.bf16.mxu0 0
        %1175 = vmatpush1.bf16.msra.mxu0 %v1156
        %1176 = vmatprep.subr.bf16.mxu0 0
        %1177 = vmatpush1.bf16.msra.mxu0 %v1157
        %1178 = vmatprep.subr.bf16.mxu0 0
        %1179 = vmatpush1.bf16.msra.mxu0 %v1158
        %1180 = vmatprep.subr.bf16.mxu0 0
        %1181 = vmatpush1.bf16.msra.mxu0 %v1159
        %1182 = vmatprep.subr.bf16.mxu0 0
        %1183 = vmatpush1.bf16.msra.mxu0 %v1160
        %1184 = vmatprep.subr.bf16.mxu0 0
        %1185 = vmatpush1.bf16.msra.mxu0 %v1161
        %1186 = vmatprep.subr.bf16.mxu0 0
        %1187 = vmatpush1.bf16.msra.mxu0 0
        %1188 = vmatprep.subr.bf16.mxu0 0
        %1189 = vmatpush1.bf16.msra.mxu0 0
        %1190 = vmatprep.subr.bf16.mxu0 0
        %1191 = vmatpush1.bf16.msra.mxu0 0
        %1192 = vmatprep.subr.bf16.mxu0 0
        %1193 = vmatpush1.bf16.msra.mxu0 0
        %1194 = vmatprep.subr.bf16.mxu0 0
        %1195 = vmatpush1.bf16.msra.mxu0 0
        %1196 = vmatprep.subr.bf16.mxu0 0
        %1197 = vmatpush1.bf16.msra.mxu0 0
        %1198 = vmatprep.subr.bf16.mxu0 0
        %1199 = vmatpush1.bf16.msra.mxu0 0
        %1200 = vmatprep.subr.bf16.mxu0 0
        %1201 = vmatpush1.bf16.msra.mxu0 0
        %1202 = vmatprep.mubr.bf16.mxu0 0
        %1203 = vmatmul.mubr.bf16.gmra.mrb[0].mxu0 %v853
        %v1204 = vpop.f32.mrb[0].mxu0
        %v1205 = vadd.f32 0.0, %v1204
        %v1206 = vpop.f32.mrb[0].mxu0
        %v1207 = vpop.f32.mrb[0].mxu0
        %v1208 = vadd.f32 0.0, %v1207
        %v1209 = vpop.f32.mrb[0].mxu0
        %1210 = vdwg.mxu0
        %v1211 = vpack.c.bf16 %v941, %v938
        %v1212 = vpack.c.bf16 %v1030, %v1027
        %v1213 = vpack.c.bf16 %v1119, %v1116
        %v1214 = vpack.c.bf16 %v1208, %v1205
        %v1215 = vld [vmem:[%s5] sm:$0xf]
        %v1216 = vld [vmem:[%s5 + $0x4] sm:$0xf]
        %v1217 = vld [vmem:[%s5 + $0x8] sm:$0xf]
        %v1218 = vld [vmem:[%s5 + $0xc] sm:$0xf]
        %v1219 = vld [vmem:[%s5 + $0x10] sm:$0xf]
        %v1220 = vld [vmem:[%s5 + $0x14] sm:$0xf]
        %v1221 = vld [vmem:[%s5 + $0x18] sm:$0xf]
        %v1222 = vld [vmem:[%s5 + $0x1c] sm:$0xf]
        %v1223 = vld [vmem:[%s5 + $0x20] sm:$0xf]
        %v1224 = vld [vmem:[%s5 + $0x24] sm:$0xf]
        %v1225 = vld [vmem:[%s5 + $0x28] sm:$0xf]
        %v1226 = vld [vmem:[%s5 + $0x2c] sm:$0xf]
        %v1227 = vld [vmem:[%s5 + $0x30] sm:$0xf]
        %v1228 = vld [vmem:[%s5 + $0x34] sm:$0xf]
        %v1229 = vld [vmem:[%s5 + $0x38] sm:$0xf]
        %v1230 = vld [vmem:[%s5 + $0x3c] sm:$0xf]
        %v1231 = vld [vmem:[%s5 + $0x40] sm:$0xf]
        %v1232 = vld [vmem:[%s5 + $0x44] sm:$0xf]
        %v1233 = vld [vmem:[%s5 + $0x48] sm:$0xf]
        %v1234 = vld [vmem:[%s5 + $0x4c] sm:$0xf]
        %v1235 = vld [vmem:[%s5 + $0x50] sm:$0xf]
        %v1236 = vld [vmem:[%s5 + $0x54] sm:$0xf]
        %v1237 = vld [vmem:[%s5 + $0x58] sm:$0xf]
        %v1238 = vld [vmem:[%s5 + $0x5c] sm:$0xf]
        %v1239 = vld [vmem:[%s5 + $0x60] sm:$0xf]
        %v1240 = vld [vmem:[%s5 + $0x64] sm:$0xf]
        %v1241 = vld [vmem:[%s5 + $0x68] sm:$0xf]
        %v1242 = vld [vmem:[%s5 + $0x6c] sm:$0xf]
        %v1243 = vld [vmem:[%s5 + $0x70] sm:$0xf]
        %v1244 = vld [vmem:[%s5 + $0x74] sm:$0xf]
        %v1245 = vld [vmem:[%s5 + $0x78] sm:$0xf]
        %v1246 = vld [vmem:[%s5 + $0x7c] sm:$0xf]
        %v1247 = vld [vmem:[%s5 + $0x80] sm:$0xf]
        %v1248 = vld [vmem:[%s5 + $0x84] sm:$0xf]
        %v1249 = vld [vmem:[%s5 + $0x88] sm:$0xf]
        %v1250 = vld [vmem:[%s5 + $0x8c] sm:$0xf]
        %v1251 = vld [vmem:[%s5 + $0x90] sm:$0xf]
        %v1252 = vld [vmem:[%s5 + $0x94] sm:$0xf]
        %v1253 = vld [vmem:[%s5 + $0x98] sm:$0xf]
        %v1254 = vld [vmem:[%s5 + $0x9c] sm:$0xf]
        %v1255 = vld [vmem:[%s5 + $0xa0] sm:$0xf]
        %v1256 = vld [vmem:[%s5 + $0xa4] sm:$0xf]
        %v1257 = vld [vmem:[%s5 + $0xa8] sm:$0xf]
        %v1258 = vld [vmem:[%s5 + $0xac] sm:$0xf]
        %v1259 = vld [vmem:[%s5 + $0xb0] sm:$0xf]
        %v1260 = vld [vmem:[%s5 + $0xb4] sm:$0xf]
        %v1261 = vld [vmem:[%s5 + $0xb8] sm:$0xf]
        %v1262 = vld [vmem:[%s5 + $0xbc] sm:$0xf]
        %v1263 = vld [vmem:[%s5 + $0xc0] sm:$0xf]
        %v1264 = vld [vmem:[%s5 + $0xc4] sm:$0xf]
        %v1265 = vld [vmem:[%s5 + $0xc8] sm:$0xf]
        %v1266 = vld [vmem:[%s5 + $0xcc] sm:$0xf]
        %v1267 = vld [vmem:[%s5 + $0xd0] sm:$0xf]
        %v1268 = vld [vmem:[%s5 + $0xd4] sm:$0xf]
        %v1269 = vld [vmem:[%s5 + $0xd8] sm:$0xf]
        %v1270 = vld [vmem:[%s5 + $0xdc] sm:$0xf]
        %v1271 = vld [vmem:[%s5 + $0xe0] sm:$0xf]
        %v1272 = vld [vmem:[%s5 + $0xe4] sm:$0xf]
        %v1273 = vld [vmem:[%s5 + $0xe8] sm:$0xf]
        %v1274 = vld [vmem:[%s5 + $0xec] sm:$0xf]
        %v1275 = vld [vmem:[%s5 + $0xf0] sm:$0xf]
        %v1276 = vld [vmem:[%s5 + $0xf4] sm:$0xf]
        %v1277 = vld [vmem:[%s5 + $0xf8] sm:$0xf]
        %v1278 = vld [vmem:[%s5 + $0xfc] sm:$0xf]
        %v1281 = vunpack.c.l.b16 %v353
        %v1282 = vunpack.c.l.b16 %v354
        %v1283 = vpack.c.b16 %v1282, %v1281
        %v1301 = vunpack.c.l.b16 %v1215
        %v1302 = vunpack.c.l.b16 %v1216
        %v1303 = vunpack.c.l.b16 %v1217
        %v1304 = vunpack.c.l.b16 %v1218
        %v1305 = vunpack.c.l.b16 %v1219
        %v1306 = vunpack.c.l.b16 %v1220
        %v1307 = vunpack.c.l.b16 %v1221
        %v1308 = vunpack.c.l.b16 %v1222
        %v1309 = vunpack.c.l.b16 %v1223
        %v1310 = vunpack.c.l.b16 %v1224
        %v1311 = vunpack.c.l.b16 %v1225
        %v1312 = vunpack.c.l.b16 %v1226
        %v1313 = vunpack.c.l.b16 %v1227
        %v1314 = vunpack.c.l.b16 %v1228
        %v1315 = vunpack.c.l.b16 %v1229
        %v1316 = vunpack.c.l.b16 %v1230
        %v1317 = vpack.c.b16 %v1302, %v1301
        %v1318 = vpack.c.b16 %v1304, %v1303
        %v1319 = vpack.c.b16 %v1306, %v1305
        %v1320 = vpack.c.b16 %v1308, %v1307
        %v1321 = vpack.c.b16 %v1310, %v1309
        %v1322 = vpack.c.b16 %v1312, %v1311
        %v1323 = vpack.c.b16 %v1314, %v1313
        %v1324 = vpack.c.b16 %v1316, %v1315
        %1333 = vmatprep.subr.bf16.mxu0 0
        %1334 = vmatpush1.bf16.msra.mxu0 %v1317
        %1335 = vmatprep.subr.bf16.mxu0 0
        %1336 = vmatpush1.bf16.msra.mxu0 %v1318
        %1337 = vmatprep.subr.bf16.mxu0 0
        %1338 = vmatpush1.bf16.msra.mxu0 %v1319
        %1339 = vmatprep.subr.bf16.mxu0 0
        %1340 = vmatpush1.bf16.msra.mxu0 %v1320
        %1341 = vmatprep.subr.bf16.mxu0 0
        %1342 = vmatpush1.bf16.msra.mxu0 %v1321
        %1343 = vmatprep.subr.bf16.mxu0 0
        %1344 = vmatpush1.bf16.msra.mxu0 %v1322
        %1345 = vmatprep.subr.bf16.mxu0 0
        %1346 = vmatpush1.bf16.msra.mxu0 %v1323
        %1347 = vmatprep.subr.bf16.mxu0 0
        %1348 = vmatpush1.bf16.msra.mxu0 %v1324
        %1349 = vmatprep.subr.bf16.mxu0 0
        %1350 = vmatpush1.bf16.msra.mxu0 0
        %1351 = vmatprep.subr.bf16.mxu0 0
        %1352 = vmatpush1.bf16.msra.mxu0 0
        %1353 = vmatprep.subr.bf16.mxu0 0
        %1354 = vmatpush1.bf16.msra.mxu0 0
        %1355 = vmatprep.subr.bf16.mxu0 0
        %1356 = vmatpush1.bf16.msra.mxu0 0
        %1357 = vmatprep.subr.bf16.mxu0 0
        %1358 = vmatpush1.bf16.msra.mxu0 0
        %1359 = vmatprep.subr.bf16.mxu0 0
        %1360 = vmatpush1.bf16.msra.mxu0 0
        %1361 = vmatprep.subr.bf16.mxu0 0
        %1362 = vmatpush1.bf16.msra.mxu0 0
        %1363 = vmatprep.subr.bf16.mxu0 0
        %1364 = vmatpush1.bf16.msra.mxu0 0
        %1365 = vmatprep.mubr.bf16.mxu0 0
        %1366 = vmatmul.mubr.bf16.gmra.mrb[0].mxu0 %v1283
        %v1367 = vpop.f32.mrb[0].mxu0
        %v1368 = vadd.f32 0.0, %v1367
        %v1369 = vpop.f32.mrb[0].mxu0
        %v1370 = vpop.f32.mrb[0].mxu0
        %v1371 = vadd.f32 0.0, %v1370
        %v1372 = vpop.f32.mrb[0].mxu0
        %1373 = vdwg.mxu0
        %v1390 = vunpack.c.l.b16 %v1231
        %v1391 = vunpack.c.l.b16 %v1232
        %v1392 = vunpack.c.l.b16 %v1233
        %v1393 = vunpack.c.l.b16 %v1234
        %v1394 = vunpack.c.l.b16 %v1235
        %v1395 = vunpack.c.l.b16 %v1236
        %v1396 = vunpack.c.l.b16 %v1237
        %v1397 = vunpack.c.l.b16 %v1238
        %v1398 = vunpack.c.l.b16 %v1239
        %v1399 = vunpack.c.l.b16 %v1240
        %v1400 = vunpack.c.l.b16 %v1241
        %v1401 = vunpack.c.l.b16 %v1242
        %v1402 = vunpack.c.l.b16 %v1243
        %v1403 = vunpack.c.l.b16 %v1244
        %v1404 = vunpack.c.l.b16 %v1245
        %v1405 = vunpack.c.l.b16 %v1246
        %v1406 = vpack.c.b16 %v1391, %v1390
        %v1407 = vpack.c.b16 %v1393, %v1392
        %v1408 = vpack.c.b16 %v1395, %v1394
        %v1409 = vpack.c.b16 %v1397, %v1396
        %v1410 = vpack.c.b16 %v1399, %v1398
        %v1411 = vpack.c.b16 %v1401, %v1400
        %v1412 = vpack.c.b16 %v1403, %v1402
        %v1413 = vpack.c.b16 %v1405, %v1404
        %1422 = vmatprep.subr.bf16.mxu0 0
        %1423 = vmatpush1.bf16.msra.mxu0 %v1406
        %1424 = vmatprep.subr.bf16.mxu0 0
        %1425 = vmatpush1.bf16.msra.mxu0 %v1407
        %1426 = vmatprep.subr.bf16.mxu0 0
        %1427 = vmatpush1.bf16.msra.mxu0 %v1408
        %1428 = vmatprep.subr.bf16.mxu0 0
        %1429 = vmatpush1.bf16.msra.mxu0 %v1409
        %1430 = vmatprep.subr.bf16.mxu0 0
        %1431 = vmatpush1.bf16.msra.mxu0 %v1410
        %1432 = vmatprep.subr.bf16.mxu0 0
        %1433 = vmatpush1.bf16.msra.mxu0 %v1411
        %1434 = vmatprep.subr.bf16.mxu0 0
        %1435 = vmatpush1.bf16.msra.mxu0 %v1412
        %1436 = vmatprep.subr.bf16.mxu0 0
        %1437 = vmatpush1.bf16.msra.mxu0 %v1413
        %1438 = vmatprep.subr.bf16.mxu0 0
        %1439 = vmatpush1.bf16.msra.mxu0 0
        %1440 = vmatprep.subr.bf16.mxu0 0
        %1441 = vmatpush1.bf16.msra.mxu0 0
        %1442 = vmatprep.subr.bf16.mxu0 0
        %1443 = vmatpush1.bf16.msra.mxu0 0
        %1444 = vmatprep.subr.bf16.mxu0 0
        %1445 = vmatpush1.bf16.msra.mxu0 0
        %1446 = vmatprep.subr.bf16.mxu0 0
        %1447 = vmatpush1.bf16.msra.mxu0 0
        %1448 = vmatprep.subr.bf16.mxu0 0
        %1449 = vmatpush1.bf16.msra.mxu0 0
        %1450 = vmatprep.subr.bf16.mxu0 0
        %1451 = vmatpush1.bf16.msra.mxu0 0
        %1452 = vmatprep.subr.bf16.mxu0 0
        %1453 = vmatpush1.bf16.msra.mxu0 0
        %1454 = vmatprep.mubr.bf16.mxu0 0
        %1455 = vmatmul.mubr.bf16.gmra.mrb[0].mxu0 %v1283
        %v1456 = vpop.f32.mrb[0].mxu0
        %v1457 = vadd.f32 0.0, %v1456
        %v1458 = vpop.f32.mrb[0].mxu0
        %v1459 = vpop.f32.mrb[0].mxu0
        %v1460 = vadd.f32 0.0, %v1459
        %v1461 = vpop.f32.mrb[0].mxu0
        %1462 = vdwg.mxu0
        %v1479 = vunpack.c.l.b16 %v1247
        %v1480 = vunpack.c.l.b16 %v1248
        %v1481 = vunpack.c.l.b16 %v1249
        %v1482 = vunpack.c.l.b16 %v1250
        %v1483 = vunpack.c.l.b16 %v1251
        %v1484 = vunpack.c.l.b16 %v1252
        %v1485 = vunpack.c.l.b16 %v1253
        %v1486 = vunpack.c.l.b16 %v1254
        %v1487 = vunpack.c.l.b16 %v1255
        %v1488 = vunpack.c.l.b16 %v1256
        %v1489 = vunpack.c.l.b16 %v1257
        %v1490 = vunpack.c.l.b16 %v1258
        %v1491 = vunpack.c.l.b16 %v1259
        %v1492 = vunpack.c.l.b16 %v1260
        %v1493 = vunpack.c.l.b16 %v1261
        %v1494 = vunpack.c.l.b16 %v1262
        %v1495 = vpack.c.b16 %v1480, %v1479
        %v1496 = vpack.c.b16 %v1482, %v1481
        %v1497 = vpack.c.b16 %v1484, %v1483
        %v1498 = vpack.c.b16 %v1486, %v1485
        %v1499 = vpack.c.b16 %v1488, %v1487
        %v1500 = vpack.c.b16 %v1490, %v1489
        %v1501 = vpack.c.b16 %v1492, %v1491
        %v1502 = vpack.c.b16 %v1494, %v1493
        %1511 = vmatprep.subr.bf16.mxu0 0
        %1512 = vmatpush1.bf16.msra.mxu0 %v1495
        %1513 = vmatprep.subr.bf16.mxu0 0
        %1514 = vmatpush1.bf16.msra.mxu0 %v1496
        %1515 = vmatprep.subr.bf16.mxu0 0
        %1516 = vmatpush1.bf16.msra.mxu0 %v1497
        %1517 = vmatprep.subr.bf16.mxu0 0
        %1518 = vmatpush1.bf16.msra.mxu0 %v1498
        %1519 = vmatprep.subr.bf16.mxu0 0
        %1520 = vmatpush1.bf16.msra.mxu0 %v1499
        %1521 = vmatprep.subr.bf16.mxu0 0
        %1522 = vmatpush1.bf16.msra.mxu0 %v1500
        %1523 = vmatprep.subr.bf16.mxu0 0
        %1524 = vmatpush1.bf16.msra.mxu0 %v1501
        %1525 = vmatprep.subr.bf16.mxu0 0
        %1526 = vmatpush1.bf16.msra.mxu0 %v1502
        %1527 = vmatprep.subr.bf16.mxu0 0
        %1528 = vmatpush1.bf16.msra.mxu0 0
        %1529 = vmatprep.subr.bf16.mxu0 0
        %1530 = vmatpush1.bf16.msra.mxu0 0
        %1531 = vmatprep.subr.bf16.mxu0 0
        %1532 = vmatpush1.bf16.msra.mxu0 0
        %1533 = vmatprep.subr.bf16.mxu0 0
        %1534 = vmatpush1.bf16.msra.mxu0 0
        %1535 = vmatprep.subr.bf16.mxu0 0
        %1536 = vmatpush1.bf16.msra.mxu0 0
        %1537 = vmatprep.subr.bf16.mxu0 0
        %1538 = vmatpush1.bf16.msra.mxu0 0
        %1539 = vmatprep.subr.bf16.mxu0 0
        %1540 = vmatpush1.bf16.msra.mxu0 0
        %1541 = vmatprep.subr.bf16.mxu0 0
        %1542 = vmatpush1.bf16.msra.mxu0 0
        %1543 = vmatprep.mubr.bf16.mxu0 0
        %1544 = vmatmul.mubr.bf16.gmra.mrb[0].mxu0 %v1283
        %v1545 = vpop.f32.mrb[0].mxu0
        %v1546 = vadd.f32 0.0, %v1545
        %v1547 = vpop.f32.mrb[0].mxu0
        %v1548 = vpop.f32.mrb[0].mxu0
        %v1549 = vadd.f32 0.0, %v1548
        %v1550 = vpop.f32.mrb[0].mxu0
        %1551 = vdwg.mxu0
        %v1568 = vunpack.c.l.b16 %v1263
        %v1569 = vunpack.c.l.b16 %v1264
        %v1570 = vunpack.c.l.b16 %v1265
        %v1571 = vunpack.c.l.b16 %v1266
        %v1572 = vunpack.c.l.b16 %v1267
        %v1573 = vunpack.c.l.b16 %v1268
        %v1574 = vunpack.c.l.b16 %v1269
        %v1575 = vunpack.c.l.b16 %v1270
        %v1576 = vunpack.c.l.b16 %v1271
        %v1577 = vunpack.c.l.b16 %v1272
        %v1578 = vunpack.c.l.b16 %v1273
        %v1579 = vunpack.c.l.b16 %v1274
        %v1580 = vunpack.c.l.b16 %v1275
        %v1581 = vunpack.c.l.b16 %v1276
        %v1582 = vunpack.c.l.b16 %v1277
        %v1583 = vunpack.c.l.b16 %v1278
        %v1584 = vpack.c.b16 %v1569, %v1568
        %v1585 = vpack.c.b16 %v1571, %v1570
        %v1586 = vpack.c.b16 %v1573, %v1572
        %v1587 = vpack.c.b16 %v1575, %v1574
        %v1588 = vpack.c.b16 %v1577, %v1576
        %v1589 = vpack.c.b16 %v1579, %v1578
        %v1590 = vpack.c.b16 %v1581, %v1580
        %v1591 = vpack.c.b16 %v1583, %v1582
        %1600 = vmatprep.subr.bf16.mxu0 0
        %1601 = vmatpush1.bf16.msra.mxu0 %v1584
        %1602 = vmatprep.subr.bf16.mxu0 0
        %1603 = vmatpush1.bf16.msra.mxu0 %v1585
        %1604 = vmatprep.subr.bf16.mxu0 0
        %1605 = vmatpush1.bf16.msra.mxu0 %v1586
        %1606 = vmatprep.subr.bf16.mxu0 0
        %1607 = vmatpush1.bf16.msra.mxu0 %v1587
        %1608 = vmatprep.subr.bf16.mxu0 0
        %1609 = vmatpush1.bf16.msra.mxu0 %v1588
        %1610 = vmatprep.subr.bf16.mxu0 0
        %1611 = vmatpush1.bf16.msra.mxu0 %v1589
        %1612 = vmatprep.subr.bf16.mxu0 0
        %1613 = vmatpush1.bf16.msra.mxu0 %v1590
        %1614 = vmatprep.subr.bf16.mxu0 0
        %1615 = vmatpush1.bf16.msra.mxu0 %v1591
        %1616 = vmatprep.subr.bf16.mxu0 0
        %1617 = vmatpush1.bf16.msra.mxu0 0
        %1618 = vmatprep.subr.bf16.mxu0 0
        %1619 = vmatpush1.bf16.msra.mxu0 0
        %1620 = vmatprep.subr.bf16.mxu0 0
        %1621 = vmatpush1.bf16.msra.mxu0 0
        %1622 = vmatprep.subr.bf16.mxu0 0
        %1623 = vmatpush1.bf16.msra.mxu0 0
        %1624 = vmatprep.subr.bf16.mxu0 0
        %1625 = vmatpush1.bf16.msra.mxu0 0
        %1626 = vmatprep.subr.bf16.mxu0 0
        %1627 = vmatpush1.bf16.msra.mxu0 0
        %1628 = vmatprep.subr.bf16.mxu0 0
        %1629 = vmatpush1.bf16.msra.mxu0 0
        %1630 = vmatprep.subr.bf16.mxu0 0
        %1631 = vmatpush1.bf16.msra.mxu0 0
        %1632 = vmatprep.mubr.bf16.mxu0 0
        %1633 = vmatmul.mubr.bf16.gmra.mrb[0].mxu0 %v1283
        %v1634 = vpop.f32.mrb[0].mxu0
        %v1635 = vadd.f32 0.0, %v1634
        %v1636 = vpop.f32.mrb[0].mxu0
        %v1637 = vpop.f32.mrb[0].mxu0
        %v1638 = vadd.f32 0.0, %v1637
        %v1639 = vpop.f32.mrb[0].mxu0
        %1640 = vdwg.mxu0
        %v1641 = vpack.c.bf16 %v1371, %v1368
        %v1642 = vpack.c.bf16 %v1460, %v1457
        %v1643 = vpack.c.bf16 %v1549, %v1546
        %v1644 = vpack.c.bf16 %v1638, %v1635
        %vm1645 = vcmask 261120
        %v1647 = vsel %vm1645, %v781, 0
        %v1650 = vsel %vm1645, %v1211, 0
        %1652 = vmatprep.subr.bf16.mxu0 0
        %1653 = vmatpush1.bf16.xpose.msra.mxu0 %v1650
        %1654 = vmatprep.subr.bf16.mxu0 0
        %1655 = vmatpush1.bf16.xpose.msra.mxu0 0
        %1656 = vmatprep.subr.bf16.mxu0 0
        %1657 = vmatpush1.bf16.xpose.msra.mxu0 0
        %1658 = vmatprep.subr.bf16.mxu0 0
        %1659 = vmatpush1.bf16.xpose.msra.mxu0 0
        %1660 = vmatprep.subr.bf16.mxu0 0
        %1661 = vmatpush1.bf16.xpose.msra.mxu0 0
        %1662 = vmatprep.subr.bf16.mxu0 0
        %1663 = vmatpush1.bf16.xpose.msra.mxu0 0
        %1664 = vmatprep.subr.bf16.mxu0 0
        %1665 = vmatpush1.bf16.xpose.msra.mxu0 0
        %1666 = vmatprep.subr.bf16.mxu0 0
        %1667 = vmatpush1.bf16.xpose.msra.mxu0 0
        %1668 = vmatprep.subr.bf16.mxu0 0
        %1669 = vmatpush1.bf16.xpose.msra.mxu0 0
        %1670 = vmatprep.subr.bf16.mxu0 0
        %1671 = vmatpush1.bf16.xpose.msra.mxu0 0
        %1672 = vmatprep.subr.bf16.mxu0 0
        %1673 = vmatpush1.bf16.xpose.msra.mxu0 0
        %1674 = vmatprep.subr.bf16.mxu0 0
        %1675 = vmatpush1.bf16.xpose.msra.mxu0 0
        %1676 = vmatprep.subr.bf16.mxu0 0
        %1677 = vmatpush1.bf16.xpose.msra.mxu0 0
        %1678 = vmatprep.subr.bf16.mxu0 0
        %1679 = vmatpush1.bf16.xpose.msra.mxu0 0
        %1680 = vmatprep.subr.bf16.mxu0 0
        %1681 = vmatpush1.bf16.xpose.msra.mxu0 0
        %1682 = vmatprep.subr.bf16.mxu0 0
        %1683 = vmatpush1.bf16.xpose.msra.mxu0 0
        %1684 = vmatprep.mubr.bf16.mxu0 0
        %1685 = vmatmul.mubr.bf16.gmra.mrb[0].mxu0 %v1647
        %v1686 = vpop.f32.mrb[0].mxu0
        %v1687 = vadd.f32 0.0, %v1686
        %v1688 = vpop.f32.mrb[0].mxu0
        %v1689 = vpop.f32.mrb[0].mxu0
        %v1690 = vadd.f32 0.0, %v1689
        %v1691 = vpop.f32.mrb[0].mxu0
        %1692 = vdwg.mxu0
        %v1694 = vsel %vm1645, %v782, 0
        %v1697 = vsel %vm1645, %v1212, 0
        %1699 = vmatprep.subr.bf16.mxu0 0
        %1700 = vmatpush1.bf16.xpose.msra.mxu0 %v1697
        %1701 = vmatprep.subr.bf16.mxu0 0
        %1702 = vmatpush1.bf16.xpose.msra.mxu0 0
        %1703 = vmatprep.subr.bf16.mxu0 0
        %1704 = vmatpush1.bf16.xpose.msra.mxu0 0
        %1705 = vmatprep.subr.bf16.mxu0 0
        %1706 = vmatpush1.bf16.xpose.msra.mxu0 0
        %1707 = vmatprep.subr.bf16.mxu0 0
        %1708 = vmatpush1.bf16.xpose.msra.mxu0 0
        %1709 = vmatprep.subr.bf16.mxu0 0
        %1710 = vmatpush1.bf16.xpose.msra.mxu0 0
        %1711 = vmatprep.subr.bf16.mxu0 0
        %1712 = vmatpush1.bf16.xpose.msra.mxu0 0
        %1713 = vmatprep.subr.bf16.mxu0 0
        %1714 = vmatpush1.bf16.xpose.msra.mxu0 0
        %1715 = vmatprep.subr.bf16.mxu0 0
        %1716 = vmatpush1.bf16.xpose.msra.mxu0 0
        %1717 = vmatprep.subr.bf16.mxu0 0
        %1718 = vmatpush1.bf16.xpose.msra.mxu0 0
        %1719 = vmatprep.subr.bf16.mxu0 0
        %1720 = vmatpush1.bf16.xpose.msra.mxu0 0
        %1721 = vmatprep.subr.bf16.mxu0 0
        %1722 = vmatpush1.bf16.xpose.msra.mxu0 0
        %1723 = vmatprep.subr.bf16.mxu0 0
        %1724 = vmatpush1.bf16.xpose.msra.mxu0 0
        %1725 = vmatprep.subr.bf16.mxu0 0
        %1726 = vmatpush1.bf16.xpose.msra.mxu0 0
        %1727 = vmatprep.subr.bf16.mxu0 0
        %1728 = vmatpush1.bf16.xpose.msra.mxu0 0
        %1729 = vmatprep.subr.bf16.mxu0 0
        %1730 = vmatpush1.bf16.xpose.msra.mxu0 0
        %1731 = vmatprep.mubr.bf16.mxu0 0
        %1732 = vmatmul.mubr.bf16.gmra.mrb[0].mxu0 %v1694
        %v1733 = vpop.f32.mrb[0].mxu0
        %v1734 = vadd.f32 0.0, %v1733
        %v1735 = vpop.f32.mrb[0].mxu0
        %v1736 = vpop.f32.mrb[0].mxu0
        %v1737 = vadd.f32 0.0, %v1736
        %v1738 = vpop.f32.mrb[0].mxu0
        %1739 = vdwg.mxu0
        %v1741 = vsel %vm1645, %v783, 0
        %v1744 = vsel %vm1645, %v1213, 0
        %1746 = vmatprep.subr.bf16.mxu0 0
        %1747 = vmatpush1.bf16.xpose.msra.mxu0 %v1744
        %1748 = vmatprep.subr.bf16.mxu0 0
        %1749 = vmatpush1.bf16.xpose.msra.mxu0 0
        %1750 = vmatprep.subr.bf16.mxu0 0
        %1751 = vmatpush1.bf16.xpose.msra.mxu0 0
        %1752 = vmatprep.subr.bf16.mxu0 0
        %1753 = vmatpush1.bf16.xpose.msra.mxu0 0
        %1754 = vmatprep.subr.bf16.mxu0 0
        %1755 = vmatpush1.bf16.xpose.msra.mxu0 0
        %1756 = vmatprep.subr.bf16.mxu0 0
        %1757 = vmatpush1.bf16.xpose.msra.mxu0 0
        %1758 = vmatprep.subr.bf16.mxu0 0
        %1759 = vmatpush1.bf16.xpose.msra.mxu0 0
        %1760 = vmatprep.subr.bf16.mxu0 0
        %1761 = vmatpush1.bf16.xpose.msra.mxu0 0
        %1762 = vmatprep.subr.bf16.mxu0 0
        %1763 = vmatpush1.bf16.xpose.msra.mxu0 0
        %1764 = vmatprep.subr.bf16.mxu0 0
        %1765 = vmatpush1.bf16.xpose.msra.mxu0 0
        %1766 = vmatprep.subr.bf16.mxu0 0
        %1767 = vmatpush1.bf16.xpose.msra.mxu0 0
        %1768 = vmatprep.subr.bf16.mxu0 0
        %1769 = vmatpush1.bf16.xpose.msra.mxu0 0
        %1770 = vmatprep.subr.bf16.mxu0 0
        %1771 = vmatpush1.bf16.xpose.msra.mxu0 0
        %1772 = vmatprep.subr.bf16.mxu0 0
        %1773 = vmatpush1.bf16.xpose.msra.mxu0 0
        %1774 = vmatprep.subr.bf16.mxu0 0
        %1775 = vmatpush1.bf16.xpose.msra.mxu0 0
        %1776 = vmatprep.subr.bf16.mxu0 0
        %1777 = vmatpush1.bf16.xpose.msra.mxu0 0
        %1778 = vmatprep.mubr.bf16.mxu0 0
        %1779 = vmatmul.mubr.bf16.gmra.mrb[0].mxu0 %v1741
        %v1780 = vpop.f32.mrb[0].mxu0
        %v1781 = vadd.f32 0.0, %v1780
        %v1782 = vpop.f32.mrb[0].mxu0
        %v1783 = vpop.f32.mrb[0].mxu0
        %v1784 = vadd.f32 0.0, %v1783
        %v1785 = vpop.f32.mrb[0].mxu0
        %1786 = vdwg.mxu0
        %v1788 = vsel %vm1645, %v784, 0
        %v1791 = vsel %vm1645, %v1214, 0
        %1793 = vmatprep.subr.bf16.mxu0 0
        %1794 = vmatpush1.bf16.xpose.msra.mxu0 %v1791
        %1795 = vmatprep.subr.bf16.mxu0 0
        %1796 = vmatpush1.bf16.xpose.msra.mxu0 0
        %1797 = vmatprep.subr.bf16.mxu0 0
        %1798 = vmatpush1.bf16.xpose.msra.mxu0 0
        %1799 = vmatprep.subr.bf16.mxu0 0
        %1800 = vmatpush1.bf16.xpose.msra.mxu0 0
        %1801 = vmatprep.subr.bf16.mxu0 0
        %1802 = vmatpush1.bf16.xpose.msra.mxu0 0
        %1803 = vmatprep.subr.bf16.mxu0 0
        %1804 = vmatpush1.bf16.xpose.msra.mxu0 0
        %1805 = vmatprep.subr.bf16.mxu0 0
        %1806 = vmatpush1.bf16.xpose.msra.mxu0 0
        %1807 = vmatprep.subr.bf16.mxu0 0
        %1808 = vmatpush1.bf16.xpose.msra.mxu0 0
        %1809 = vmatprep.subr.bf16.mxu0 0
        %1810 = vmatpush1.bf16.xpose.msra.mxu0 0
        %1811 = vmatprep.subr.bf16.mxu0 0
        %1812 = vmatpush1.bf16.xpose.msra.mxu0 0
        %1813 = vmatprep.subr.bf16.mxu0 0
        %1814 = vmatpush1.bf16.xpose.msra.mxu0 0
        %1815 = vmatprep.subr.bf16.mxu0 0
        %1816 = vmatpush1.bf16.xpose.msra.mxu0 0
        %1817 = vmatprep.subr.bf16.mxu0 0
        %1818 = vmatpush1.bf16.xpose.msra.mxu0 0
        %1819 = vmatprep.subr.bf16.mxu0 0
        %1820 = vmatpush1.bf16.xpose.msra.mxu0 0
        %1821 = vmatprep.subr.bf16.mxu0 0
        %1822 = vmatpush1.bf16.xpose.msra.mxu0 0
        %1823 = vmatprep.subr.bf16.mxu0 0
        %1824 = vmatpush1.bf16.xpose.msra.mxu0 0
        %1825 = vmatprep.mubr.bf16.mxu0 0
        %1826 = vmatmul.mubr.bf16.gmra.mrb[0].mxu0 %v1788
        %v1827 = vpop.f32.mrb[0].mxu0
        %v1828 = vadd.f32 0.0, %v1827
        %v1829 = vpop.f32.mrb[0].mxu0
        %v1830 = vpop.f32.mrb[0].mxu0
        %v1831 = vadd.f32 0.0, %v1830
        %v1832 = vpop.f32.mrb[0].mxu0
        %1833 = vdwg.mxu0
        %s1834 = smul.u32 %s26, 16
        %v1835 = vlaneseq
        %v1836 = vshrl.u32 %v1835, 7
        %v1837 = vadd.s32 %v1836, 8
        %v1838 = vstv %s1834
        %v1839 = vadd.s32 %v1836, %v1838
        %v1840 = vadd.s32 %v1837, %v1838
        %v1841 = vlaneseq
        %v1842 = vand.u32 %v1841, 127
        %vm1843 = vcmp.le.s32.totalorder %v1842, %v1839
        %vm1844 = vcmp.le.s32.totalorder %v1842, %v1840
        %v1845 = vsel %vm1843, 1, 0
        %v1846 = vsel %vm1844, 1, 0
        %vm1847 = vcmp.eq.s32.totalorder %v1845, 1
        %vm1848 = vcmp.eq.s32.totalorder %v1846, 1
        %v1849 = vsel %vm1847, %v1687, -inf
        %v1850 = vsel %vm1848, %v1690, -inf
        %v1851 = vsel %vm1847, %v1734, -inf
        %v1852 = vsel %vm1848, %v1737, -inf
        %v1853 = vsel %vm1847, %v1781, -inf
        %v1854 = vsel %vm1848, %v1784, -inf
        %v1855 = vsel %vm1847, %v1828, -inf
        %v1856 = vsel %vm1848, %v1831, -inf
        %vm1857 = vcmask 130048
        %v1858 = vsel %vm1857, %v1849, -inf
        %1859 = vmax.xlane.f32.xlu0 %v1858
        %v1860 = vpop.xlane.xlu0 %1859
        %v1861 = vsel %vm1857, %v1850, -inf
        %1862 = vmax.xlane.f32.xlu0 %v1861
        %v1863 = vpop.xlane.xlu0 %1862
        %v1864 = vsel %vm1857, %v1851, -inf
        %1865 = vmax.xlane.f32.xlu0 %v1864
        %v1866 = vpop.xlane.xlu0 %1865
        %v1867 = vsel %vm1857, %v1852, -inf
        %1868 = vmax.xlane.f32.xlu0 %v1867
        %v1869 = vpop.xlane.xlu0 %1868
        %v1870 = vsel %vm1857, %v1853, -inf
        %1871 = vmax.xlane.f32.xlu0 %v1870
        %v1872 = vpop.xlane.xlu0 %1871
        %v1873 = vsel %vm1857, %v1854, -inf
        %1874 = vmax.xlane.f32.xlu0 %v1873
        %v1875 = vpop.xlane.xlu0 %1874
        %v1876 = vsel %vm1857, %v1855, -inf
        %1877 = vmax.xlane.f32.xlu0 %v1876
        %v1878 = vpop.xlane.xlu0 %1877
        %v1879 = vsel %vm1857, %v1856, -inf
        %1880 = vmax.xlane.f32.xlu0 %v1879
        %v1881 = vpop.xlane.xlu0 %1880
        %v1882 = vsub.f32 %v1849, %v1860
        %v1883 = vsub.f32 %v1850, %v1863
        %v1884 = vsub.f32 %v1851, %v1866
        %v1885 = vsub.f32 %v1852, %v1869
        %v1886 = vsub.f32 %v1853, %v1872
        %v1887 = vsub.f32 %v1854, %v1875
        %v1888 = vsub.f32 %v1855, %v1878
        %v1889 = vsub.f32 %v1856, %v1881
        %v1890 = vmul.f32 %v1882, 1.442695
        %v1891 = vpow.pop %v1890
        %v1892 = vmul.f32 %v1883, 1.442695
        %v1893 = vpow.pop %v1892
        %v1894 = vmul.f32 %v1884, 1.442695
        %v1895 = vpow.pop %v1894
        %v1896 = vmul.f32 %v1885, 1.442695
        %v1897 = vpow.pop %v1896
        %v1898 = vmul.f32 %v1886, 1.442695
        %v1899 = vpow.pop %v1898
        %v1900 = vmul.f32 %v1887, 1.442695
        %v1901 = vpow.pop %v1900
        %v1902 = vmul.f32 %v1888, 1.442695
        %v1903 = vpow.pop %v1902
        %v1904 = vmul.f32 %v1889, 1.442695
        %v1905 = vpow.pop %v1904
        %v1906 = vsel %vm1857, %v1891, 0.0
        %1907 = vadd.xlane.f32.xlu0 %v1906
        %v1908 = vpop.xlane.xlu0 %1907
        %v1909 = vsel %vm1857, %v1893, 0.0
        %1910 = vadd.xlane.f32.xlu0 %v1909
        %v1911 = vpop.xlane.xlu0 %1910
        %v1912 = vsel %vm1857, %v1895, 0.0
        %1913 = vadd.xlane.f32.xlu0 %v1912
        %v1914 = vpop.xlane.xlu0 %1913
        %v1915 = vsel %vm1857, %v1897, 0.0
        %1916 = vadd.xlane.f32.xlu0 %v1915
        %v1917 = vpop.xlane.xlu0 %1916
        %v1918 = vsel %vm1857, %v1899, 0.0
        %1919 = vadd.xlane.f32.xlu0 %v1918
        %v1920 = vpop.xlane.xlu0 %1919
        %v1921 = vsel %vm1857, %v1901, 0.0
        %1922 = vadd.xlane.f32.xlu0 %v1921
        %v1923 = vpop.xlane.xlu0 %1922
        %v1924 = vsel %vm1857, %v1903, 0.0
        %1925 = vadd.xlane.f32.xlu0 %v1924
        %v1926 = vpop.xlane.xlu0 %1925
        %v1927 = vsel %vm1857, %v1905, 0.0
        %1928 = vadd.xlane.f32.xlu0 %v1927
        %v1929 = vpop.xlane.xlu0 %1928
        %v1930 = vrcp.pop %v1908
        %v1931 = vrcp.pop %v1911
        %v1932 = vrcp.pop %v1914
        %v1933 = vrcp.pop %v1917
        %v1934 = vrcp.pop %v1920
        %v1935 = vrcp.pop %v1923
        %v1936 = vrcp.pop %v1926
        %v1937 = vrcp.pop %v1929
        %v1938 = vmul.f32 %v1891, %v1930
        %v1939 = vmul.f32 %v1893, %v1931
        %v1940 = vmul.f32 %v1895, %v1932
        %v1941 = vmul.f32 %v1897, %v1933
        %v1942 = vmul.f32 %v1899, %v1934
        %v1943 = vmul.f32 %v1901, %v1935
        %v1944 = vmul.f32 %v1903, %v1936
        %v1945 = vmul.f32 %v1905, %v1937
        %v1946 = vpack.c.bf16 %v1939, %v1938
        %v1947 = vpack.c.bf16 %v1941, %v1940
        %v1948 = vpack.c.bf16 %v1943, %v1942
        %v1949 = vpack.c.bf16 %v1945, %v1944
        %v1951 = vsel %vm1857, %v1946, 0
        %1953 = vmatprep.subr.bf16.mxu0 0
        %1954 = vmatpush1.bf16.msra.mxu0 %v1641
        %1955 = vmatprep.subr.bf16.mxu0 0
        %1956 = vmatpush1.bf16.msra.mxu0 0
        %1957 = vmatprep.subr.bf16.mxu0 0
        %1958 = vmatpush1.bf16.msra.mxu0 0
        %1959 = vmatprep.subr.bf16.mxu0 0
        %1960 = vmatpush1.bf16.msra.mxu0 0
        %1961 = vmatprep.subr.bf16.mxu0 0
        %1962 = vmatpush1.bf16.msra.mxu0 0
        %1963 = vmatprep.subr.bf16.mxu0 0
        %1964 = vmatpush1.bf16.msra.mxu0 0
        %1965 = vmatprep.subr.bf16.mxu0 0
        %1966 = vmatpush1.bf16.msra.mxu0 0
        %1967 = vmatprep.subr.bf16.mxu0 0
        %1968 = vmatpush1.bf16.msra.mxu0 0
        %1969 = vmatprep.subr.bf16.mxu0 0
        %1970 = vmatpush1.bf16.msra.mxu0 0
        %1971 = vmatprep.subr.bf16.mxu0 0
        %1972 = vmatpush1.bf16.msra.mxu0 0
        %1973 = vmatprep.subr.bf16.mxu0 0
        %1974 = vmatpush1.bf16.msra.mxu0 0
        %1975 = vmatprep.subr.bf16.mxu0 0
        %1976 = vmatpush1.bf16.msra.mxu0 0
        %1977 = vmatprep.subr.bf16.mxu0 0
        %1978 = vmatpush1.bf16.msra.mxu0 0
        %1979 = vmatprep.subr.bf16.mxu0 0
        %1980 = vmatpush1.bf16.msra.mxu0 0
        %1981 = vmatprep.subr.bf16.mxu0 0
        %1982 = vmatpush1.bf16.msra.mxu0 0
        %1983 = vmatprep.subr.bf16.mxu0 0
        %1984 = vmatpush1.bf16.msra.mxu0 0
        %1985 = vmatprep.mubr.bf16.mxu0 0
        %1986 = vmatmul.mubr.bf16.gmra.mrb[0].mxu0 %v1951
        %v1987 = vpop.f32.mrb[0].mxu0
        %v1988 = vadd.f32 0.0, %v1987
        %v1989 = vpop.f32.mrb[0].mxu0
        %v1990 = vpop.f32.mrb[0].mxu0
        %v1991 = vadd.f32 0.0, %v1990
        %v1992 = vpop.f32.mrb[0].mxu0
        %1993 = vdwg.mxu0
        %v1995 = vsel %vm1857, %v1947, 0
        %1997 = vmatprep.subr.bf16.mxu0 0
        %1998 = vmatpush1.bf16.msra.mxu0 %v1642
        %1999 = vmatprep.subr.bf16.mxu0 0
        %2000 = vmatpush1.bf16.msra.mxu0 0
        %2001 = vmatprep.subr.bf16.mxu0 0
        %2002 = vmatpush1.bf16.msra.mxu0 0
        %2003 = vmatprep.subr.bf16.mxu0 0
        %2004 = vmatpush1.bf16.msra.mxu0 0
        %2005 = vmatprep.subr.bf16.mxu0 0
        %2006 = vmatpush1.bf16.msra.mxu0 0
        %2007 = vmatprep.subr.bf16.mxu0 0
        %2008 = vmatpush1.bf16.msra.mxu0 0
        %2009 = vmatprep.subr.bf16.mxu0 0
        %2010 = vmatpush1.bf16.msra.mxu0 0
        %2011 = vmatprep.subr.bf16.mxu0 0
        %2012 = vmatpush1.bf16.msra.mxu0 0
        %2013 = vmatprep.subr.bf16.mxu0 0
        %2014 = vmatpush1.bf16.msra.mxu0 0
        %2015 = vmatprep.subr.bf16.mxu0 0
        %2016 = vmatpush1.bf16.msra.mxu0 0
        %2017 = vmatprep.subr.bf16.mxu0 0
        %2018 = vmatpush1.bf16.msra.mxu0 0
        %2019 = vmatprep.subr.bf16.mxu0 0
        %2020 = vmatpush1.bf16.msra.mxu0 0
        %2021 = vmatprep.subr.bf16.mxu0 0
        %2022 = vmatpush1.bf16.msra.mxu0 0
        %2023 = vmatprep.subr.bf16.mxu0 0
        %2024 = vmatpush1.bf16.msra.mxu0 0
        %2025 = vmatprep.subr.bf16.mxu0 0
        %2026 = vmatpush1.bf16.msra.mxu0 0
        %2027 = vmatprep.subr.bf16.mxu0 0
        %2028 = vmatpush1.bf16.msra.mxu0 0
        %2029 = vmatprep.mubr.bf16.mxu0 0
        %2030 = vmatmul.mubr.bf16.gmra.mrb[0].mxu0 %v1995
        %v2031 = vpop.f32.mrb[0].mxu0
        %v2032 = vadd.f32 0.0, %v2031
        %v2033 = vpop.f32.mrb[0].mxu0
        %v2034 = vpop.f32.mrb[0].mxu0
        %v2035 = vadd.f32 0.0, %v2034
        %v2036 = vpop.f32.mrb[0].mxu0
        %2037 = vdwg.mxu0
        %v2039 = vsel %vm1857, %v1948, 0
        %2041 = vmatprep.subr.bf16.mxu0 0
        %2042 = vmatpush1.bf16.msra.mxu0 %v1643
        %2043 = vmatprep.subr.bf16.mxu0 0
        %2044 = vmatpush1.bf16.msra.mxu0 0
        %2045 = vmatprep.subr.bf16.mxu0 0
        %2046 = vmatpush1.bf16.msra.mxu0 0
        %2047 = vmatprep.subr.bf16.mxu0 0
        %2048 = vmatpush1.bf16.msra.mxu0 0
        %2049 = vmatprep.subr.bf16.mxu0 0
        %2050 = vmatpush1.bf16.msra.mxu0 0
        %2051 = vmatprep.subr.bf16.mxu0 0
        %2052 = vmatpush1.bf16.msra.mxu0 0
        %2053 = vmatprep.subr.bf16.mxu0 0
        %2054 = vmatpush1.bf16.msra.mxu0 0
        %2055 = vmatprep.subr.bf16.mxu0 0
        %2056 = vmatpush1.bf16.msra.mxu0 0
        %2057 = vmatprep.subr.bf16.mxu0 0
        %2058 = vmatpush1.bf16.msra.mxu0 0
        %2059 = vmatprep.subr.bf16.mxu0 0
        %2060 = vmatpush1.bf16.msra.mxu0 0
        %2061 = vmatprep.subr.bf16.mxu0 0
        %2062 = vmatpush1.bf16.msra.mxu0 0
        %2063 = vmatprep.subr.bf16.mxu0 0
        %2064 = vmatpush1.bf16.msra.mxu0 0
        %2065 = vmatprep.subr.bf16.mxu0 0
        %2066 = vmatpush1.bf16.msra.mxu0 0
        %2067 = vmatprep.subr.bf16.mxu0 0
        %2068 = vmatpush1.bf16.msra.mxu0 0
        %2069 = vmatprep.subr.bf16.mxu0 0
        %2070 = vmatpush1.bf16.msra.mxu0 0
        %2071 = vmatprep.subr.bf16.mxu0 0
        %2072 = vmatpush1.bf16.msra.mxu0 0
        %2073 = vmatprep.mubr.bf16.mxu0 0
        %2074 = vmatmul.mubr.bf16.gmra.mrb[0].mxu0 %v2039
        %v2075 = vpop.f32.mrb[0].mxu0
        %v2076 = vadd.f32 0.0, %v2075
        %v2077 = vpop.f32.mrb[0].mxu0
        %v2078 = vpop.f32.mrb[0].mxu0
        %v2079 = vadd.f32 0.0, %v2078
        %v2080 = vpop.f32.mrb[0].mxu0
        %2081 = vdwg.mxu0
        %v2083 = vsel %vm1857, %v1949, 0
        %2085 = vmatprep.subr.bf16.mxu0 0
        %2086 = vmatpush1.bf16.msra.mxu0 %v1644
        %2087 = vmatprep.subr.bf16.mxu0 0
        %2088 = vmatpush1.bf16.msra.mxu0 0
        %2089 = vmatprep.subr.bf16.mxu0 0
        %2090 = vmatpush1.bf16.msra.mxu0 0
        %2091 = vmatprep.subr.bf16.mxu0 0
        %2092 = vmatpush1.bf16.msra.mxu0 0
        %2093 = vmatprep.subr.bf16.mxu0 0
        %2094 = vmatpush1.bf16.msra.mxu0 0
        %2095 = vmatprep.subr.bf16.mxu0 0
        %2096 = vmatpush1.bf16.msra.mxu0 0
        %2097 = vmatprep.subr.bf16.mxu0 0
        %2098 = vmatpush1.bf16.msra.mxu0 0
        %2099 = vmatprep.subr.bf16.mxu0 0
        %2100 = vmatpush1.bf16.msra.mxu0 0
        %2101 = vmatprep.subr.bf16.mxu0 0
        %2102 = vmatpush1.bf16.msra.mxu0 0
        %2103 = vmatprep.subr.bf16.mxu0 0
        %2104 = vmatpush1.bf16.msra.mxu0 0
        %2105 = vmatprep.subr.bf16.mxu0 0
        %2106 = vmatpush1.bf16.msra.mxu0 0
        %2107 = vmatprep.subr.bf16.mxu0 0
        %2108 = vmatpush1.bf16.msra.mxu0 0
        %2109 = vmatprep.subr.bf16.mxu0 0
        %2110 = vmatpush1.bf16.msra.mxu0 0
        %2111 = vmatprep.subr.bf16.mxu0 0
        %2112 = vmatpush1.bf16.msra.mxu0 0
        %2113 = vmatprep.subr.bf16.mxu0 0
        %2114 = vmatpush1.bf16.msra.mxu0 0
        %2115 = vmatprep.subr.bf16.mxu0 0
        %2116 = vmatpush1.bf16.msra.mxu0 0
        %2117 = vmatprep.mubr.bf16.mxu0 0
        %2118 = vmatmul.mubr.bf16.gmra.mrb[0].mxu0 %v2083
        %v2119 = vpop.f32.mrb[0].mxu0
        %v2120 = vadd.f32 0.0, %v2119
        %v2121 = vpop.f32.mrb[0].mxu0
        %v2122 = vpop.f32.mrb[0].mxu0
        %v2123 = vadd.f32 0.0, %v2122
        %v2124 = vpop.f32.mrb[0].mxu0
        %2125 = vdwg.mxu0
        %v2126 = vpack.c.bf16 %v1991, %v1988
        %v2127 = vpack.c.bf16 %v2035, %v2032
        %v2128 = vpack.c.bf16 %v2079, %v2076
        %v2129 = vpack.c.bf16 %v2123, %v2120
        %v2130 = vld [vmem:[%s6] sm:$0xf]
        %v2131 = vld [vmem:[%s6 + $0x4] sm:$0xf]
        %v2132 = vld [vmem:[%s6 + $0x8] sm:$0xf]
        %v2133 = vld [vmem:[%s6 + $0xc] sm:$0xf]
        %v2134 = vld [vmem:[%s6 + $0x10] sm:$0xf]
        %v2135 = vld [vmem:[%s6 + $0x14] sm:$0xf]
        %v2136 = vld [vmem:[%s6 + $0x18] sm:$0xf]
        %v2137 = vld [vmem:[%s6 + $0x1c] sm:$0xf]
        %v2138 = vld [vmem:[%s6 + $0x20] sm:$0xf]
        %v2139 = vld [vmem:[%s6 + $0x24] sm:$0xf]
        %v2140 = vld [vmem:[%s6 + $0x28] sm:$0xf]
        %v2141 = vld [vmem:[%s6 + $0x2c] sm:$0xf]
        %v2142 = vld [vmem:[%s6 + $0x30] sm:$0xf]
        %v2143 = vld [vmem:[%s6 + $0x34] sm:$0xf]
        %v2144 = vld [vmem:[%s6 + $0x38] sm:$0xf]
        %v2145 = vld [vmem:[%s6 + $0x3c] sm:$0xf]
        %v2150 = vunpack.c.l.b16 %v2130
        %v2151 = vunpack.c.l.b16 %v2131
        %v2152 = vunpack.c.l.b16 %v2132
        %v2153 = vunpack.c.l.b16 %v2133
        %v2154 = vpack.c.b16 %v2151, %v2150
        %v2155 = vpack.c.b16 %v2153, %v2152
        %v2159 = vsel %vm1645, %v2126, 0
        %2161 = vmatprep.subr.bf16.mxu0 0
        %2162 = vmatpush1.bf16.msra.mxu0 %v2154
        %2163 = vmatprep.subr.bf16.mxu0 0
        %2164 = vmatpush1.bf16.msra.mxu0 %v2155
        %2165 = vmatprep.subr.bf16.mxu0 0
        %2166 = vmatpush1.bf16.msra.mxu0 0
        %2167 = vmatprep.subr.bf16.mxu0 0
        %2168 = vmatpush1.bf16.msra.mxu0 0
        %2169 = vmatprep.subr.bf16.mxu0 0
        %2170 = vmatpush1.bf16.msra.mxu0 0
        %2171 = vmatprep.subr.bf16.mxu0 0
        %2172 = vmatpush1.bf16.msra.mxu0 0
        %2173 = vmatprep.subr.bf16.mxu0 0
        %2174 = vmatpush1.bf16.msra.mxu0 0
        %2175 = vmatprep.subr.bf16.mxu0 0
        %2176 = vmatpush1.bf16.msra.mxu0 0
        %2177 = vmatprep.subr.bf16.mxu0 0
        %2178 = vmatpush1.bf16.msra.mxu0 0
        %2179 = vmatprep.subr.bf16.mxu0 0
        %2180 = vmatpush1.bf16.msra.mxu0 0
        %2181 = vmatprep.subr.bf16.mxu0 0
        %2182 = vmatpush1.bf16.msra.mxu0 0
        %2183 = vmatprep.subr.bf16.mxu0 0
        %2184 = vmatpush1.bf16.msra.mxu0 0
        %2185 = vmatprep.subr.bf16.mxu0 0
        %2186 = vmatpush1.bf16.msra.mxu0 0
        %2187 = vmatprep.subr.bf16.mxu0 0
        %2188 = vmatpush1.bf16.msra.mxu0 0
        %2189 = vmatprep.subr.bf16.mxu0 0
        %2190 = vmatpush1.bf16.msra.mxu0 0
        %2191 = vmatprep.subr.bf16.mxu0 0
        %2192 = vmatpush1.bf16.msra.mxu0 0
        %2193 = vmatprep.mubr.bf16.mxu0 0
        %2194 = vmatmul.mubr.bf16.gmra.mrb[0].mxu0 %v2159
        %v2195 = vpop.f32.mrb[0].mxu0
        %v2196 = vadd.f32 0.0, %v2195
        %v2197 = vpop.f32.mrb[0].mxu0
        %v2198 = vpop.f32.mrb[0].mxu0
        %v2199 = vadd.f32 0.0, %v2198
        %v2200 = vpop.f32.mrb[0].mxu0
        %2201 = vdwg.mxu0
        %v2206 = vunpack.c.l.b16 %v2134
        %v2207 = vunpack.c.l.b16 %v2135
        %v2208 = vunpack.c.l.b16 %v2136
        %v2209 = vunpack.c.l.b16 %v2137
        %v2210 = vpack.c.b16 %v2207, %v2206
        %v2211 = vpack.c.b16 %v2209, %v2208
        %v2215 = vsel %vm1645, %v2127, 0
        %2217 = vmatprep.subr.bf16.mxu0 0
        %2218 = vmatpush1.bf16.msra.mxu0 %v2210
        %2219 = vmatprep.subr.bf16.mxu0 0
        %2220 = vmatpush1.bf16.msra.mxu0 %v2211
        %2221 = vmatprep.subr.bf16.mxu0 0
        %2222 = vmatpush1.bf16.msra.mxu0 0
        %2223 = vmatprep.subr.bf16.mxu0 0
        %2224 = vmatpush1.bf16.msra.mxu0 0
        %2225 = vmatprep.subr.bf16.mxu0 0
        %2226 = vmatpush1.bf16.msra.mxu0 0
        %2227 = vmatprep.subr.bf16.mxu0 0
        %2228 = vmatpush1.bf16.msra.mxu0 0
        %2229 = vmatprep.subr.bf16.mxu0 0
        %2230 = vmatpush1.bf16.msra.mxu0 0
        %2231 = vmatprep.subr.bf16.mxu0 0
        %2232 = vmatpush1.bf16.msra.mxu0 0
        %2233 = vmatprep.subr.bf16.mxu0 0
        %2234 = vmatpush1.bf16.msra.mxu0 0
        %2235 = vmatprep.subr.bf16.mxu0 0
        %2236 = vmatpush1.bf16.msra.mxu0 0
        %2237 = vmatprep.subr.bf16.mxu0 0
        %2238 = vmatpush1.bf16.msra.mxu0 0
        %2239 = vmatprep.subr.bf16.mxu0 0
        %2240 = vmatpush1.bf16.msra.mxu0 0
        %2241 = vmatprep.subr.bf16.mxu0 0
        %2242 = vmatpush1.bf16.msra.mxu0 0
        %2243 = vmatprep.subr.bf16.mxu0 0
        %2244 = vmatpush1.bf16.msra.mxu0 0
        %2245 = vmatprep.subr.bf16.mxu0 0
        %2246 = vmatpush1.bf16.msra.mxu0 0
        %2247 = vmatprep.subr.bf16.mxu0 0
        %2248 = vmatpush1.bf16.msra.mxu0 0
        %2249 = vmatprep.mubr.bf16.mxu0 0
        %2250 = vmatmul.mubr.bf16.gmra.mrb[0].mxu0 %v2215
        %v2251 = vpop.f32.mrb[0].mxu0
        %v2252 = vadd.f32 0.0, %v2251
        %v2253 = vpop.f32.mrb[0].mxu0
        %v2254 = vpop.f32.mrb[0].mxu0
        %v2255 = vadd.f32 0.0, %v2254
        %v2256 = vpop.f32.mrb[0].mxu0
        %2257 = vdwg.mxu0
        %v2262 = vunpack.c.l.b16 %v2138
        %v2263 = vunpack.c.l.b16 %v2139
        %v2264 = vunpack.c.l.b16 %v2140
        %v2265 = vunpack.c.l.b16 %v2141
        %v2266 = vpack.c.b16 %v2263, %v2262
        %v2267 = vpack.c.b16 %v2265, %v2264
        %v2271 = vsel %vm1645, %v2128, 0
        %2273 = vmatprep.subr.bf16.mxu0 0
        %2274 = vmatpush1.bf16.msra.mxu0 %v2266
        %2275 = vmatprep.subr.bf16.mxu0 0
        %2276 = vmatpush1.bf16.msra.mxu0 %v2267
        %2277 = vmatprep.subr.bf16.mxu0 0
        %2278 = vmatpush1.bf16.msra.mxu0 0
        %2279 = vmatprep.subr.bf16.mxu0 0
        %2280 = vmatpush1.bf16.msra.mxu0 0
        %2281 = vmatprep.subr.bf16.mxu0 0
        %2282 = vmatpush1.bf16.msra.mxu0 0
        %2283 = vmatprep.subr.bf16.mxu0 0
        %2284 = vmatpush1.bf16.msra.mxu0 0
        %2285 = vmatprep.subr.bf16.mxu0 0
        %2286 = vmatpush1.bf16.msra.mxu0 0
        %2287 = vmatprep.subr.bf16.mxu0 0
        %2288 = vmatpush1.bf16.msra.mxu0 0
        %2289 = vmatprep.subr.bf16.mxu0 0
        %2290 = vmatpush1.bf16.msra.mxu0 0
        %2291 = vmatprep.subr.bf16.mxu0 0
        %2292 = vmatpush1.bf16.msra.mxu0 0
        %2293 = vmatprep.subr.bf16.mxu0 0
        %2294 = vmatpush1.bf16.msra.mxu0 0
        %2295 = vmatprep.subr.bf16.mxu0 0
        %2296 = vmatpush1.bf16.msra.mxu0 0
        %2297 = vmatprep.subr.bf16.mxu0 0
        %2298 = vmatpush1.bf16.msra.mxu0 0
        %2299 = vmatprep.subr.bf16.mxu0 0
        %2300 = vmatpush1.bf16.msra.mxu0 0
        %2301 = vmatprep.subr.bf16.mxu0 0
        %2302 = vmatpush1.bf16.msra.mxu0 0
        %2303 = vmatprep.subr.bf16.mxu0 0
        %2304 = vmatpush1.bf16.msra.mxu0 0
        %2305 = vmatprep.mubr.bf16.mxu0 0
        %2306 = vmatmul.mubr.bf16.gmra.mrb[0].mxu0 %v2271
        %v2307 = vpop.f32.mrb[0].mxu0
        %v2308 = vadd.f32 0.0, %v2307
        %v2309 = vpop.f32.mrb[0].mxu0
        %v2310 = vpop.f32.mrb[0].mxu0
        %v2311 = vadd.f32 0.0, %v2310
        %v2312 = vpop.f32.mrb[0].mxu0
        %2313 = vdwg.mxu0
        %v2318 = vunpack.c.l.b16 %v2142
        %v2319 = vunpack.c.l.b16 %v2143
        %v2320 = vunpack.c.l.b16 %v2144
        %v2321 = vunpack.c.l.b16 %v2145
        %v2322 = vpack.c.b16 %v2319, %v2318
        %v2323 = vpack.c.b16 %v2321, %v2320
        %v2327 = vsel %vm1645, %v2129, 0
        %2329 = vmatprep.subr.bf16.mxu0 0
        %2330 = vmatpush1.bf16.msra.mxu0 %v2322
        %2331 = vmatprep.subr.bf16.mxu0 0
        %2332 = vmatpush1.bf16.msra.mxu0 %v2323
        %2333 = vmatprep.subr.bf16.mxu0 0
        %2334 = vmatpush1.bf16.msra.mxu0 0
        %2335 = vmatprep.subr.bf16.mxu0 0
        %2336 = vmatpush1.bf16.msra.mxu0 0
        %2337 = vmatprep.subr.bf16.mxu0 0
        %2338 = vmatpush1.bf16.msra.mxu0 0
        %2339 = vmatprep.subr.bf16.mxu0 0
        %2340 = vmatpush1.bf16.msra.mxu0 0
        %2341 = vmatprep.subr.bf16.mxu0 0
        %2342 = vmatpush1.bf16.msra.mxu0 0
        %2343 = vmatprep.subr.bf16.mxu0 0
        %2344 = vmatpush1.bf16.msra.mxu0 0
        %2345 = vmatprep.subr.bf16.mxu0 0
        %2346 = vmatpush1.bf16.msra.mxu0 0
        %2347 = vmatprep.subr.bf16.mxu0 0
        %2348 = vmatpush1.bf16.msra.mxu0 0
        %2349 = vmatprep.subr.bf16.mxu0 0
        %2350 = vmatpush1.bf16.msra.mxu0 0
        %2351 = vmatprep.subr.bf16.mxu0 0
        %2352 = vmatpush1.bf16.msra.mxu0 0
        %2353 = vmatprep.subr.bf16.mxu0 0
        %2354 = vmatpush1.bf16.msra.mxu0 0
        %2355 = vmatprep.subr.bf16.mxu0 0
        %2356 = vmatpush1.bf16.msra.mxu0 0
        %2357 = vmatprep.subr.bf16.mxu0 0
        %2358 = vmatpush1.bf16.msra.mxu0 0
        %2359 = vmatprep.subr.bf16.mxu0 0
        %2360 = vmatpush1.bf16.msra.mxu0 0
        %2361 = vmatprep.mubr.bf16.mxu0 0
        %2362 = vmatmul.mubr.bf16.gmra.mrb[0].mxu0 %v2327
        %v2363 = vpop.f32.mrb[0].mxu0
        %v2364 = vadd.f32 0.0, %v2363
        %v2365 = vpop.f32.mrb[0].mxu0
        %v2366 = vpop.f32.mrb[0].mxu0
        %v2367 = vadd.f32 0.0, %v2366
        %v2368 = vpop.f32.mrb[0].mxu0
        %2369 = vdwg.mxu0
        %v2370 = vadd.f32 %v2196, %v2252
        %v2371 = vadd.f32 %v2199, %v2255
        %v2372 = vadd.f32 %v2370, %v2308
        %v2373 = vadd.f32 %v2371, %v2311
        %v2374 = vadd.f32 %v2372, %v2364
        %v2375 = vadd.f32 %v2373, %v2367
        %v2376 = vpack.c.bf16 %v2375, %v2374
        %v2378 = vunpack.c.l.b16 %v2376
        %v2379 = vunpack.c.h.b16 %v2376
        %v2380 = vpack.c.b16 %v2378, %v2378
        %v2381 = vpack.c.b16 %v2379, %v2379
        %2384 = vst [vmem:[%s326] sm:$0xf] %v2380
        %2385 = vst [vmem:[%s326 + $0x4] sm:$0xf] %v2381
        %s2386 = sand.u32 %s207, 1
        %s2387 = scalar_lea.sflag [#allocation3], %s2386
        %s2388 = sand.u32 %s207, 1
        %s2389 = smul.addr %s2388, 8
        %s2390 = scalar_lea.vmem [#allocation2], %s2389
        // Predicated region
        $region49: #{tpu_custom_call.1} parent=47 // pred_check
          %p2391 = pneg %p217
        $region50: #{tpu_custom_call.1} parent=47 // pred_check_branch
          %2393 = sbr.rel (%p2391) target = $region52
        $region51: #{tpu_custom_call.1} parent=47 // pred_region
          %s2394 = smul.u32 2, %s26
          %s2396 = ssub.s32 128, 128
          %2397 = vsyncadd %s2387, %s2396
          %s2398 = smul.addr %s25, 2
          %s2399 = sadd.s32 %s2394, %s2398
          %s2400 = smul.addr %s2399, 64
          %s2401 = scalar_lea.hbm %s7, %s2400
          %s2402 = sshll.u32 %s2390, 4
          %s2403 = int_to_ptr.vmem [resolvable:$true] %s2402
          %2408 = dma.vmem_to_hbm [thread:$0]  %s2403, 128, %s2401, %s2387, 64, 64, 4
        $region52: #{tpu_custom_call.1} parent=47 // pred_fallthru
          _
      $region48: #{tpu_custom_call.1} parent=5 // pred_fallthru
        _
      %p2409 = scmp.le.s32.totalorder 2, %s16
      // Predicated region
      $region53: #{tpu_custom_call.1} parent=5 // pred_check
        %p2410 = pneg %p2409
      $region54: #{tpu_custom_call.1} parent=5 // pred_check_branch
        %2412 = sbr.rel (%p2410) target = $region56
      $region55: #{tpu_custom_call.1} parent=5 // pred_region
        %s2413 = ssub.s32 %s16, 2
        // Predicated region
        $region57: #{tpu_custom_call.1} parent=55 // pred_check
          %p2414 = pneg %p223
        $region58: #{tpu_custom_call.1} parent=55 // pred_check_branch
          %2416 = sbr.rel (%p2414) target = $region60
        $region59: #{tpu_custom_call.1} parent=55 // pred_region
          %s2417 = sand.u32 %s208, 1
          %s2418 = scalar_lea.sflag [#allocation3], %s2417
          %s2419 = sand.u32 %s208, 1
          %s2420 = smul.addr %s2419, 8
          %s2421 = scalar_lea.vmem [#allocation2], %s2420
          %2422 = dma.done %s2418, 128
        $region60: #{tpu_custom_call.1} parent=55 // pred_fallthru
          _
      $region56: #{tpu_custom_call.1} parent=5 // pred_fallthru
        _
    $region6: #{tpu_custom_call.1} parent=1 // loop_footer
      %s20 = sadd.s32 1, %s16
    $region7: #{tpu_custom_call.1} parent=1 // loop_footer_branch
      %15 = sbr.rel target = $region3
    $region8: #{tpu_custom_call.1} parent=1 // loop_exit
      _
    %2423 = vsyncpa [#allocation3], 1
    %s2424 = scalar_lea.sflag [#allocation3], 1
    %2425 = vsyncpa %s2424, 1

</llo_original>
